<compile_context>
chip_gen: v7x
topology: tpu7x:2x2x1
jax: 0.10.0
libtpu: 0.0.40
codegen_flags: <defaults>
</compile_context>

<pallas_src>
from functools import partial

import numpy as np
import jax
import jax.numpy as jnp
from jax.experimental import pallas as pl
from jax.experimental.pallas import tpu as pltpu


# ----------------------------------- fused kernel -----------------------------------------
def _genblock_kernel(x_ref, w3_ref, sh1_ref, wd_ref, sh2_ref, row_ref, col_ref, out_ref,
                     *, h, w, k, dk):
    # x_ref   : (1, Cin, H*W)      lane-dense input image
    # w3_ref  : (k*k, Cout, Cin)   conv weight, BN scale folded, tap-major, bf16
    # sh1_ref : (Cout, 1)          folded BN shift (conv bias + BN), f32
    # wd_ref  : (dk*dk, Cout, 1)   depthwise weight, BN scale folded, tap-major, f32
    # sh2_ref : (Cout, 1)          folded BN shift for the depthwise path, f32
    # row_ref : (1, H*W) int32     spatial row index of each lane (precomputed iota)
    # col_ref : (1, H*W) int32     spatial col index of each lane (precomputed iota)
    # out_ref : (1, Cout, H*W)     lane-dense output
    cout = out_ref.shape[1]
    hw = h * w
    kp, dp = k // 2, dk // 2

    # Row/col boundary indices, loaded ONCE above both tap loops.
    row = row_ref[...]
    col = col_ref[...]

    def shift_and_mask(flat, dr, dc):
        # result[:, r*w + c] == flat[:, (r+dr)*w + (c+dc)]  with zero "padding" outside.
        # The flattened-lane roll wraps only at positions the boundary mask zeroes out.
        off = dr * w + dc
        s = (-off) % hw
        rolled = flat if s == 0 else pltpu.roll(flat, s, axis=1)
        conds = []
        if dr < 0:
            conds.append(row >= -dr)
        if dr > 0:
            conds.append(row < h - dr)
        if dc < 0:
            conds.append(col >= -dc)
        if dc > 0:
            conds.append(col < w - dc)
        if not conds:
            return rolled
        m = conds[0]
        for c in conds[1:]:
            m = m & c
        return jnp.where(m, rolled, 0.0)

    # ---- conv kxk (+ folded BN scale): k*k rolled partial dots, f32 accumulation ----
    xf = x_ref[0]                                            # (Cin, H*W) f32, lane-dense
    acc = jnp.zeros((cout, hw), jnp.float32)
    for dy in range(k):
        for dx in range(k):
            sm = shift_and_mask(xf, dy - kp, dx - kp)
            acc = acc + jnp.dot(w3_ref[dy * k + dx],         # (Cout, Cin) bf16 (pre-cast)
                                sm.astype(jnp.bfloat16),
                                preferred_element_type=jnp.float32)
    y = acc + sh1_ref[...]                                   # folded BN shift, (Cout, 1)

    # ---- xUnitS: depthwise dk x dk conv (BN scale folded) -> sigmoid -> gate ----
    dacc = jnp.zeros((cout, hw), jnp.float32)
    for dy in range(dk):
        for dx in range(dk):
            sm = shift_and_mask(y, dy - dp, dx - dp)
            dacc = dacc + sm * wd_ref[dy * dk + dx]          # per-channel tap (Cout, 1)
    z = dacc + sh2_ref[...]
    a = 0.5 * (jnp.tanh(0.5 * z) + 1.0)                      # sigmoid via EUP tanh
    out_ref[0] = (y * a).astype(out_ref.dtype)               # dense (Cout, H*W) store


def genblock_forward(params, x_nchw):
    n, cin, h, w = x_nchw.shape
    w3f, sh1 = params["w3f"], params["shift1"]
    wdf, sh2 = params["wdf"], params["shift2"]
    kk, cout, _ = w3f.shape
    dkk = wdf.shape[0]
    k = int(round(np.sqrt(kk)))
    dk = int(round(np.sqrt(dkk)))
    hw = h * w

    # Free (contiguous) reshapes: kernel is lane-dense (C, H*W) native.
    x_flat = x_nchw.reshape(n, cin, hw)

    # Precomputed flattened-lane row/col indices (constants; no in-kernel iota/div).
    ids = np.arange(hw, dtype=np.int32)
    row_ids = jnp.asarray((ids // w).reshape(1, hw))
    col_ids = jnp.asarray((ids % w).reshape(1, hw))

    kern = partial(_genblock_kernel, h=h, w=w, k=k, dk=dk)
    out = pl.pallas_call(
        kern,
        out_shape=jax.ShapeDtypeStruct((n, cout, hw), jnp.float32),
        grid=(n,),
        in_specs=[
            pl.BlockSpec((1, cin, hw), lambda i: (i, 0, 0)),      # x (lane-dense, per image)
            pl.BlockSpec((kk, cout, cin), lambda i: (0, 0, 0)),   # folded conv weight (bf16)
            pl.BlockSpec((cout, 1), lambda i: (0, 0)),            # folded BN shift 1
            pl.BlockSpec((dkk, cout, 1), lambda i: (0, 0, 0)),    # folded depthwise weight
            pl.BlockSpec((cout, 1), lambda i: (0, 0)),            # folded BN shift 2
            pl.BlockSpec((1, hw), lambda i: (0, 0)),              # row indices
            pl.BlockSpec((1, hw), lambda i: (0, 0)),              # col indices
        ],
        out_specs=pl.BlockSpec((1, cout, hw), lambda i: (i, 0, 0)),
        compiler_params=pltpu.CompilerParams(dimension_semantics=("parallel",)),
    )(x_flat, w3f, sh1, wdf, sh2, row_ids, col_ids)
    return out.reshape(n, cout, h, w)                             # free split-reshape


# ----------------------------- parameters (PyTorch-style init) -----------------------------
def init_params(key, in_channels, out_channels, ksize=3, dksize=7, eps=1e-5):
    ks = jax.random.split(key, 8)
    fan_in = ksize * ksize * in_channels
    # Conv2d: kaiming_normal_(fan_in) * 0.02, zero bias   (initialize_weights(..., 0.02))
    w3 = jax.random.normal(ks[0], (ksize, ksize, in_channels, out_channels),
                           jnp.float32) * np.sqrt(2.0 / fan_in) * 0.02
    b3 = jnp.zeros((out_channels,), jnp.float32)
    # BatchNorm2d (inference): gamma/beta + running stats, folded into scale/shift
    g1 = 1.0 + 0.1 * jax.random.normal(ks[1], (out_channels,))
    be1 = 0.1 * jax.random.normal(ks[2], (out_channels,))
    m1 = 0.1 * jax.random.normal(ks[3], (out_channels,))
    v1 = jnp.abs(1.0 + 0.1 * jax.random.normal(ks[4], (out_channels,)))
    scale1 = g1 / jnp.sqrt(v1 + eps)
    shift1 = be1 + (b3 - m1) * scale1
    # xUnitS: depthwise dk x dk conv (zero bias) -> BN -> sigmoid
    wd = jax.random.normal(ks[5], (dksize, dksize, out_channels),
                           jnp.float32) * np.sqrt(2.0 / (dksize * dksize))
    bd = jnp.zeros((out_channels,), jnp.float32)
    g2 = jnp.ones((out_channels,), jnp.float32)
    be2 = jnp.zeros((out_channels,), jnp.float32)
    m2 = 0.05 * jax.random.normal(ks[6], (out_channels,))
    v2 = jnp.abs(1.0 + 0.1 * jax.random.normal(ks[7], (out_channels,)))
    scale2 = g2 / jnp.sqrt(v2 + eps)
    shift2 = be2 + (bd - m2) * scale2

    # Tap-major layouts the kernel consumes; BN scales folded host-side.
    # w3f[dy*k+dx, o, i] = w3[dy, dx, i, o] * scale1[o]   (pre-cast to bf16)
    w3f = jnp.transpose(w3, (0, 1, 3, 2)).reshape(ksize * ksize, out_channels, in_channels)
    w3f = (w3f * scale1[None, :, None]).astype(jnp.bfloat16)
    # wdf[dy*dk+dx, c, 0] = wd[dy, dx, c] * scale2[c]
    wdf = (wd * scale2[None, None, :]).reshape(dksize * dksize, out_channels)[:, :, None]
    return dict(w3f=w3f,
                shift1=shift1.reshape(out_channels, 1).astype(jnp.float32),
                wdf=wdf.astype(jnp.float32),
                shift2=shift2.reshape(out_channels, 1).astype(jnp.float32))


# ----------------------------- pure-JAX reference (for checking) ---------------------------
def _reference_forward(params, x):
    w3f, sh1, wdf, sh2 = params["w3f"], params["shift1"], params["wdf"], params["shift2"]
    cout, cin = w3f.shape[1], x.shape[1]
    k = int(round(np.sqrt(w3f.shape[0])))
    dk = int(round(np.sqrt(wdf.shape[0])))
    w3 = w3f.astype(jnp.float32).reshape(k, k, cout, cin).transpose(2, 3, 0, 1)  # OIHW
    y = jax.lax.conv_general_dilated(x, w3, (1, 1), "SAME",
                                     dimension_numbers=("NCHW", "OIHW", "NCHW"))
    y = y + sh1.reshape(1, cout, 1, 1)
    wd = wdf.reshape(dk, dk, cout).transpose(2, 0, 1)[:, None, :, :]             # (Cout,1,dk,dk)
    g = jax.lax.conv_general_dilated(y, wd, (1, 1), "SAME",
                                     dimension_numbers=("NCHW", "OIHW", "NCHW"),
                                     feature_group_count=cout)
    a = jax.nn.sigmoid(g + sh2.reshape(1, cout, 1, 1))
    return y * a


# --------------------------------------- main ----------------------------------------------
if __name__ == "__main__":
    key = jax.random.PRNGKey(0)
    kx, kparam = jax.random.split(key)

    # GenBlock(in_channels=4, out_channels=8, kernel_size=3), small test shapes
    N, Cin, Cout, H, W = 2, 4, 8, 16, 16
    x = jax.random.normal(kx, (N, Cin, H, W), jnp.float32)
    params = init_params(kparam, Cin, Cout)

    fwd = jax.jit(genblock_forward)
    out = fwd(params, x)
    jax.block_until_ready(out)

    assert out.shape == (N, Cout, H, W), out.shape
    assert bool(jnp.all(jnp.isfinite(out)))

    ref = _reference_forward(params, x)
    # tighter than before (bf16 is only on the MXU inputs; reference uses the same
    # bf16-quantized weights, so the residual error is the activation cast only)
    np.testing.assert_allclose(np.asarray(out), np.asarray(ref), rtol=2e-2, atol=2e-3)

    print("KERNEL_OK")
</pallas_src>

<mosaic_0001>
module attributes {stable_mosaic.version = 11 : i64} {
  func.func @_genblock_kernel(%arg0: i32, %arg1: memref<1x4x256xf32, #tpu.memory_space<vmem>>, %arg2: memref<9x8x4xbf16, #tpu.memory_space<vmem>>, %arg3: memref<8x1xf32, #tpu.memory_space<vmem>>, %arg4: memref<49x8x1xf32, #tpu.memory_space<vmem>>, %arg5: memref<8x1xf32, #tpu.memory_space<vmem>>, %arg6: memref<1x256xi32, #tpu.memory_space<vmem>>, %arg7: memref<1x256xi32, #tpu.memory_space<vmem>>, %arg8: memref<1x8x256xf32, #tpu.memory_space<vmem>>) attributes {dimension_semantics = [#tpu.dimension_semantics<parallel>], iteration_bounds = array<i64: 2>, scalar_prefetch = 0 : i64, scratch_operands = 0 : i64, tpu.core_type = #tpu.core_type<tc>, window_params = [{transform_indices = @transform_0, window_bounds = array<i64: 1, 4, 256>}, {pipeline_mode = #tpu.pipeline_mode<synchronous>, transform_indices = @transform_1, window_bounds = array<i64: 9, 8, 4>}, {pipeline_mode = #tpu.pipeline_mode<synchronous>, transform_indices = @transform_2, window_bounds = array<i64: 8, 1>}, {pipeline_mode = #tpu.pipeline_mode<synchronous>, transform_indices = @transform_3, window_bounds = array<i64: 49, 8, 1>}, {pipeline_mode = #tpu.pipeline_mode<synchronous>, transform_indices = @transform_4, window_bounds = array<i64: 8, 1>}, {pipeline_mode = #tpu.pipeline_mode<synchronous>, transform_indices = @transform_5, window_bounds = array<i64: 1, 256>}, {pipeline_mode = #tpu.pipeline_mode<synchronous>, transform_indices = @transform_6, window_bounds = array<i64: 1, 256>}, {transform_indices = @transform_7, window_bounds = array<i64: 1, 8, 256>}]} {
    %c0 = arith.constant 0 : index
    %c0_0 = arith.constant 0 : index
    %0 = vector.load %arg6[%c0, %c0_0] : memref<1x256xi32, #tpu.memory_space<vmem>>, vector<1x256xi32>
    %c0_1 = arith.constant 0 : index
    %c0_2 = arith.constant 0 : index
    %1 = vector.load %arg7[%c0_1, %c0_2] : memref<1x256xi32, #tpu.memory_space<vmem>>, vector<1x256xi32>
    %c0_3 = arith.constant 0 : index
    %c0_4 = arith.constant 0 : index
    %c0_5 = arith.constant 0 : index
    %2 = vector.load %arg1[%c0_3, %c0_4, %c0_5] : memref<1x4x256xf32, #tpu.memory_space<vmem>>, vector<1x4x256xf32>
    %3 = vector.shape_cast %2 : vector<1x4x256xf32> to vector<4x256xf32>
    %cst = arith.constant 0.000000e+00 : f32
    %4 = vector.broadcast %cst : f32 to vector<8x256xf32>
    %c17_i32 = arith.constant 17 : i32
    %5 = tpu.dynamic_rotate %3 by %c17_i32 dim 1 : vector<4x256xf32>, i32 -> vector<4x256xf32>
    %c1_i32 = arith.constant 1 : i32
    %6 = vector.broadcast %c1_i32 : i32 to vector<1x256xi32>
    %7 = arith.cmpi sge, %0, %6 : vector<1x256xi32>
    %c1_i32_6 = arith.constant 1 : i32
    %8 = vector.broadcast %c1_i32_6 : i32 to vector<1x256xi32>
    %9 = arith.cmpi sge, %1, %8 : vector<1x256xi32>
    %10 = arith.andi %7, %9 : vector<1x256xi1>
    %cst_7 = arith.constant 0.000000e+00 : f32
    %11 = vector.shape_cast %10 : vector<1x256xi1> to vector<1x256xi1>
    %12 = vector.broadcast %11 : vector<1x256xi1> to vector<4x256xi1>
    %13 = vector.broadcast %cst_7 : f32 to vector<4x256xf32>
    %14 = arith.select %12, %5, %13 : vector<4x256xi1>, vector<4x256xf32>
    %c0_8 = arith.constant 0 : index
    %c0_9 = arith.constant 0 : index
    %c0_10 = arith.constant 0 : index
    %15 = vector.load %arg2[%c0_8, %c0_9, %c0_10] : memref<9x8x4xbf16, #tpu.memory_space<vmem>>, vector<1x8x4xbf16>
    %16 = vector.shape_cast %15 : vector<1x8x4xbf16> to vector<8x4xbf16>
    %17 = arith.truncf %14 : vector<4x256xf32> to vector<4x256xbf16>
    %cst_11 = arith.constant dense<0.000000e+00> : vector<8x256xf32>
    %18 = tpu.matmul %16, %17, %cst_11 {dimension_numbers = #tpu.dot_dimension_numbers<[1], [0], [0], [1], [0, 0, 1, 1], [], []>} : vector<8x4xbf16>, vector<4x256xbf16>, vector<8x256xf32> -> vector<8x256xf32>
    %19 = arith.addf %4, %18 : vector<8x256xf32>
    %c16_i32 = arith.constant 16 : i32
    %20 = tpu.dynamic_rotate %3 by %c16_i32 dim 1 : vector<4x256xf32>, i32 -> vector<4x256xf32>
    %c1_i32_12 = arith.constant 1 : i32
    %21 = vector.broadcast %c1_i32_12 : i32 to vector<1x256xi32>
    %22 = arith.cmpi sge, %0, %21 : vector<1x256xi32>
    %cst_13 = arith.constant 0.000000e+00 : f32
    %23 = vector.shape_cast %22 : vector<1x256xi1> to vector<1x256xi1>
    %24 = vector.broadcast %23 : vector<1x256xi1> to vector<4x256xi1>
    %25 = vector.broadcast %cst_13 : f32 to vector<4x256xf32>
    %26 = arith.select %24, %20, %25 : vector<4x256xi1>, vector<4x256xf32>
    %c1 = arith.constant 1 : index
    %c0_14 = arith.constant 0 : index
    %c0_15 = arith.constant 0 : index
    %27 = vector.load %arg2[%c1, %c0_14, %c0_15] : memref<9x8x4xbf16, #tpu.memory_space<vmem>>, vector<1x8x4xbf16>
    %28 = vector.shape_cast %27 : vector<1x8x4xbf16> to vector<8x4xbf16>
    %29 = arith.truncf %26 : vector<4x256xf32> to vector<4x256xbf16>
    %cst_16 = arith.constant dense<0.000000e+00> : vector<8x256xf32>
    %30 = tpu.matmul %28, %29, %cst_16 {dimension_numbers = #tpu.dot_dimension_numbers<[1], [0], [0], [1], [0, 0, 1, 1], [], []>} : vector<8x4xbf16>, vector<4x256xbf16>, vector<8x256xf32> -> vector<8x256xf32>
    %31 = arith.addf %19, %30 : vector<8x256xf32>
    %c15_i32 = arith.constant 15 : i32
    %32 = tpu.dynamic_rotate %3 by %c15_i32 dim 1 : vector<4x256xf32>, i32 -> vector<4x256xf32>
    %c1_i32_17 = arith.constant 1 : i32
    %33 = vector.broadcast %c1_i32_17 : i32 to vector<1x256xi32>
    %34 = arith.cmpi sge, %0, %33 : vector<1x256xi32>
    %c15_i32_18 = arith.constant 15 : i32
    %35 = vector.broadcast %c15_i32_18 : i32 to vector<1x256xi32>
    %36 = arith.cmpi slt, %1, %35 : vector<1x256xi32>
    %37 = arith.andi %34, %36 : vector<1x256xi1>
    %cst_19 = arith.constant 0.000000e+00 : f32
    %38 = vector.shape_cast %37 : vector<1x256xi1> to vector<1x256xi1>
    %39 = vector.broadcast %38 : vector<1x256xi1> to vector<4x256xi1>
    %40 = vector.broadcast %cst_19 : f32 to vector<4x256xf32>
    %41 = arith.select %39, %32, %40 : vector<4x256xi1>, vector<4x256xf32>
    %c2 = arith.constant 2 : index
    %c0_20 = arith.constant 0 : index
    %c0_21 = arith.constant 0 : index
    %42 = vector.load %arg2[%c2, %c0_20, %c0_21] : memref<9x8x4xbf16, #tpu.memory_space<vmem>>, vector<1x8x4xbf16>
    %43 = vector.shape_cast %42 : vector<1x8x4xbf16> to vector<8x4xbf16>
    %44 = arith.truncf %41 : vector<4x256xf32> to vector<4x256xbf16>
    %cst_22 = arith.constant dense<0.000000e+00> : vector<8x256xf32>
    %45 = tpu.matmul %43, %44, %cst_22 {dimension_numbers = #tpu.dot_dimension_numbers<[1], [0], [0], [1], [0, 0, 1, 1], [], []>} : vector<8x4xbf16>, vector<4x256xbf16>, vector<8x256xf32> -> vector<8x256xf32>
    %46 = arith.addf %31, %45 : vector<8x256xf32>
    %c1_i32_23 = arith.constant 1 : i32
    %47 = tpu.dynamic_rotate %3 by %c1_i32_23 dim 1 : vector<4x256xf32>, i32 -> vector<4x256xf32>
    %c1_i32_24 = arith.constant 1 : i32
    %48 = vector.broadcast %c1_i32_24 : i32 to vector<1x256xi32>
    %49 = arith.cmpi sge, %1, %48 : vector<1x256xi32>
    %cst_25 = arith.constant 0.000000e+00 : f32
    %50 = vector.shape_cast %49 : vector<1x256xi1> to vector<1x256xi1>
    %51 = vector.broadcast %50 : vector<1x256xi1> to vector<4x256xi1>
    %52 = vector.broadcast %cst_25 : f32 to vector<4x256xf32>
    %53 = arith.select %51, %47, %52 : vector<4x256xi1>, vector<4x256xf32>
    %c3 = arith.constant 3 : index
    %c0_26 = arith.constant 0 : index
    %c0_27 = arith.constant 0 : index
    %54 = vector.load %arg2[%c3, %c0_26, %c0_27] : memref<9x8x4xbf16, #tpu.memory_space<vmem>>, vector<1x8x4xbf16>
    %55 = vector.shape_cast %54 : vector<1x8x4xbf16> to vector<8x4xbf16>
    %56 = arith.truncf %53 : vector<4x256xf32> to vector<4x256xbf16>
    %cst_28 = arith.constant dense<0.000000e+00> : vector<8x256xf32>
    %57 = tpu.matmul %55, %56, %cst_28 {dimension_numbers = #tpu.dot_dimension_numbers<[1], [0], [0], [1], [0, 0, 1, 1], [], []>} : vector<8x4xbf16>, vector<4x256xbf16>, vector<8x256xf32> -> vector<8x256xf32>
    %58 = arith.addf %46, %57 : vector<8x256xf32>
    %c4 = arith.constant 4 : index
    %c0_29 = arith.constant 0 : index
    %c0_30 = arith.constant 0 : index
    %59 = vector.load %arg2[%c4, %c0_29, %c0_30] : memref<9x8x4xbf16, #tpu.memory_space<vmem>>, vector<1x8x4xbf16>
    %60 = vector.shape_cast %59 : vector<1x8x4xbf16> to vector<8x4xbf16>
    %61 = arith.truncf %3 : vector<4x256xf32> to vector<4x256xbf16>
    %cst_31 = arith.constant dense<0.000000e+00> : vector<8x256xf32>
    %62 = tpu.matmul %60, %61, %cst_31 {dimension_numbers = #tpu.dot_dimension_numbers<[1], [0], [0], [1], [0, 0, 1, 1], [], []>} : vector<8x4xbf16>, vector<4x256xbf16>, vector<8x256xf32> -> vector<8x256xf32>
    %63 = arith.addf %58, %62 : vector<8x256xf32>
    %c255_i32 = arith.constant 255 : i32
    %64 = tpu.dynamic_rotate %3 by %c255_i32 dim 1 : vector<4x256xf32>, i32 -> vector<4x256xf32>
    %c15_i32_32 = arith.constant 15 : i32
    %65 = vector.broadcast %c15_i32_32 : i32 to vector<1x256xi32>
    %66 = arith.cmpi slt, %1, %65 : vector<1x256xi32>
    %cst_33 = arith.constant 0.000000e+00 : f32
    %67 = vector.shape_cast %66 : vector<1x256xi1> to vector<1x256xi1>
    %68 = vector.broadcast %67 : vector<1x256xi1> to vector<4x256xi1>
    %69 = vector.broadcast %cst_33 : f32 to vector<4x256xf32>
    %70 = arith.select %68, %64, %69 : vector<4x256xi1>, vector<4x256xf32>
    %c5 = arith.constant 5 : index
    %c0_34 = arith.constant 0 : index
    %c0_35 = arith.constant 0 : index
    %71 = vector.load %arg2[%c5, %c0_34, %c0_35] : memref<9x8x4xbf16, #tpu.memory_space<vmem>>, vector<1x8x4xbf16>
    %72 = vector.shape_cast %71 : vector<1x8x4xbf16> to vector<8x4xbf16>
    %73 = arith.truncf %70 : vector<4x256xf32> to vector<4x256xbf16>
    %cst_36 = arith.constant dense<0.000000e+00> : vector<8x256xf32>
    %74 = tpu.matmul %72, %73, %cst_36 {dimension_numbers = #tpu.dot_dimension_numbers<[1], [0], [0], [1], [0, 0, 1, 1], [], []>} : vector<8x4xbf16>, vector<4x256xbf16>, vector<8x256xf32> -> vector<8x256xf32>
    %75 = arith.addf %63, %74 : vector<8x256xf32>
    %c241_i32 = arith.constant 241 : i32
    %76 = tpu.dynamic_rotate %3 by %c241_i32 dim 1 : vector<4x256xf32>, i32 -> vector<4x256xf32>
    %c15_i32_37 = arith.constant 15 : i32
    %77 = vector.broadcast %c15_i32_37 : i32 to vector<1x256xi32>
    %78 = arith.cmpi slt, %0, %77 : vector<1x256xi32>
    %c1_i32_38 = arith.constant 1 : i32
    %79 = vector.broadcast %c1_i32_38 : i32 to vector<1x256xi32>
    %80 = arith.cmpi sge, %1, %79 : vector<1x256xi32>
    %81 = arith.andi %78, %80 : vector<1x256xi1>
    %cst_39 = arith.constant 0.000000e+00 : f32
    %82 = vector.shape_cast %81 : vector<1x256xi1> to vector<1x256xi1>
    %83 = vector.broadcast %82 : vector<1x256xi1> to vector<4x256xi1>
    %84 = vector.broadcast %cst_39 : f32 to vector<4x256xf32>
    %85 = arith.select %83, %76, %84 : vector<4x256xi1>, vector<4x256xf32>
    %c6 = arith.constant 6 : index
    %c0_40 = arith.constant 0 : index
    %c0_41 = arith.constant 0 : index
    %86 = vector.load %arg2[%c6, %c0_40, %c0_41] : memref<9x8x4xbf16, #tpu.memory_space<vmem>>, vector<1x8x4xbf16>
    %87 = vector.shape_cast %86 : vector<1x8x4xbf16> to vector<8x4xbf16>
    %88 = arith.truncf %85 : vector<4x256xf32> to vector<4x256xbf16>
    %cst_42 = arith.constant dense<0.000000e+00> : vector<8x256xf32>
    %89 = tpu.matmul %87, %88, %cst_42 {dimension_numbers = #tpu.dot_dimension_numbers<[1], [0], [0], [1], [0, 0, 1, 1], [], []>} : vector<8x4xbf16>, vector<4x256xbf16>, vector<8x256xf32> -> vector<8x256xf32>
    %90 = arith.addf %75, %89 : vector<8x256xf32>
    %c240_i32 = arith.constant 240 : i32
    %91 = tpu.dynamic_rotate %3 by %c240_i32 dim 1 : vector<4x256xf32>, i32 -> vector<4x256xf32>
    %c15_i32_43 = arith.constant 15 : i32
    %92 = vector.broadcast %c15_i32_43 : i32 to vector<1x256xi32>
    %93 = arith.cmpi slt, %0, %92 : vector<1x256xi32>
    %cst_44 = arith.constant 0.000000e+00 : f32
    %94 = vector.shape_cast %93 : vector<1x256xi1> to vector<1x256xi1>
    %95 = vector.broadcast %94 : vector<1x256xi1> to vector<4x256xi1>
    %96 = vector.broadcast %cst_44 : f32 to vector<4x256xf32>
    %97 = arith.select %95, %91, %96 : vector<4x256xi1>, vector<4x256xf32>
    %c7 = arith.constant 7 : index
    %c0_45 = arith.constant 0 : index
    %c0_46 = arith.constant 0 : index
    %98 = vector.load %arg2[%c7, %c0_45, %c0_46] : memref<9x8x4xbf16, #tpu.memory_space<vmem>>, vector<1x8x4xbf16>
    %99 = vector.shape_cast %98 : vector<1x8x4xbf16> to vector<8x4xbf16>
    %100 = arith.truncf %97 : vector<4x256xf32> to vector<4x256xbf16>
    %cst_47 = arith.constant dense<0.000000e+00> : vector<8x256xf32>
    %101 = tpu.matmul %99, %100, %cst_47 {dimension_numbers = #tpu.dot_dimension_numbers<[1], [0], [0], [1], [0, 0, 1, 1], [], []>} : vector<8x4xbf16>, vector<4x256xbf16>, vector<8x256xf32> -> vector<8x256xf32>
    %102 = arith.addf %90, %101 : vector<8x256xf32>
    %c239_i32 = arith.constant 239 : i32
    %103 = tpu.dynamic_rotate %3 by %c239_i32 dim 1 : vector<4x256xf32>, i32 -> vector<4x256xf32>
    %c15_i32_48 = arith.constant 15 : i32
    %104 = vector.broadcast %c15_i32_48 : i32 to vector<1x256xi32>
    %105 = arith.cmpi slt, %0, %104 : vector<1x256xi32>
    %c15_i32_49 = arith.constant 15 : i32
    %106 = vector.broadcast %c15_i32_49 : i32 to vector<1x256xi32>
    %107 = arith.cmpi slt, %1, %106 : vector<1x256xi32>
    %108 = arith.andi %105, %107 : vector<1x256xi1>
    %cst_50 = arith.constant 0.000000e+00 : f32
    %109 = vector.shape_cast %108 : vector<1x256xi1> to vector<1x256xi1>
    %110 = vector.broadcast %109 : vector<1x256xi1> to vector<4x256xi1>
    %111 = vector.broadcast %cst_50 : f32 to vector<4x256xf32>
    %112 = arith.select %110, %103, %111 : vector<4x256xi1>, vector<4x256xf32>
    %c8 = arith.constant 8 : index
    %c0_51 = arith.constant 0 : index
    %c0_52 = arith.constant 0 : index
    %113 = vector.load %arg2[%c8, %c0_51, %c0_52] : memref<9x8x4xbf16, #tpu.memory_space<vmem>>, vector<1x8x4xbf16>
    %114 = vector.shape_cast %113 : vector<1x8x4xbf16> to vector<8x4xbf16>
    %115 = arith.truncf %112 : vector<4x256xf32> to vector<4x256xbf16>
    %cst_53 = arith.constant dense<0.000000e+00> : vector<8x256xf32>
    %116 = tpu.matmul %114, %115, %cst_53 {dimension_numbers = #tpu.dot_dimension_numbers<[1], [0], [0], [1], [0, 0, 1, 1], [], []>} : vector<8x4xbf16>, vector<4x256xbf16>, vector<8x256xf32> -> vector<8x256xf32>
    %117 = arith.addf %102, %116 : vector<8x256xf32>
    %c0_54 = arith.constant 0 : index
    %c0_55 = arith.constant 0 : index
    %118 = vector.load %arg3[%c0_54, %c0_55] : memref<8x1xf32, #tpu.memory_space<vmem>>, vector<8x1xf32>
    %119 = vector.broadcast %118 : vector<8x1xf32> to vector<8x256xf32>
    %120 = arith.addf %117, %119 : vector<8x256xf32>
    %cst_56 = arith.constant 0.000000e+00 : f32
    %121 = vector.broadcast %cst_56 : f32 to vector<8x256xf32>
    %c51_i32 = arith.constant 51 : i32
    %122 = tpu.dynamic_rotate %120 by %c51_i32 dim 1 : vector<8x256xf32>, i32 -> vector<8x256xf32>
    %c3_i32 = arith.constant 3 : i32
    %123 = vector.broadcast %c3_i32 : i32 to vector<1x256xi32>
    %124 = arith.cmpi sge, %0, %123 : vector<1x256xi32>
    %c3_i32_57 = arith.constant 3 : i32
    %125 = vector.broadcast %c3_i32_57 : i32 to vector<1x256xi32>
    %126 = arith.cmpi sge, %1, %125 : vector<1x256xi32>
    %127 = arith.andi %124, %126 : vector<1x256xi1>
    %cst_58 = arith.constant 0.000000e+00 : f32
    %128 = vector.shape_cast %127 : vector<1x256xi1> to vector<1x256xi1>
    %129 = vector.broadcast %128 : vector<1x256xi1> to vector<8x256xi1>
    %130 = vector.broadcast %cst_58 : f32 to vector<8x256xf32>
    %131 = arith.select %129, %122, %130 : vector<8x256xi1>, vector<8x256xf32>
    %c0_59 = arith.constant 0 : index
    %c0_60 = arith.constant 0 : index
    %c0_61 = arith.constant 0 : index
    %132 = vector.load %arg4[%c0_59, %c0_60, %c0_61] : memref<49x8x1xf32, #tpu.memory_space<vmem>>, vector<1x8x1xf32>
    %133 = vector.shape_cast %132 : vector<1x8x1xf32> to vector<8x1xf32>
    %134 = vector.broadcast %133 : vector<8x1xf32> to vector<8x256xf32>
    %135 = arith.mulf %131, %134 : vector<8x256xf32>
    %136 = arith.addf %121, %135 : vector<8x256xf32>
    %c50_i32 = arith.constant 50 : i32
    %137 = tpu.dynamic_rotate %120 by %c50_i32 dim 1 : vector<8x256xf32>, i32 -> vector<8x256xf32>
    %c3_i32_62 = arith.constant 3 : i32
    %138 = vector.broadcast %c3_i32_62 : i32 to vector<1x256xi32>
    %139 = arith.cmpi sge, %0, %138 : vector<1x256xi32>
    %c2_i32 = arith.constant 2 : i32
    %140 = vector.broadcast %c2_i32 : i32 to vector<1x256xi32>
    %141 = arith.cmpi sge, %1, %140 : vector<1x256xi32>
    %142 = arith.andi %139, %141 : vector<1x256xi1>
    %cst_63 = arith.constant 0.000000e+00 : f32
    %143 = vector.shape_cast %142 : vector<1x256xi1> to vector<1x256xi1>
    %144 = vector.broadcast %143 : vector<1x256xi1> to vector<8x256xi1>
    %145 = vector.broadcast %cst_63 : f32 to vector<8x256xf32>
    %146 = arith.select %144, %137, %145 : vector<8x256xi1>, vector<8x256xf32>
    %c1_64 = arith.constant 1 : index
    %c0_65 = arith.constant 0 : index
    %c0_66 = arith.constant 0 : index
    %147 = vector.load %arg4[%c1_64, %c0_65, %c0_66] : memref<49x8x1xf32, #tpu.memory_space<vmem>>, vector<1x8x1xf32>
    %148 = vector.shape_cast %147 : vector<1x8x1xf32> to vector<8x1xf32>
    %149 = vector.broadcast %148 : vector<8x1xf32> to vector<8x256xf32>
    %150 = arith.mulf %146, %149 : vector<8x256xf32>
    %151 = arith.addf %136, %150 : vector<8x256xf32>
    %c49_i32 = arith.constant 49 : i32
    %152 = tpu.dynamic_rotate %120 by %c49_i32 dim 1 : vector<8x256xf32>, i32 -> vector<8x256xf32>
    %c3_i32_67 = arith.constant 3 : i32
    %153 = vector.broadcast %c3_i32_67 : i32 to vector<1x256xi32>
    %154 = arith.cmpi sge, %0, %153 : vector<1x256xi32>
    %c1_i32_68 = arith.constant 1 : i32
    %155 = vector.broadcast %c1_i32_68 : i32 to vector<1x256xi32>
    %156 = arith.cmpi sge, %1, %155 : vector<1x256xi32>
    %157 = arith.andi %154, %156 : vector<1x256xi1>
    %cst_69 = arith.constant 0.000000e+00 : f32
    %158 = vector.shape_cast %157 : vector<1x256xi1> to vector<1x256xi1>
    %159 = vector.broadcast %158 : vector<1x256xi1> to vector<8x256xi1>
    %160 = vector.broadcast %cst_69 : f32 to vector<8x256xf32>
    %161 = arith.select %159, %152, %160 : vector<8x256xi1>, vector<8x256xf32>
    %c2_70 = arith.constant 2 : index
    %c0_71 = arith.constant 0 : index
    %c0_72 = arith.constant 0 : index
    %162 = vector.load %arg4[%c2_70, %c0_71, %c0_72] : memref<49x8x1xf32, #tpu.memory_space<vmem>>, vector<1x8x1xf32>
    %163 = vector.shape_cast %162 : vector<1x8x1xf32> to vector<8x1xf32>
    %164 = vector.broadcast %163 : vector<8x1xf32> to vector<8x256xf32>
    %165 = arith.mulf %161, %164 : vector<8x256xf32>
    %166 = arith.addf %151, %165 : vector<8x256xf32>
    %c48_i32 = arith.constant 48 : i32
    %167 = tpu.dynamic_rotate %120 by %c48_i32 dim 1 : vector<8x256xf32>, i32 -> vector<8x256xf32>
    %c3_i32_73 = arith.constant 3 : i32
    %168 = vector.broadcast %c3_i32_73 : i32 to vector<1x256xi32>
    %169 = arith.cmpi sge, %0, %168 : vector<1x256xi32>
    %cst_74 = arith.constant 0.000000e+00 : f32
    %170 = vector.shape_cast %169 : vector<1x256xi1> to vector<1x256xi1>
    %171 = vector.broadcast %170 : vector<1x256xi1> to vector<8x256xi1>
    %172 = vector.broadcast %cst_74 : f32 to vector<8x256xf32>
    %173 = arith.select %171, %167, %172 : vector<8x256xi1>, vector<8x256xf32>
    %c3_75 = arith.constant 3 : index
    %c0_76 = arith.constant 0 : index
    %c0_77 = arith.constant 0 : index
    %174 = vector.load %arg4[%c3_75, %c0_76, %c0_77] : memref<49x8x1xf32, #tpu.memory_space<vmem>>, vector<1x8x1xf32>
    %175 = vector.shape_cast %174 : vector<1x8x1xf32> to vector<8x1xf32>
    %176 = vector.broadcast %175 : vector<8x1xf32> to vector<8x256xf32>
    %177 = arith.mulf %173, %176 : vector<8x256xf32>
    %178 = arith.addf %166, %177 : vector<8x256xf32>
    %c47_i32 = arith.constant 47 : i32
    %179 = tpu.dynamic_rotate %120 by %c47_i32 dim 1 : vector<8x256xf32>, i32 -> vector<8x256xf32>
    %c3_i32_78 = arith.constant 3 : i32
    %180 = vector.broadcast %c3_i32_78 : i32 to vector<1x256xi32>
    %181 = arith.cmpi sge, %0, %180 : vector<1x256xi32>
    %c15_i32_79 = arith.constant 15 : i32
    %182 = vector.broadcast %c15_i32_79 : i32 to vector<1x256xi32>
    %183 = arith.cmpi slt, %1, %182 : vector<1x256xi32>
    %184 = arith.andi %181, %183 : vector<1x256xi1>
    %cst_80 = arith.constant 0.000000e+00 : f32
    %185 = vector.shape_cast %184 : vector<1x256xi1> to vector<1x256xi1>
    %186 = vector.broadcast %185 : vector<1x256xi1> to vector<8x256xi1>
    %187 = vector.broadcast %cst_80 : f32 to vector<8x256xf32>
    %188 = arith.select %186, %179, %187 : vector<8x256xi1>, vector<8x256xf32>
    %c4_81 = arith.constant 4 : index
    %c0_82 = arith.constant 0 : index
    %c0_83 = arith.constant 0 : index
    %189 = vector.load %arg4[%c4_81, %c0_82, %c0_83] : memref<49x8x1xf32, #tpu.memory_space<vmem>>, vector<1x8x1xf32>
    %190 = vector.shape_cast %189 : vector<1x8x1xf32> to vector<8x1xf32>
    %191 = vector.broadcast %190 : vector<8x1xf32> to vector<8x256xf32>
    %192 = arith.mulf %188, %191 : vector<8x256xf32>
    %193 = arith.addf %178, %192 : vector<8x256xf32>
    %c46_i32 = arith.constant 46 : i32
    %194 = tpu.dynamic_rotate %120 by %c46_i32 dim 1 : vector<8x256xf32>, i32 -> vector<8x256xf32>
    %c3_i32_84 = arith.constant 3 : i32
    %195 = vector.broadcast %c3_i32_84 : i32 to vector<1x256xi32>
    %196 = arith.cmpi sge, %0, %195 : vector<1x256xi32>
    %c14_i32 = arith.constant 14 : i32
    %197 = vector.broadcast %c14_i32 : i32 to vector<1x256xi32>
    %198 = arith.cmpi slt, %1, %197 : vector<1x256xi32>
    %199 = arith.andi %196, %198 : vector<1x256xi1>
    %cst_85 = arith.constant 0.000000e+00 : f32
    %200 = vector.shape_cast %199 : vector<1x256xi1> to vector<1x256xi1>
    %201 = vector.broadcast %200 : vector<1x256xi1> to vector<8x256xi1>
    %202 = vector.broadcast %cst_85 : f32 to vector<8x256xf32>
    %203 = arith.select %201, %194, %202 : vector<8x256xi1>, vector<8x256xf32>
    %c5_86 = arith.constant 5 : index
    %c0_87 = arith.constant 0 : index
    %c0_88 = arith.constant 0 : index
    %204 = vector.load %arg4[%c5_86, %c0_87, %c0_88] : memref<49x8x1xf32, #tpu.memory_space<vmem>>, vector<1x8x1xf32>
    %205 = vector.shape_cast %204 : vector<1x8x1xf32> to vector<8x1xf32>
    %206 = vector.broadcast %205 : vector<8x1xf32> to vector<8x256xf32>
    %207 = arith.mulf %203, %206 : vector<8x256xf32>
    %208 = arith.addf %193, %207 : vector<8x256xf32>
    %c45_i32 = arith.constant 45 : i32
    %209 = tpu.dynamic_rotate %120 by %c45_i32 dim 1 : vector<8x256xf32>, i32 -> vector<8x256xf32>
    %c3_i32_89 = arith.constant 3 : i32
    %210 = vector.broadcast %c3_i32_89 : i32 to vector<1x256xi32>
    %211 = arith.cmpi sge, %0, %210 : vector<1x256xi32>
    %c13_i32 = arith.constant 13 : i32
    %212 = vector.broadcast %c13_i32 : i32 to vector<1x256xi32>
    %213 = arith.cmpi slt, %1, %212 : vector<1x256xi32>
    %214 = arith.andi %211, %213 : vector<1x256xi1>
    %cst_90 = arith.constant 0.000000e+00 : f32
    %215 = vector.shape_cast %214 : vector<1x256xi1> to vector<1x256xi1>
    %216 = vector.broadcast %215 : vector<1x256xi1> to vector<8x256xi1>
    %217 = vector.broadcast %cst_90 : f32 to vector<8x256xf32>
    %218 = arith.select %216, %209, %217 : vector<8x256xi1>, vector<8x256xf32>
    %c6_91 = arith.constant 6 : index
    %c0_92 = arith.constant 0 : index
    %c0_93 = arith.constant 0 : index
    %219 = vector.load %arg4[%c6_91, %c0_92, %c0_93] : memref<49x8x1xf32, #tpu.memory_space<vmem>>, vector<1x8x1xf32>
    %220 = vector.shape_cast %219 : vector<1x8x1xf32> to vector<8x1xf32>
    %221 = vector.broadcast %220 : vector<8x1xf32> to vector<8x256xf32>
    %222 = arith.mulf %218, %221 : vector<8x256xf32>
    %223 = arith.addf %208, %222 : vector<8x256xf32>
    %c35_i32 = arith.constant 35 : i32
    %224 = tpu.dynamic_rotate %120 by %c35_i32 dim 1 : vector<8x256xf32>, i32 -> vector<8x256xf32>
    %c2_i32_94 = arith.constant 2 : i32
    %225 = vector.broadcast %c2_i32_94 : i32 to vector<1x256xi32>
    %226 = arith.cmpi sge, %0, %225 : vector<1x256xi32>
    %c3_i32_95 = arith.constant 3 : i32
    %227 = vector.broadcast %c3_i32_95 : i32 to vector<1x256xi32>
    %228 = arith.cmpi sge, %1, %227 : vector<1x256xi32>
    %229 = arith.andi %226, %228 : vector<1x256xi1>
    %cst_96 = arith.constant 0.000000e+00 : f32
    %230 = vector.shape_cast %229 : vector<1x256xi1> to vector<1x256xi1>
    %231 = vector.broadcast %230 : vector<1x256xi1> to vector<8x256xi1>
    %232 = vector.broadcast %cst_96 : f32 to vector<8x256xf32>
    %233 = arith.select %231, %224, %232 : vector<8x256xi1>, vector<8x256xf32>
    %c7_97 = arith.constant 7 : index
    %c0_98 = arith.constant 0 : index
    %c0_99 = arith.constant 0 : index
    %234 = vector.load %arg4[%c7_97, %c0_98, %c0_99] : memref<49x8x1xf32, #tpu.memory_space<vmem>>, vector<1x8x1xf32>
    %235 = vector.shape_cast %234 : vector<1x8x1xf32> to vector<8x1xf32>
    %236 = vector.broadcast %235 : vector<8x1xf32> to vector<8x256xf32>
    %237 = arith.mulf %233, %236 : vector<8x256xf32>
    %238 = arith.addf %223, %237 : vector<8x256xf32>
    %c34_i32 = arith.constant 34 : i32
    %239 = tpu.dynamic_rotate %120 by %c34_i32 dim 1 : vector<8x256xf32>, i32 -> vector<8x256xf32>
    %c2_i32_100 = arith.constant 2 : i32
    %240 = vector.broadcast %c2_i32_100 : i32 to vector<1x256xi32>
    %241 = arith.cmpi sge, %0, %240 : vector<1x256xi32>
    %c2_i32_101 = arith.constant 2 : i32
    %242 = vector.broadcast %c2_i32_101 : i32 to vector<1x256xi32>
    %243 = arith.cmpi sge, %1, %242 : vector<1x256xi32>
    %244 = arith.andi %241, %243 : vector<1x256xi1>
    %cst_102 = arith.constant 0.000000e+00 : f32
    %245 = vector.shape_cast %244 : vector<1x256xi1> to vector<1x256xi1>
    %246 = vector.broadcast %245 : vector<1x256xi1> to vector<8x256xi1>
    %247 = vector.broadcast %cst_102 : f32 to vector<8x256xf32>
    %248 = arith.select %246, %239, %247 : vector<8x256xi1>, vector<8x256xf32>
    %c8_103 = arith.constant 8 : index
    %c0_104 = arith.constant 0 : index
    %c0_105 = arith.constant 0 : index
    %249 = vector.load %arg4[%c8_103, %c0_104, %c0_105] : memref<49x8x1xf32, #tpu.memory_space<vmem>>, vector<1x8x1xf32>
    %250 = vector.shape_cast %249 : vector<1x8x1xf32> to vector<8x1xf32>
    %251 = vector.broadcast %250 : vector<8x1xf32> to vector<8x256xf32>
    %252 = arith.mulf %248, %251 : vector<8x256xf32>
    %253 = arith.addf %238, %252 : vector<8x256xf32>
    %c33_i32 = arith.constant 33 : i32
    %254 = tpu.dynamic_rotate %120 by %c33_i32 dim 1 : vector<8x256xf32>, i32 -> vector<8x256xf32>
    %c2_i32_106 = arith.constant 2 : i32
    %255 = vector.broadcast %c2_i32_106 : i32 to vector<1x256xi32>
    %256 = arith.cmpi sge, %0, %255 : vector<1x256xi32>
    %c1_i32_107 = arith.constant 1 : i32
    %257 = vector.broadcast %c1_i32_107 : i32 to vector<1x256xi32>
    %258 = arith.cmpi sge, %1, %257 : vector<1x256xi32>
    %259 = arith.andi %256, %258 : vector<1x256xi1>
    %cst_108 = arith.constant 0.000000e+00 : f32
    %260 = vector.shape_cast %259 : vector<1x256xi1> to vector<1x256xi1>
    %261 = vector.broadcast %260 : vector<1x256xi1> to vector<8x256xi1>
    %262 = vector.broadcast %cst_108 : f32 to vector<8x256xf32>
    %263 = arith.select %261, %254, %262 : vector<8x256xi1>, vector<8x256xf32>
    %c9 = arith.constant 9 : index
    %c0_109 = arith.constant 0 : index
    %c0_110 = arith.constant 0 : index
    %264 = vector.load %arg4[%c9, %c0_109, %c0_110] : memref<49x8x1xf32, #tpu.memory_space<vmem>>, vector<1x8x1xf32>
    %265 = vector.shape_cast %264 : vector<1x8x1xf32> to vector<8x1xf32>
    %266 = vector.broadcast %265 : vector<8x1xf32> to vector<8x256xf32>
    %267 = arith.mulf %263, %266 : vector<8x256xf32>
    %268 = arith.addf %253, %267 : vector<8x256xf32>
    %c32_i32 = arith.constant 32 : i32
    %269 = tpu.dynamic_rotate %120 by %c32_i32 dim 1 : vector<8x256xf32>, i32 -> vector<8x256xf32>
    %c2_i32_111 = arith.constant 2 : i32
    %270 = vector.broadcast %c2_i32_111 : i32 to vector<1x256xi32>
    %271 = arith.cmpi sge, %0, %270 : vector<1x256xi32>
    %cst_112 = arith.constant 0.000000e+00 : f32
    %272 = vector.shape_cast %271 : vector<1x256xi1> to vector<1x256xi1>
    %273 = vector.broadcast %272 : vector<1x256xi1> to vector<8x256xi1>
    %274 = vector.broadcast %cst_112 : f32 to vector<8x256xf32>
    %275 = arith.select %273, %269, %274 : vector<8x256xi1>, vector<8x256xf32>
    %c10 = arith.constant 10 : index
    %c0_113 = arith.constant 0 : index
    %c0_114 = arith.constant 0 : index
    %276 = vector.load %arg4[%c10, %c0_113, %c0_114] : memref<49x8x1xf32, #tpu.memory_space<vmem>>, vector<1x8x1xf32>
    %277 = vector.shape_cast %276 : vector<1x8x1xf32> to vector<8x1xf32>
    %278 = vector.broadcast %277 : vector<8x1xf32> to vector<8x256xf32>
    %279 = arith.mulf %275, %278 : vector<8x256xf32>
    %280 = arith.addf %268, %279 : vector<8x256xf32>
    %c31_i32 = arith.constant 31 : i32
    %281 = tpu.dynamic_rotate %120 by %c31_i32 dim 1 : vector<8x256xf32>, i32 -> vector<8x256xf32>
    %c2_i32_115 = arith.constant 2 : i32
    %282 = vector.broadcast %c2_i32_115 : i32 to vector<1x256xi32>
    %283 = arith.cmpi sge, %0, %282 : vector<1x256xi32>
    %c15_i32_116 = arith.constant 15 : i32
    %284 = vector.broadcast %c15_i32_116 : i32 to vector<1x256xi32>
    %285 = arith.cmpi slt, %1, %284 : vector<1x256xi32>
    %286 = arith.andi %283, %285 : vector<1x256xi1>
    %cst_117 = arith.constant 0.000000e+00 : f32
    %287 = vector.shape_cast %286 : vector<1x256xi1> to vector<1x256xi1>
    %288 = vector.broadcast %287 : vector<1x256xi1> to vector<8x256xi1>
    %289 = vector.broadcast %cst_117 : f32 to vector<8x256xf32>
    %290 = arith.select %288, %281, %289 : vector<8x256xi1>, vector<8x256xf32>
    %c11 = arith.constant 11 : index
    %c0_118 = arith.constant 0 : index
    %c0_119 = arith.constant 0 : index
    %291 = vector.load %arg4[%c11, %c0_118, %c0_119] : memref<49x8x1xf32, #tpu.memory_space<vmem>>, vector<1x8x1xf32>
    %292 = vector.shape_cast %291 : vector<1x8x1xf32> to vector<8x1xf32>
    %293 = vector.broadcast %292 : vector<8x1xf32> to vector<8x256xf32>
    %294 = arith.mulf %290, %293 : vector<8x256xf32>
    %295 = arith.addf %280, %294 : vector<8x256xf32>
    %c30_i32 = arith.constant 30 : i32
    %296 = tpu.dynamic_rotate %120 by %c30_i32 dim 1 : vector<8x256xf32>, i32 -> vector<8x256xf32>
    %c2_i32_120 = arith.constant 2 : i32
    %297 = vector.broadcast %c2_i32_120 : i32 to vector<1x256xi32>
    %298 = arith.cmpi sge, %0, %297 : vector<1x256xi32>
    %c14_i32_121 = arith.constant 14 : i32
    %299 = vector.broadcast %c14_i32_121 : i32 to vector<1x256xi32>
    %300 = arith.cmpi slt, %1, %299 : vector<1x256xi32>
    %301 = arith.andi %298, %300 : vector<1x256xi1>
    %cst_122 = arith.constant 0.000000e+00 : f32
    %302 = vector.shape_cast %301 : vector<1x256xi1> to vector<1x256xi1>
    %303 = vector.broadcast %302 : vector<1x256xi1> to vector<8x256xi1>
    %304 = vector.broadcast %cst_122 : f32 to vector<8x256xf32>
    %305 = arith.select %303, %296, %304 : vector<8x256xi1>, vector<8x256xf32>
    %c12 = arith.constant 12 : index
    %c0_123 = arith.constant 0 : index
    %c0_124 = arith.constant 0 : index
    %306 = vector.load %arg4[%c12, %c0_123, %c0_124] : memref<49x8x1xf32, #tpu.memory_space<vmem>>, vector<1x8x1xf32>
    %307 = vector.shape_cast %306 : vector<1x8x1xf32> to vector<8x1xf32>
    %308 = vector.broadcast %307 : vector<8x1xf32> to vector<8x256xf32>
    %309 = arith.mulf %305, %308 : vector<8x256xf32>
    %310 = arith.addf %295, %309 : vector<8x256xf32>
    %c29_i32 = arith.constant 29 : i32
    %311 = tpu.dynamic_rotate %120 by %c29_i32 dim 1 : vector<8x256xf32>, i32 -> vector<8x256xf32>
    %c2_i32_125 = arith.constant 2 : i32
    %312 = vector.broadcast %c2_i32_125 : i32 to vector<1x256xi32>
    %313 = arith.cmpi sge, %0, %312 : vector<1x256xi32>
    %c13_i32_126 = arith.constant 13 : i32
    %314 = vector.broadcast %c13_i32_126 : i32 to vector<1x256xi32>
    %315 = arith.cmpi slt, %1, %314 : vector<1x256xi32>
    %316 = arith.andi %313, %315 : vector<1x256xi1>
    %cst_127 = arith.constant 0.000000e+00 : f32
    %317 = vector.shape_cast %316 : vector<1x256xi1> to vector<1x256xi1>
    %318 = vector.broadcast %317 : vector<1x256xi1> to vector<8x256xi1>
    %319 = vector.broadcast %cst_127 : f32 to vector<8x256xf32>
    %320 = arith.select %318, %311, %319 : vector<8x256xi1>, vector<8x256xf32>
    %c13 = arith.constant 13 : index
    %c0_128 = arith.constant 0 : index
    %c0_129 = arith.constant 0 : index
    %321 = vector.load %arg4[%c13, %c0_128, %c0_129] : memref<49x8x1xf32, #tpu.memory_space<vmem>>, vector<1x8x1xf32>
    %322 = vector.shape_cast %321 : vector<1x8x1xf32> to vector<8x1xf32>
    %323 = vector.broadcast %322 : vector<8x1xf32> to vector<8x256xf32>
    %324 = arith.mulf %320, %323 : vector<8x256xf32>
    %325 = arith.addf %310, %324 : vector<8x256xf32>
    %c19_i32 = arith.constant 19 : i32
    %326 = tpu.dynamic_rotate %120 by %c19_i32 dim 1 : vector<8x256xf32>, i32 -> vector<8x256xf32>
    %c1_i32_130 = arith.constant 1 : i32
    %327 = vector.broadcast %c1_i32_130 : i32 to vector<1x256xi32>
    %328 = arith.cmpi sge, %0, %327 : vector<1x256xi32>
    %c3_i32_131 = arith.constant 3 : i32
    %329 = vector.broadcast %c3_i32_131 : i32 to vector<1x256xi32>
    %330 = arith.cmpi sge, %1, %329 : vector<1x256xi32>
    %331 = arith.andi %328, %330 : vector<1x256xi1>
    %cst_132 = arith.constant 0.000000e+00 : f32
    %332 = vector.shape_cast %331 : vector<1x256xi1> to vector<1x256xi1>
    %333 = vector.broadcast %332 : vector<1x256xi1> to vector<8x256xi1>
    %334 = vector.broadcast %cst_132 : f32 to vector<8x256xf32>
    %335 = arith.select %333, %326, %334 : vector<8x256xi1>, vector<8x256xf32>
    %c14 = arith.constant 14 : index
    %c0_133 = arith.constant 0 : index
    %c0_134 = arith.constant 0 : index
    %336 = vector.load %arg4[%c14, %c0_133, %c0_134] : memref<49x8x1xf32, #tpu.memory_space<vmem>>, vector<1x8x1xf32>
    %337 = vector.shape_cast %336 : vector<1x8x1xf32> to vector<8x1xf32>
    %338 = vector.broadcast %337 : vector<8x1xf32> to vector<8x256xf32>
    %339 = arith.mulf %335, %338 : vector<8x256xf32>
    %340 = arith.addf %325, %339 : vector<8x256xf32>
    %c18_i32 = arith.constant 18 : i32
    %341 = tpu.dynamic_rotate %120 by %c18_i32 dim 1 : vector<8x256xf32>, i32 -> vector<8x256xf32>
    %c1_i32_135 = arith.constant 1 : i32
    %342 = vector.broadcast %c1_i32_135 : i32 to vector<1x256xi32>
    %343 = arith.cmpi sge, %0, %342 : vector<1x256xi32>
    %c2_i32_136 = arith.constant 2 : i32
    %344 = vector.broadcast %c2_i32_136 : i32 to vector<1x256xi32>
    %345 = arith.cmpi sge, %1, %344 : vector<1x256xi32>
    %346 = arith.andi %343, %345 : vector<1x256xi1>
    %cst_137 = arith.constant 0.000000e+00 : f32
    %347 = vector.shape_cast %346 : vector<1x256xi1> to vector<1x256xi1>
    %348 = vector.broadcast %347 : vector<1x256xi1> to vector<8x256xi1>
    %349 = vector.broadcast %cst_137 : f32 to vector<8x256xf32>
    %350 = arith.select %348, %341, %349 : vector<8x256xi1>, vector<8x256xf32>
    %c15 = arith.constant 15 : index
    %c0_138 = arith.constant 0 : index
    %c0_139 = arith.constant 0 : index
    %351 = vector.load %arg4[%c15, %c0_138, %c0_139] : memref<49x8x1xf32, #tpu.memory_space<vmem>>, vector<1x8x1xf32>
    %352 = vector.shape_cast %351 : vector<1x8x1xf32> to vector<8x1xf32>
    %353 = vector.broadcast %352 : vector<8x1xf32> to vector<8x256xf32>
    %354 = arith.mulf %350, %353 : vector<8x256xf32>
    %355 = arith.addf %340, %354 : vector<8x256xf32>
    %c17_i32_140 = arith.constant 17 : i32
    %356 = tpu.dynamic_rotate %120 by %c17_i32_140 dim 1 : vector<8x256xf32>, i32 -> vector<8x256xf32>
    %c1_i32_141 = arith.constant 1 : i32
    %357 = vector.broadcast %c1_i32_141 : i32 to vector<1x256xi32>
    %358 = arith.cmpi sge, %0, %357 : vector<1x256xi32>
    %c1_i32_142 = arith.constant 1 : i32
    %359 = vector.broadcast %c1_i32_142 : i32 to vector<1x256xi32>
    %360 = arith.cmpi sge, %1, %359 : vector<1x256xi32>
    %361 = arith.andi %358, %360 : vector<1x256xi1>
    %cst_143 = arith.constant 0.000000e+00 : f32
    %362 = vector.shape_cast %361 : vector<1x256xi1> to vector<1x256xi1>
    %363 = vector.broadcast %362 : vector<1x256xi1> to vector<8x256xi1>
    %364 = vector.broadcast %cst_143 : f32 to vector<8x256xf32>
    %365 = arith.select %363, %356, %364 : vector<8x256xi1>, vector<8x256xf32>
    %c16 = arith.constant 16 : index
    %c0_144 = arith.constant 0 : index
    %c0_145 = arith.constant 0 : index
    %366 = vector.load %arg4[%c16, %c0_144, %c0_145] : memref<49x8x1xf32, #tpu.memory_space<vmem>>, vector<1x8x1xf32>
    %367 = vector.shape_cast %366 : vector<1x8x1xf32> to vector<8x1xf32>
    %368 = vector.broadcast %367 : vector<8x1xf32> to vector<8x256xf32>
    %369 = arith.mulf %365, %368 : vector<8x256xf32>
    %370 = arith.addf %355, %369 : vector<8x256xf32>
    %c16_i32_146 = arith.constant 16 : i32
    %371 = tpu.dynamic_rotate %120 by %c16_i32_146 dim 1 : vector<8x256xf32>, i32 -> vector<8x256xf32>
    %c1_i32_147 = arith.constant 1 : i32
    %372 = vector.broadcast %c1_i32_147 : i32 to vector<1x256xi32>
    %373 = arith.cmpi sge, %0, %372 : vector<1x256xi32>
    %cst_148 = arith.constant 0.000000e+00 : f32
    %374 = vector.shape_cast %373 : vector<1x256xi1> to vector<1x256xi1>
    %375 = vector.broadcast %374 : vector<1x256xi1> to vector<8x256xi1>
    %376 = vector.broadcast %cst_148 : f32 to vector<8x256xf32>
    %377 = arith.select %375, %371, %376 : vector<8x256xi1>, vector<8x256xf32>
    %c17 = arith.constant 17 : index
    %c0_149 = arith.constant 0 : index
    %c0_150 = arith.constant 0 : index
    %378 = vector.load %arg4[%c17, %c0_149, %c0_150] : memref<49x8x1xf32, #tpu.memory_space<vmem>>, vector<1x8x1xf32>
    %379 = vector.shape_cast %378 : vector<1x8x1xf32> to vector<8x1xf32>
    %380 = vector.broadcast %379 : vector<8x1xf32> to vector<8x256xf32>
    %381 = arith.mulf %377, %380 : vector<8x256xf32>
    %382 = arith.addf %370, %381 : vector<8x256xf32>
    %c15_i32_151 = arith.constant 15 : i32
    %383 = tpu.dynamic_rotate %120 by %c15_i32_151 dim 1 : vector<8x256xf32>, i32 -> vector<8x256xf32>
    %c1_i32_152 = arith.constant 1 : i32
    %384 = vector.broadcast %c1_i32_152 : i32 to vector<1x256xi32>
    %385 = arith.cmpi sge, %0, %384 : vector<1x256xi32>
    %c15_i32_153 = arith.constant 15 : i32
    %386 = vector.broadcast %c15_i32_153 : i32 to vector<1x256xi32>
    %387 = arith.cmpi slt, %1, %386 : vector<1x256xi32>
    %388 = arith.andi %385, %387 : vector<1x256xi1>
    %cst_154 = arith.constant 0.000000e+00 : f32
    %389 = vector.shape_cast %388 : vector<1x256xi1> to vector<1x256xi1>
    %390 = vector.broadcast %389 : vector<1x256xi1> to vector<8x256xi1>
    %391 = vector.broadcast %cst_154 : f32 to vector<8x256xf32>
    %392 = arith.select %390, %383, %391 : vector<8x256xi1>, vector<8x256xf32>
    %c18 = arith.constant 18 : index
    %c0_155 = arith.constant 0 : index
    %c0_156 = arith.constant 0 : index
    %393 = vector.load %arg4[%c18, %c0_155, %c0_156] : memref<49x8x1xf32, #tpu.memory_space<vmem>>, vector<1x8x1xf32>
    %394 = vector.shape_cast %393 : vector<1x8x1xf32> to vector<8x1xf32>
    %395 = vector.broadcast %394 : vector<8x1xf32> to vector<8x256xf32>
    %396 = arith.mulf %392, %395 : vector<8x256xf32>
    %397 = arith.addf %382, %396 : vector<8x256xf32>
    %c14_i32_157 = arith.constant 14 : i32
    %398 = tpu.dynamic_rotate %120 by %c14_i32_157 dim 1 : vector<8x256xf32>, i32 -> vector<8x256xf32>
    %c1_i32_158 = arith.constant 1 : i32
    %399 = vector.broadcast %c1_i32_158 : i32 to vector<1x256xi32>
    %400 = arith.cmpi sge, %0, %399 : vector<1x256xi32>
    %c14_i32_159 = arith.constant 14 : i32
    %401 = vector.broadcast %c14_i32_159 : i32 to vector<1x256xi32>
    %402 = arith.cmpi slt, %1, %401 : vector<1x256xi32>
    %403 = arith.andi %400, %402 : vector<1x256xi1>
    %cst_160 = arith.constant 0.000000e+00 : f32
    %404 = vector.shape_cast %403 : vector<1x256xi1> to vector<1x256xi1>
    %405 = vector.broadcast %404 : vector<1x256xi1> to vector<8x256xi1>
    %406 = vector.broadcast %cst_160 : f32 to vector<8x256xf32>
    %407 = arith.select %405, %398, %406 : vector<8x256xi1>, vector<8x256xf32>
    %c19 = arith.constant 19 : index
    %c0_161 = arith.constant 0 : index
    %c0_162 = arith.constant 0 : index
    %408 = vector.load %arg4[%c19, %c0_161, %c0_162] : memref<49x8x1xf32, #tpu.memory_space<vmem>>, vector<1x8x1xf32>
    %409 = vector.shape_cast %408 : vector<1x8x1xf32> to vector<8x1xf32>
    %410 = vector.broadcast %409 : vector<8x1xf32> to vector<8x256xf32>
    %411 = arith.mulf %407, %410 : vector<8x256xf32>
    %412 = arith.addf %397, %411 : vector<8x256xf32>
    %c13_i32_163 = arith.constant 13 : i32
    %413 = tpu.dynamic_rotate %120 by %c13_i32_163 dim 1 : vector<8x256xf32>, i32 -> vector<8x256xf32>
    %c1_i32_164 = arith.constant 1 : i32
    %414 = vector.broadcast %c1_i32_164 : i32 to vector<1x256xi32>
    %415 = arith.cmpi sge, %0, %414 : vector<1x256xi32>
    %c13_i32_165 = arith.constant 13 : i32
    %416 = vector.broadcast %c13_i32_165 : i32 to vector<1x256xi32>
    %417 = arith.cmpi slt, %1, %416 : vector<1x256xi32>
    %418 = arith.andi %415, %417 : vector<1x256xi1>
    %cst_166 = arith.constant 0.000000e+00 : f32
    %419 = vector.shape_cast %418 : vector<1x256xi1> to vector<1x256xi1>
    %420 = vector.broadcast %419 : vector<1x256xi1> to vector<8x256xi1>
    %421 = vector.broadcast %cst_166 : f32 to vector<8x256xf32>
    %422 = arith.select %420, %413, %421 : vector<8x256xi1>, vector<8x256xf32>
    %c20 = arith.constant 20 : index
    %c0_167 = arith.constant 0 : index
    %c0_168 = arith.constant 0 : index
    %423 = vector.load %arg4[%c20, %c0_167, %c0_168] : memref<49x8x1xf32, #tpu.memory_space<vmem>>, vector<1x8x1xf32>
    %424 = vector.shape_cast %423 : vector<1x8x1xf32> to vector<8x1xf32>
    %425 = vector.broadcast %424 : vector<8x1xf32> to vector<8x256xf32>
    %426 = arith.mulf %422, %425 : vector<8x256xf32>
    %427 = arith.addf %412, %426 : vector<8x256xf32>
    %c3_i32_169 = arith.constant 3 : i32
    %428 = tpu.dynamic_rotate %120 by %c3_i32_169 dim 1 : vector<8x256xf32>, i32 -> vector<8x256xf32>
    %c3_i32_170 = arith.constant 3 : i32
    %429 = vector.broadcast %c3_i32_170 : i32 to vector<1x256xi32>
    %430 = arith.cmpi sge, %1, %429 : vector<1x256xi32>
    %cst_171 = arith.constant 0.000000e+00 : f32
    %431 = vector.shape_cast %430 : vector<1x256xi1> to vector<1x256xi1>
    %432 = vector.broadcast %431 : vector<1x256xi1> to vector<8x256xi1>
    %433 = vector.broadcast %cst_171 : f32 to vector<8x256xf32>
    %434 = arith.select %432, %428, %433 : vector<8x256xi1>, vector<8x256xf32>
    %c21 = arith.constant 21 : index
    %c0_172 = arith.constant 0 : index
    %c0_173 = arith.constant 0 : index
    %435 = vector.load %arg4[%c21, %c0_172, %c0_173] : memref<49x8x1xf32, #tpu.memory_space<vmem>>, vector<1x8x1xf32>
    %436 = vector.shape_cast %435 : vector<1x8x1xf32> to vector<8x1xf32>
    %437 = vector.broadcast %436 : vector<8x1xf32> to vector<8x256xf32>
    %438 = arith.mulf %434, %437 : vector<8x256xf32>
    %439 = arith.addf %427, %438 : vector<8x256xf32>
    %c2_i32_174 = arith.constant 2 : i32
    %440 = tpu.dynamic_rotate %120 by %c2_i32_174 dim 1 : vector<8x256xf32>, i32 -> vector<8x256xf32>
    %c2_i32_175 = arith.constant 2 : i32
    %441 = vector.broadcast %c2_i32_175 : i32 to vector<1x256xi32>
    %442 = arith.cmpi sge, %1, %441 : vector<1x256xi32>
    %cst_176 = arith.constant 0.000000e+00 : f32
    %443 = vector.shape_cast %442 : vector<1x256xi1> to vector<1x256xi1>
    %444 = vector.broadcast %443 : vector<1x256xi1> to vector<8x256xi1>
    %445 = vector.broadcast %cst_176 : f32 to vector<8x256xf32>
    %446 = arith.select %444, %440, %445 : vector<8x256xi1>, vector<8x256xf32>
    %c22 = arith.constant 22 : index
    %c0_177 = arith.constant 0 : index
    %c0_178 = arith.constant 0 : index
    %447 = vector.load %arg4[%c22, %c0_177, %c0_178] : memref<49x8x1xf32, #tpu.memory_space<vmem>>, vector<1x8x1xf32>
    %448 = vector.shape_cast %447 : vector<1x8x1xf32> to vector<8x1xf32>
    %449 = vector.broadcast %448 : vector<8x1xf32> to vector<8x256xf32>
    %450 = arith.mulf %446, %449 : vector<8x256xf32>
    %451 = arith.addf %439, %450 : vector<8x256xf32>
    %c1_i32_179 = arith.constant 1 : i32
    %452 = tpu.dynamic_rotate %120 by %c1_i32_179 dim 1 : vector<8x256xf32>, i32 -> vector<8x256xf32>
    %c1_i32_180 = arith.constant 1 : i32
    %453 = vector.broadcast %c1_i32_180 : i32 to vector<1x256xi32>
    %454 = arith.cmpi sge, %1, %453 : vector<1x256xi32>
    %cst_181 = arith.constant 0.000000e+00 : f32
    %455 = vector.shape_cast %454 : vector<1x256xi1> to vector<1x256xi1>
    %456 = vector.broadcast %455 : vector<1x256xi1> to vector<8x256xi1>
    %457 = vector.broadcast %cst_181 : f32 to vector<8x256xf32>
    %458 = arith.select %456, %452, %457 : vector<8x256xi1>, vector<8x256xf32>
    %c23 = arith.constant 23 : index
    %c0_182 = arith.constant 0 : index
    %c0_183 = arith.constant 0 : index
    %459 = vector.load %arg4[%c23, %c0_182, %c0_183] : memref<49x8x1xf32, #tpu.memory_space<vmem>>, vector<1x8x1xf32>
    %460 = vector.shape_cast %459 : vector<1x8x1xf32> to vector<8x1xf32>
    %461 = vector.broadcast %460 : vector<8x1xf32> to vector<8x256xf32>
    %462 = arith.mulf %458, %461 : vector<8x256xf32>
    %463 = arith.addf %451, %462 : vector<8x256xf32>
    %c24 = arith.constant 24 : index
    %c0_184 = arith.constant 0 : index
    %c0_185 = arith.constant 0 : index
    %464 = vector.load %arg4[%c24, %c0_184, %c0_185] : memref<49x8x1xf32, #tpu.memory_space<vmem>>, vector<1x8x1xf32>
    %465 = vector.shape_cast %464 : vector<1x8x1xf32> to vector<8x1xf32>
    %466 = vector.broadcast %465 : vector<8x1xf32> to vector<8x256xf32>
    %467 = arith.mulf %120, %466 : vector<8x256xf32>
    %468 = arith.addf %463, %467 : vector<8x256xf32>
    %c255_i32_186 = arith.constant 255 : i32
    %469 = tpu.dynamic_rotate %120 by %c255_i32_186 dim 1 : vector<8x256xf32>, i32 -> vector<8x256xf32>
    %c15_i32_187 = arith.constant 15 : i32
    %470 = vector.broadcast %c15_i32_187 : i32 to vector<1x256xi32>
    %471 = arith.cmpi slt, %1, %470 : vector<1x256xi32>
    %cst_188 = arith.constant 0.000000e+00 : f32
    %472 = vector.shape_cast %471 : vector<1x256xi1> to vector<1x256xi1>
    %473 = vector.broadcast %472 : vector<1x256xi1> to vector<8x256xi1>
    %474 = vector.broadcast %cst_188 : f32 to vector<8x256xf32>
    %475 = arith.select %473, %469, %474 : vector<8x256xi1>, vector<8x256xf32>
    %c25 = arith.constant 25 : index
    %c0_189 = arith.constant 0 : index
    %c0_190 = arith.constant 0 : index
    %476 = vector.load %arg4[%c25, %c0_189, %c0_190] : memref<49x8x1xf32, #tpu.memory_space<vmem>>, vector<1x8x1xf32>
    %477 = vector.shape_cast %476 : vector<1x8x1xf32> to vector<8x1xf32>
    %478 = vector.broadcast %477 : vector<8x1xf32> to vector<8x256xf32>
    %479 = arith.mulf %475, %478 : vector<8x256xf32>
    %480 = arith.addf %468, %479 : vector<8x256xf32>
    %c254_i32 = arith.constant 254 : i32
    %481 = tpu.dynamic_rotate %120 by %c254_i32 dim 1 : vector<8x256xf32>, i32 -> vector<8x256xf32>
    %c14_i32_191 = arith.constant 14 : i32
    %482 = vector.broadcast %c14_i32_191 : i32 to vector<1x256xi32>
    %483 = arith.cmpi slt, %1, %482 : vector<1x256xi32>
    %cst_192 = arith.constant 0.000000e+00 : f32
    %484 = vector.shape_cast %483 : vector<1x256xi1> to vector<1x256xi1>
    %485 = vector.broadcast %484 : vector<1x256xi1> to vector<8x256xi1>
    %486 = vector.broadcast %cst_192 : f32 to vector<8x256xf32>
    %487 = arith.select %485, %481, %486 : vector<8x256xi1>, vector<8x256xf32>
    %c26 = arith.constant 26 : index
    %c0_193 = arith.constant 0 : index
    %c0_194 = arith.constant 0 : index
    %488 = vector.load %arg4[%c26, %c0_193, %c0_194] : memref<49x8x1xf32, #tpu.memory_space<vmem>>, vector<1x8x1xf32>
    %489 = vector.shape_cast %488 : vector<1x8x1xf32> to vector<8x1xf32>
    %490 = vector.broadcast %489 : vector<8x1xf32> to vector<8x256xf32>
    %491 = arith.mulf %487, %490 : vector<8x256xf32>
    %492 = arith.addf %480, %491 : vector<8x256xf32>
    %c253_i32 = arith.constant 253 : i32
    %493 = tpu.dynamic_rotate %120 by %c253_i32 dim 1 : vector<8x256xf32>, i32 -> vector<8x256xf32>
    %c13_i32_195 = arith.constant 13 : i32
    %494 = vector.broadcast %c13_i32_195 : i32 to vector<1x256xi32>
    %495 = arith.cmpi slt, %1, %494 : vector<1x256xi32>
    %cst_196 = arith.constant 0.000000e+00 : f32
    %496 = vector.shape_cast %495 : vector<1x256xi1> to vector<1x256xi1>
    %497 = vector.broadcast %496 : vector<1x256xi1> to vector<8x256xi1>
    %498 = vector.broadcast %cst_196 : f32 to vector<8x256xf32>
    %499 = arith.select %497, %493, %498 : vector<8x256xi1>, vector<8x256xf32>
    %c27 = arith.constant 27 : index
    %c0_197 = arith.constant 0 : index
    %c0_198 = arith.constant 0 : index
    %500 = vector.load %arg4[%c27, %c0_197, %c0_198] : memref<49x8x1xf32, #tpu.memory_space<vmem>>, vector<1x8x1xf32>
    %501 = vector.shape_cast %500 : vector<1x8x1xf32> to vector<8x1xf32>
    %502 = vector.broadcast %501 : vector<8x1xf32> to vector<8x256xf32>
    %503 = arith.mulf %499, %502 : vector<8x256xf32>
    %504 = arith.addf %492, %503 : vector<8x256xf32>
    %c243_i32 = arith.constant 243 : i32
    %505 = tpu.dynamic_rotate %120 by %c243_i32 dim 1 : vector<8x256xf32>, i32 -> vector<8x256xf32>
    %c15_i32_199 = arith.constant 15 : i32
    %506 = vector.broadcast %c15_i32_199 : i32 to vector<1x256xi32>
    %507 = arith.cmpi slt, %0, %506 : vector<1x256xi32>
    %c3_i32_200 = arith.constant 3 : i32
    %508 = vector.broadcast %c3_i32_200 : i32 to vector<1x256xi32>
    %509 = arith.cmpi sge, %1, %508 : vector<1x256xi32>
    %510 = arith.andi %507, %509 : vector<1x256xi1>
    %cst_201 = arith.constant 0.000000e+00 : f32
    %511 = vector.shape_cast %510 : vector<1x256xi1> to vector<1x256xi1>
    %512 = vector.broadcast %511 : vector<1x256xi1> to vector<8x256xi1>
    %513 = vector.broadcast %cst_201 : f32 to vector<8x256xf32>
    %514 = arith.select %512, %505, %513 : vector<8x256xi1>, vector<8x256xf32>
    %c28 = arith.constant 28 : index
    %c0_202 = arith.constant 0 : index
    %c0_203 = arith.constant 0 : index
    %515 = vector.load %arg4[%c28, %c0_202, %c0_203] : memref<49x8x1xf32, #tpu.memory_space<vmem>>, vector<1x8x1xf32>
    %516 = vector.shape_cast %515 : vector<1x8x1xf32> to vector<8x1xf32>
    %517 = vector.broadcast %516 : vector<8x1xf32> to vector<8x256xf32>
    %518 = arith.mulf %514, %517 : vector<8x256xf32>
    %519 = arith.addf %504, %518 : vector<8x256xf32>
    %c242_i32 = arith.constant 242 : i32
    %520 = tpu.dynamic_rotate %120 by %c242_i32 dim 1 : vector<8x256xf32>, i32 -> vector<8x256xf32>
    %c15_i32_204 = arith.constant 15 : i32
    %521 = vector.broadcast %c15_i32_204 : i32 to vector<1x256xi32>
    %522 = arith.cmpi slt, %0, %521 : vector<1x256xi32>
    %c2_i32_205 = arith.constant 2 : i32
    %523 = vector.broadcast %c2_i32_205 : i32 to vector<1x256xi32>
    %524 = arith.cmpi sge, %1, %523 : vector<1x256xi32>
    %525 = arith.andi %522, %524 : vector<1x256xi1>
    %cst_206 = arith.constant 0.000000e+00 : f32
    %526 = vector.shape_cast %525 : vector<1x256xi1> to vector<1x256xi1>
    %527 = vector.broadcast %526 : vector<1x256xi1> to vector<8x256xi1>
    %528 = vector.broadcast %cst_206 : f32 to vector<8x256xf32>
    %529 = arith.select %527, %520, %528 : vector<8x256xi1>, vector<8x256xf32>
    %c29 = arith.constant 29 : index
    %c0_207 = arith.constant 0 : index
    %c0_208 = arith.constant 0 : index
    %530 = vector.load %arg4[%c29, %c0_207, %c0_208] : memref<49x8x1xf32, #tpu.memory_space<vmem>>, vector<1x8x1xf32>
    %531 = vector.shape_cast %530 : vector<1x8x1xf32> to vector<8x1xf32>
    %532 = vector.broadcast %531 : vector<8x1xf32> to vector<8x256xf32>
    %533 = arith.mulf %529, %532 : vector<8x256xf32>
    %534 = arith.addf %519, %533 : vector<8x256xf32>
    %c241_i32_209 = arith.constant 241 : i32
    %535 = tpu.dynamic_rotate %120 by %c241_i32_209 dim 1 : vector<8x256xf32>, i32 -> vector<8x256xf32>
    %c15_i32_210 = arith.constant 15 : i32
    %536 = vector.broadcast %c15_i32_210 : i32 to vector<1x256xi32>
    %537 = arith.cmpi slt, %0, %536 : vector<1x256xi32>
    %c1_i32_211 = arith.constant 1 : i32
    %538 = vector.broadcast %c1_i32_211 : i32 to vector<1x256xi32>
    %539 = arith.cmpi sge, %1, %538 : vector<1x256xi32>
    %540 = arith.andi %537, %539 : vector<1x256xi1>
    %cst_212 = arith.constant 0.000000e+00 : f32
    %541 = vector.shape_cast %540 : vector<1x256xi1> to vector<1x256xi1>
    %542 = vector.broadcast %541 : vector<1x256xi1> to vector<8x256xi1>
    %543 = vector.broadcast %cst_212 : f32 to vector<8x256xf32>
    %544 = arith.select %542, %535, %543 : vector<8x256xi1>, vector<8x256xf32>
    %c30 = arith.constant 30 : index
    %c0_213 = arith.constant 0 : index
    %c0_214 = arith.constant 0 : index
    %545 = vector.load %arg4[%c30, %c0_213, %c0_214] : memref<49x8x1xf32, #tpu.memory_space<vmem>>, vector<1x8x1xf32>
    %546 = vector.shape_cast %545 : vector<1x8x1xf32> to vector<8x1xf32>
    %547 = vector.broadcast %546 : vector<8x1xf32> to vector<8x256xf32>
    %548 = arith.mulf %544, %547 : vector<8x256xf32>
    %549 = arith.addf %534, %548 : vector<8x256xf32>
    %c240_i32_215 = arith.constant 240 : i32
    %550 = tpu.dynamic_rotate %120 by %c240_i32_215 dim 1 : vector<8x256xf32>, i32 -> vector<8x256xf32>
    %c15_i32_216 = arith.constant 15 : i32
    %551 = vector.broadcast %c15_i32_216 : i32 to vector<1x256xi32>
    %552 = arith.cmpi slt, %0, %551 : vector<1x256xi32>
    %cst_217 = arith.constant 0.000000e+00 : f32
    %553 = vector.shape_cast %552 : vector<1x256xi1> to vector<1x256xi1>
    %554 = vector.broadcast %553 : vector<1x256xi1> to vector<8x256xi1>
    %555 = vector.broadcast %cst_217 : f32 to vector<8x256xf32>
    %556 = arith.select %554, %550, %555 : vector<8x256xi1>, vector<8x256xf32>
    %c31 = arith.constant 31 : index
    %c0_218 = arith.constant 0 : index
    %c0_219 = arith.constant 0 : index
    %557 = vector.load %arg4[%c31, %c0_218, %c0_219] : memref<49x8x1xf32, #tpu.memory_space<vmem>>, vector<1x8x1xf32>
    %558 = vector.shape_cast %557 : vector<1x8x1xf32> to vector<8x1xf32>
    %559 = vector.broadcast %558 : vector<8x1xf32> to vector<8x256xf32>
    %560 = arith.mulf %556, %559 : vector<8x256xf32>
    %561 = arith.addf %549, %560 : vector<8x256xf32>
    %c239_i32_220 = arith.constant 239 : i32
    %562 = tpu.dynamic_rotate %120 by %c239_i32_220 dim 1 : vector<8x256xf32>, i32 -> vector<8x256xf32>
    %c15_i32_221 = arith.constant 15 : i32
    %563 = vector.broadcast %c15_i32_221 : i32 to vector<1x256xi32>
    %564 = arith.cmpi slt, %0, %563 : vector<1x256xi32>
    %c15_i32_222 = arith.constant 15 : i32
    %565 = vector.broadcast %c15_i32_222 : i32 to vector<1x256xi32>
    %566 = arith.cmpi slt, %1, %565 : vector<1x256xi32>
    %567 = arith.andi %564, %566 : vector<1x256xi1>
    %cst_223 = arith.constant 0.000000e+00 : f32
    %568 = vector.shape_cast %567 : vector<1x256xi1> to vector<1x256xi1>
    %569 = vector.broadcast %568 : vector<1x256xi1> to vector<8x256xi1>
    %570 = vector.broadcast %cst_223 : f32 to vector<8x256xf32>
    %571 = arith.select %569, %562, %570 : vector<8x256xi1>, vector<8x256xf32>
    %c32 = arith.constant 32 : index
    %c0_224 = arith.constant 0 : index
    %c0_225 = arith.constant 0 : index
    %572 = vector.load %arg4[%c32, %c0_224, %c0_225] : memref<49x8x1xf32, #tpu.memory_space<vmem>>, vector<1x8x1xf32>
    %573 = vector.shape_cast %572 : vector<1x8x1xf32> to vector<8x1xf32>
    %574 = vector.broadcast %573 : vector<8x1xf32> to vector<8x256xf32>
    %575 = arith.mulf %571, %574 : vector<8x256xf32>
    %576 = arith.addf %561, %575 : vector<8x256xf32>
    %c238_i32 = arith.constant 238 : i32
    %577 = tpu.dynamic_rotate %120 by %c238_i32 dim 1 : vector<8x256xf32>, i32 -> vector<8x256xf32>
    %c15_i32_226 = arith.constant 15 : i32
    %578 = vector.broadcast %c15_i32_226 : i32 to vector<1x256xi32>
    %579 = arith.cmpi slt, %0, %578 : vector<1x256xi32>
    %c14_i32_227 = arith.constant 14 : i32
    %580 = vector.broadcast %c14_i32_227 : i32 to vector<1x256xi32>
    %581 = arith.cmpi slt, %1, %580 : vector<1x256xi32>
    %582 = arith.andi %579, %581 : vector<1x256xi1>
    %cst_228 = arith.constant 0.000000e+00 : f32
    %583 = vector.shape_cast %582 : vector<1x256xi1> to vector<1x256xi1>
    %584 = vector.broadcast %583 : vector<1x256xi1> to vector<8x256xi1>
    %585 = vector.broadcast %cst_228 : f32 to vector<8x256xf32>
    %586 = arith.select %584, %577, %585 : vector<8x256xi1>, vector<8x256xf32>
    %c33 = arith.constant 33 : index
    %c0_229 = arith.constant 0 : index
    %c0_230 = arith.constant 0 : index
    %587 = vector.load %arg4[%c33, %c0_229, %c0_230] : memref<49x8x1xf32, #tpu.memory_space<vmem>>, vector<1x8x1xf32>
    %588 = vector.shape_cast %587 : vector<1x8x1xf32> to vector<8x1xf32>
    %589 = vector.broadcast %588 : vector<8x1xf32> to vector<8x256xf32>
    %590 = arith.mulf %586, %589 : vector<8x256xf32>
    %591 = arith.addf %576, %590 : vector<8x256xf32>
    %c237_i32 = arith.constant 237 : i32
    %592 = tpu.dynamic_rotate %120 by %c237_i32 dim 1 : vector<8x256xf32>, i32 -> vector<8x256xf32>
    %c15_i32_231 = arith.constant 15 : i32
    %593 = vector.broadcast %c15_i32_231 : i32 to vector<1x256xi32>
    %594 = arith.cmpi slt, %0, %593 : vector<1x256xi32>
    %c13_i32_232 = arith.constant 13 : i32
    %595 = vector.broadcast %c13_i32_232 : i32 to vector<1x256xi32>
    %596 = arith.cmpi slt, %1, %595 : vector<1x256xi32>
    %597 = arith.andi %594, %596 : vector<1x256xi1>
    %cst_233 = arith.constant 0.000000e+00 : f32
    %598 = vector.shape_cast %597 : vector<1x256xi1> to vector<1x256xi1>
    %599 = vector.broadcast %598 : vector<1x256xi1> to vector<8x256xi1>
    %600 = vector.broadcast %cst_233 : f32 to vector<8x256xf32>
    %601 = arith.select %599, %592, %600 : vector<8x256xi1>, vector<8x256xf32>
    %c34 = arith.constant 34 : index
    %c0_234 = arith.constant 0 : index
    %c0_235 = arith.constant 0 : index
    %602 = vector.load %arg4[%c34, %c0_234, %c0_235] : memref<49x8x1xf32, #tpu.memory_space<vmem>>, vector<1x8x1xf32>
    %603 = vector.shape_cast %602 : vector<1x8x1xf32> to vector<8x1xf32>
    %604 = vector.broadcast %603 : vector<8x1xf32> to vector<8x256xf32>
    %605 = arith.mulf %601, %604 : vector<8x256xf32>
    %606 = arith.addf %591, %605 : vector<8x256xf32>
    %c227_i32 = arith.constant 227 : i32
    %607 = tpu.dynamic_rotate %120 by %c227_i32 dim 1 : vector<8x256xf32>, i32 -> vector<8x256xf32>
    %c14_i32_236 = arith.constant 14 : i32
    %608 = vector.broadcast %c14_i32_236 : i32 to vector<1x256xi32>
    %609 = arith.cmpi slt, %0, %608 : vector<1x256xi32>
    %c3_i32_237 = arith.constant 3 : i32
    %610 = vector.broadcast %c3_i32_237 : i32 to vector<1x256xi32>
    %611 = arith.cmpi sge, %1, %610 : vector<1x256xi32>
    %612 = arith.andi %609, %611 : vector<1x256xi1>
    %cst_238 = arith.constant 0.000000e+00 : f32
    %613 = vector.shape_cast %612 : vector<1x256xi1> to vector<1x256xi1>
    %614 = vector.broadcast %613 : vector<1x256xi1> to vector<8x256xi1>
    %615 = vector.broadcast %cst_238 : f32 to vector<8x256xf32>
    %616 = arith.select %614, %607, %615 : vector<8x256xi1>, vector<8x256xf32>
    %c35 = arith.constant 35 : index
    %c0_239 = arith.constant 0 : index
    %c0_240 = arith.constant 0 : index
    %617 = vector.load %arg4[%c35, %c0_239, %c0_240] : memref<49x8x1xf32, #tpu.memory_space<vmem>>, vector<1x8x1xf32>
    %618 = vector.shape_cast %617 : vector<1x8x1xf32> to vector<8x1xf32>
    %619 = vector.broadcast %618 : vector<8x1xf32> to vector<8x256xf32>
    %620 = arith.mulf %616, %619 : vector<8x256xf32>
    %621 = arith.addf %606, %620 : vector<8x256xf32>
    %c226_i32 = arith.constant 226 : i32
    %622 = tpu.dynamic_rotate %120 by %c226_i32 dim 1 : vector<8x256xf32>, i32 -> vector<8x256xf32>
    %c14_i32_241 = arith.constant 14 : i32
    %623 = vector.broadcast %c14_i32_241 : i32 to vector<1x256xi32>
    %624 = arith.cmpi slt, %0, %623 : vector<1x256xi32>
    %c2_i32_242 = arith.constant 2 : i32
    %625 = vector.broadcast %c2_i32_242 : i32 to vector<1x256xi32>
    %626 = arith.cmpi sge, %1, %625 : vector<1x256xi32>
    %627 = arith.andi %624, %626 : vector<1x256xi1>
    %cst_243 = arith.constant 0.000000e+00 : f32
    %628 = vector.shape_cast %627 : vector<1x256xi1> to vector<1x256xi1>
    %629 = vector.broadcast %628 : vector<1x256xi1> to vector<8x256xi1>
    %630 = vector.broadcast %cst_243 : f32 to vector<8x256xf32>
    %631 = arith.select %629, %622, %630 : vector<8x256xi1>, vector<8x256xf32>
    %c36 = arith.constant 36 : index
    %c0_244 = arith.constant 0 : index
    %c0_245 = arith.constant 0 : index
    %632 = vector.load %arg4[%c36, %c0_244, %c0_245] : memref<49x8x1xf32, #tpu.memory_space<vmem>>, vector<1x8x1xf32>
    %633 = vector.shape_cast %632 : vector<1x8x1xf32> to vector<8x1xf32>
    %634 = vector.broadcast %633 : vector<8x1xf32> to vector<8x256xf32>
    %635 = arith.mulf %631, %634 : vector<8x256xf32>
    %636 = arith.addf %621, %635 : vector<8x256xf32>
    %c225_i32 = arith.constant 225 : i32
    %637 = tpu.dynamic_rotate %120 by %c225_i32 dim 1 : vector<8x256xf32>, i32 -> vector<8x256xf32>
    %c14_i32_246 = arith.constant 14 : i32
    %638 = vector.broadcast %c14_i32_246 : i32 to vector<1x256xi32>
    %639 = arith.cmpi slt, %0, %638 : vector<1x256xi32>
    %c1_i32_247 = arith.constant 1 : i32
    %640 = vector.broadcast %c1_i32_247 : i32 to vector<1x256xi32>
    %641 = arith.cmpi sge, %1, %640 : vector<1x256xi32>
    %642 = arith.andi %639, %641 : vector<1x256xi1>
    %cst_248 = arith.constant 0.000000e+00 : f32
    %643 = vector.shape_cast %642 : vector<1x256xi1> to vector<1x256xi1>
    %644 = vector.broadcast %643 : vector<1x256xi1> to vector<8x256xi1>
    %645 = vector.broadcast %cst_248 : f32 to vector<8x256xf32>
    %646 = arith.select %644, %637, %645 : vector<8x256xi1>, vector<8x256xf32>
    %c37 = arith.constant 37 : index
    %c0_249 = arith.constant 0 : index
    %c0_250 = arith.constant 0 : index
    %647 = vector.load %arg4[%c37, %c0_249, %c0_250] : memref<49x8x1xf32, #tpu.memory_space<vmem>>, vector<1x8x1xf32>
    %648 = vector.shape_cast %647 : vector<1x8x1xf32> to vector<8x1xf32>
    %649 = vector.broadcast %648 : vector<8x1xf32> to vector<8x256xf32>
    %650 = arith.mulf %646, %649 : vector<8x256xf32>
    %651 = arith.addf %636, %650 : vector<8x256xf32>
    %c224_i32 = arith.constant 224 : i32
    %652 = tpu.dynamic_rotate %120 by %c224_i32 dim 1 : vector<8x256xf32>, i32 -> vector<8x256xf32>
    %c14_i32_251 = arith.constant 14 : i32
    %653 = vector.broadcast %c14_i32_251 : i32 to vector<1x256xi32>
    %654 = arith.cmpi slt, %0, %653 : vector<1x256xi32>
    %cst_252 = arith.constant 0.000000e+00 : f32
    %655 = vector.shape_cast %654 : vector<1x256xi1> to vector<1x256xi1>
    %656 = vector.broadcast %655 : vector<1x256xi1> to vector<8x256xi1>
    %657 = vector.broadcast %cst_252 : f32 to vector<8x256xf32>
    %658 = arith.select %656, %652, %657 : vector<8x256xi1>, vector<8x256xf32>
    %c38 = arith.constant 38 : index
    %c0_253 = arith.constant 0 : index
    %c0_254 = arith.constant 0 : index
    %659 = vector.load %arg4[%c38, %c0_253, %c0_254] : memref<49x8x1xf32, #tpu.memory_space<vmem>>, vector<1x8x1xf32>
    %660 = vector.shape_cast %659 : vector<1x8x1xf32> to vector<8x1xf32>
    %661 = vector.broadcast %660 : vector<8x1xf32> to vector<8x256xf32>
    %662 = arith.mulf %658, %661 : vector<8x256xf32>
    %663 = arith.addf %651, %662 : vector<8x256xf32>
    %c223_i32 = arith.constant 223 : i32
    %664 = tpu.dynamic_rotate %120 by %c223_i32 dim 1 : vector<8x256xf32>, i32 -> vector<8x256xf32>
    %c14_i32_255 = arith.constant 14 : i32
    %665 = vector.broadcast %c14_i32_255 : i32 to vector<1x256xi32>
    %666 = arith.cmpi slt, %0, %665 : vector<1x256xi32>
    %c15_i32_256 = arith.constant 15 : i32
    %667 = vector.broadcast %c15_i32_256 : i32 to vector<1x256xi32>
    %668 = arith.cmpi slt, %1, %667 : vector<1x256xi32>
    %669 = arith.andi %666, %668 : vector<1x256xi1>
    %cst_257 = arith.constant 0.000000e+00 : f32
    %670 = vector.shape_cast %669 : vector<1x256xi1> to vector<1x256xi1>
    %671 = vector.broadcast %670 : vector<1x256xi1> to vector<8x256xi1>
    %672 = vector.broadcast %cst_257 : f32 to vector<8x256xf32>
    %673 = arith.select %671, %664, %672 : vector<8x256xi1>, vector<8x256xf32>
    %c39 = arith.constant 39 : index
    %c0_258 = arith.constant 0 : index
    %c0_259 = arith.constant 0 : index
    %674 = vector.load %arg4[%c39, %c0_258, %c0_259] : memref<49x8x1xf32, #tpu.memory_space<vmem>>, vector<1x8x1xf32>
    %675 = vector.shape_cast %674 : vector<1x8x1xf32> to vector<8x1xf32>
    %676 = vector.broadcast %675 : vector<8x1xf32> to vector<8x256xf32>
    %677 = arith.mulf %673, %676 : vector<8x256xf32>
    %678 = arith.addf %663, %677 : vector<8x256xf32>
    %c222_i32 = arith.constant 222 : i32
    %679 = tpu.dynamic_rotate %120 by %c222_i32 dim 1 : vector<8x256xf32>, i32 -> vector<8x256xf32>
    %c14_i32_260 = arith.constant 14 : i32
    %680 = vector.broadcast %c14_i32_260 : i32 to vector<1x256xi32>
    %681 = arith.cmpi slt, %0, %680 : vector<1x256xi32>
    %c14_i32_261 = arith.constant 14 : i32
    %682 = vector.broadcast %c14_i32_261 : i32 to vector<1x256xi32>
    %683 = arith.cmpi slt, %1, %682 : vector<1x256xi32>
    %684 = arith.andi %681, %683 : vector<1x256xi1>
    %cst_262 = arith.constant 0.000000e+00 : f32
    %685 = vector.shape_cast %684 : vector<1x256xi1> to vector<1x256xi1>
    %686 = vector.broadcast %685 : vector<1x256xi1> to vector<8x256xi1>
    %687 = vector.broadcast %cst_262 : f32 to vector<8x256xf32>
    %688 = arith.select %686, %679, %687 : vector<8x256xi1>, vector<8x256xf32>
    %c40 = arith.constant 40 : index
    %c0_263 = arith.constant 0 : index
    %c0_264 = arith.constant 0 : index
    %689 = vector.load %arg4[%c40, %c0_263, %c0_264] : memref<49x8x1xf32, #tpu.memory_space<vmem>>, vector<1x8x1xf32>
    %690 = vector.shape_cast %689 : vector<1x8x1xf32> to vector<8x1xf32>
    %691 = vector.broadcast %690 : vector<8x1xf32> to vector<8x256xf32>
    %692 = arith.mulf %688, %691 : vector<8x256xf32>
    %693 = arith.addf %678, %692 : vector<8x256xf32>
    %c221_i32 = arith.constant 221 : i32
    %694 = tpu.dynamic_rotate %120 by %c221_i32 dim 1 : vector<8x256xf32>, i32 -> vector<8x256xf32>
    %c14_i32_265 = arith.constant 14 : i32
    %695 = vector.broadcast %c14_i32_265 : i32 to vector<1x256xi32>
    %696 = arith.cmpi slt, %0, %695 : vector<1x256xi32>
    %c13_i32_266 = arith.constant 13 : i32
    %697 = vector.broadcast %c13_i32_266 : i32 to vector<1x256xi32>
    %698 = arith.cmpi slt, %1, %697 : vector<1x256xi32>
    %699 = arith.andi %696, %698 : vector<1x256xi1>
    %cst_267 = arith.constant 0.000000e+00 : f32
    %700 = vector.shape_cast %699 : vector<1x256xi1> to vector<1x256xi1>
    %701 = vector.broadcast %700 : vector<1x256xi1> to vector<8x256xi1>
    %702 = vector.broadcast %cst_267 : f32 to vector<8x256xf32>
    %703 = arith.select %701, %694, %702 : vector<8x256xi1>, vector<8x256xf32>
    %c41 = arith.constant 41 : index
    %c0_268 = arith.constant 0 : index
    %c0_269 = arith.constant 0 : index
    %704 = vector.load %arg4[%c41, %c0_268, %c0_269] : memref<49x8x1xf32, #tpu.memory_space<vmem>>, vector<1x8x1xf32>
    %705 = vector.shape_cast %704 : vector<1x8x1xf32> to vector<8x1xf32>
    %706 = vector.broadcast %705 : vector<8x1xf32> to vector<8x256xf32>
    %707 = arith.mulf %703, %706 : vector<8x256xf32>
    %708 = arith.addf %693, %707 : vector<8x256xf32>
    %c211_i32 = arith.constant 211 : i32
    %709 = tpu.dynamic_rotate %120 by %c211_i32 dim 1 : vector<8x256xf32>, i32 -> vector<8x256xf32>
    %c13_i32_270 = arith.constant 13 : i32
    %710 = vector.broadcast %c13_i32_270 : i32 to vector<1x256xi32>
    %711 = arith.cmpi slt, %0, %710 : vector<1x256xi32>
    %c3_i32_271 = arith.constant 3 : i32
    %712 = vector.broadcast %c3_i32_271 : i32 to vector<1x256xi32>
    %713 = arith.cmpi sge, %1, %712 : vector<1x256xi32>
    %714 = arith.andi %711, %713 : vector<1x256xi1>
    %cst_272 = arith.constant 0.000000e+00 : f32
    %715 = vector.shape_cast %714 : vector<1x256xi1> to vector<1x256xi1>
    %716 = vector.broadcast %715 : vector<1x256xi1> to vector<8x256xi1>
    %717 = vector.broadcast %cst_272 : f32 to vector<8x256xf32>
    %718 = arith.select %716, %709, %717 : vector<8x256xi1>, vector<8x256xf32>
    %c42 = arith.constant 42 : index
    %c0_273 = arith.constant 0 : index
    %c0_274 = arith.constant 0 : index
    %719 = vector.load %arg4[%c42, %c0_273, %c0_274] : memref<49x8x1xf32, #tpu.memory_space<vmem>>, vector<1x8x1xf32>
    %720 = vector.shape_cast %719 : vector<1x8x1xf32> to vector<8x1xf32>
    %721 = vector.broadcast %720 : vector<8x1xf32> to vector<8x256xf32>
    %722 = arith.mulf %718, %721 : vector<8x256xf32>
    %723 = arith.addf %708, %722 : vector<8x256xf32>
    %c210_i32 = arith.constant 210 : i32
    %724 = tpu.dynamic_rotate %120 by %c210_i32 dim 1 : vector<8x256xf32>, i32 -> vector<8x256xf32>
    %c13_i32_275 = arith.constant 13 : i32
    %725 = vector.broadcast %c13_i32_275 : i32 to vector<1x256xi32>
    %726 = arith.cmpi slt, %0, %725 : vector<1x256xi32>
    %c2_i32_276 = arith.constant 2 : i32
    %727 = vector.broadcast %c2_i32_276 : i32 to vector<1x256xi32>
    %728 = arith.cmpi sge, %1, %727 : vector<1x256xi32>
    %729 = arith.andi %726, %728 : vector<1x256xi1>
    %cst_277 = arith.constant 0.000000e+00 : f32
    %730 = vector.shape_cast %729 : vector<1x256xi1> to vector<1x256xi1>
    %731 = vector.broadcast %730 : vector<1x256xi1> to vector<8x256xi1>
    %732 = vector.broadcast %cst_277 : f32 to vector<8x256xf32>
    %733 = arith.select %731, %724, %732 : vector<8x256xi1>, vector<8x256xf32>
    %c43 = arith.constant 43 : index
    %c0_278 = arith.constant 0 : index
    %c0_279 = arith.constant 0 : index
    %734 = vector.load %arg4[%c43, %c0_278, %c0_279] : memref<49x8x1xf32, #tpu.memory_space<vmem>>, vector<1x8x1xf32>
    %735 = vector.shape_cast %734 : vector<1x8x1xf32> to vector<8x1xf32>
    %736 = vector.broadcast %735 : vector<8x1xf32> to vector<8x256xf32>
    %737 = arith.mulf %733, %736 : vector<8x256xf32>
    %738 = arith.addf %723, %737 : vector<8x256xf32>
    %c209_i32 = arith.constant 209 : i32
    %739 = tpu.dynamic_rotate %120 by %c209_i32 dim 1 : vector<8x256xf32>, i32 -> vector<8x256xf32>
    %c13_i32_280 = arith.constant 13 : i32
    %740 = vector.broadcast %c13_i32_280 : i32 to vector<1x256xi32>
    %741 = arith.cmpi slt, %0, %740 : vector<1x256xi32>
    %c1_i32_281 = arith.constant 1 : i32
    %742 = vector.broadcast %c1_i32_281 : i32 to vector<1x256xi32>
    %743 = arith.cmpi sge, %1, %742 : vector<1x256xi32>
    %744 = arith.andi %741, %743 : vector<1x256xi1>
    %cst_282 = arith.constant 0.000000e+00 : f32
    %745 = vector.shape_cast %744 : vector<1x256xi1> to vector<1x256xi1>
    %746 = vector.broadcast %745 : vector<1x256xi1> to vector<8x256xi1>
    %747 = vector.broadcast %cst_282 : f32 to vector<8x256xf32>
    %748 = arith.select %746, %739, %747 : vector<8x256xi1>, vector<8x256xf32>
    %c44 = arith.constant 44 : index
    %c0_283 = arith.constant 0 : index
    %c0_284 = arith.constant 0 : index
    %749 = vector.load %arg4[%c44, %c0_283, %c0_284] : memref<49x8x1xf32, #tpu.memory_space<vmem>>, vector<1x8x1xf32>
    %750 = vector.shape_cast %749 : vector<1x8x1xf32> to vector<8x1xf32>
    %751 = vector.broadcast %750 : vector<8x1xf32> to vector<8x256xf32>
    %752 = arith.mulf %748, %751 : vector<8x256xf32>
    %753 = arith.addf %738, %752 : vector<8x256xf32>
    %c208_i32 = arith.constant 208 : i32
    %754 = tpu.dynamic_rotate %120 by %c208_i32 dim 1 : vector<8x256xf32>, i32 -> vector<8x256xf32>
    %c13_i32_285 = arith.constant 13 : i32
    %755 = vector.broadcast %c13_i32_285 : i32 to vector<1x256xi32>
    %756 = arith.cmpi slt, %0, %755 : vector<1x256xi32>
    %cst_286 = arith.constant 0.000000e+00 : f32
    %757 = vector.shape_cast %756 : vector<1x256xi1> to vector<1x256xi1>
    %758 = vector.broadcast %757 : vector<1x256xi1> to vector<8x256xi1>
    %759 = vector.broadcast %cst_286 : f32 to vector<8x256xf32>
    %760 = arith.select %758, %754, %759 : vector<8x256xi1>, vector<8x256xf32>
    %c45 = arith.constant 45 : index
    %c0_287 = arith.constant 0 : index
    %c0_288 = arith.constant 0 : index
    %761 = vector.load %arg4[%c45, %c0_287, %c0_288] : memref<49x8x1xf32, #tpu.memory_space<vmem>>, vector<1x8x1xf32>
    %762 = vector.shape_cast %761 : vector<1x8x1xf32> to vector<8x1xf32>
    %763 = vector.broadcast %762 : vector<8x1xf32> to vector<8x256xf32>
    %764 = arith.mulf %760, %763 : vector<8x256xf32>
    %765 = arith.addf %753, %764 : vector<8x256xf32>
    %c207_i32 = arith.constant 207 : i32
    %766 = tpu.dynamic_rotate %120 by %c207_i32 dim 1 : vector<8x256xf32>, i32 -> vector<8x256xf32>
    %c13_i32_289 = arith.constant 13 : i32
    %767 = vector.broadcast %c13_i32_289 : i32 to vector<1x256xi32>
    %768 = arith.cmpi slt, %0, %767 : vector<1x256xi32>
    %c15_i32_290 = arith.constant 15 : i32
    %769 = vector.broadcast %c15_i32_290 : i32 to vector<1x256xi32>
    %770 = arith.cmpi slt, %1, %769 : vector<1x256xi32>
    %771 = arith.andi %768, %770 : vector<1x256xi1>
    %cst_291 = arith.constant 0.000000e+00 : f32
    %772 = vector.shape_cast %771 : vector<1x256xi1> to vector<1x256xi1>
    %773 = vector.broadcast %772 : vector<1x256xi1> to vector<8x256xi1>
    %774 = vector.broadcast %cst_291 : f32 to vector<8x256xf32>
    %775 = arith.select %773, %766, %774 : vector<8x256xi1>, vector<8x256xf32>
    %c46 = arith.constant 46 : index
    %c0_292 = arith.constant 0 : index
    %c0_293 = arith.constant 0 : index
    %776 = vector.load %arg4[%c46, %c0_292, %c0_293] : memref<49x8x1xf32, #tpu.memory_space<vmem>>, vector<1x8x1xf32>
    %777 = vector.shape_cast %776 : vector<1x8x1xf32> to vector<8x1xf32>
    %778 = vector.broadcast %777 : vector<8x1xf32> to vector<8x256xf32>
    %779 = arith.mulf %775, %778 : vector<8x256xf32>
    %780 = arith.addf %765, %779 : vector<8x256xf32>
    %c206_i32 = arith.constant 206 : i32
    %781 = tpu.dynamic_rotate %120 by %c206_i32 dim 1 : vector<8x256xf32>, i32 -> vector<8x256xf32>
    %c13_i32_294 = arith.constant 13 : i32
    %782 = vector.broadcast %c13_i32_294 : i32 to vector<1x256xi32>
    %783 = arith.cmpi slt, %0, %782 : vector<1x256xi32>
    %c14_i32_295 = arith.constant 14 : i32
    %784 = vector.broadcast %c14_i32_295 : i32 to vector<1x256xi32>
    %785 = arith.cmpi slt, %1, %784 : vector<1x256xi32>
    %786 = arith.andi %783, %785 : vector<1x256xi1>
    %cst_296 = arith.constant 0.000000e+00 : f32
    %787 = vector.shape_cast %786 : vector<1x256xi1> to vector<1x256xi1>
    %788 = vector.broadcast %787 : vector<1x256xi1> to vector<8x256xi1>
    %789 = vector.broadcast %cst_296 : f32 to vector<8x256xf32>
    %790 = arith.select %788, %781, %789 : vector<8x256xi1>, vector<8x256xf32>
    %c47 = arith.constant 47 : index
    %c0_297 = arith.constant 0 : index
    %c0_298 = arith.constant 0 : index
    %791 = vector.load %arg4[%c47, %c0_297, %c0_298] : memref<49x8x1xf32, #tpu.memory_space<vmem>>, vector<1x8x1xf32>
    %792 = vector.shape_cast %791 : vector<1x8x1xf32> to vector<8x1xf32>
    %793 = vector.broadcast %792 : vector<8x1xf32> to vector<8x256xf32>
    %794 = arith.mulf %790, %793 : vector<8x256xf32>
    %795 = arith.addf %780, %794 : vector<8x256xf32>
    %c205_i32 = arith.constant 205 : i32
    %796 = tpu.dynamic_rotate %120 by %c205_i32 dim 1 : vector<8x256xf32>, i32 -> vector<8x256xf32>
    %c13_i32_299 = arith.constant 13 : i32
    %797 = vector.broadcast %c13_i32_299 : i32 to vector<1x256xi32>
    %798 = arith.cmpi slt, %0, %797 : vector<1x256xi32>
    %c13_i32_300 = arith.constant 13 : i32
    %799 = vector.broadcast %c13_i32_300 : i32 to vector<1x256xi32>
    %800 = arith.cmpi slt, %1, %799 : vector<1x256xi32>
    %801 = arith.andi %798, %800 : vector<1x256xi1>
    %cst_301 = arith.constant 0.000000e+00 : f32
    %802 = vector.shape_cast %801 : vector<1x256xi1> to vector<1x256xi1>
    %803 = vector.broadcast %802 : vector<1x256xi1> to vector<8x256xi1>
    %804 = vector.broadcast %cst_301 : f32 to vector<8x256xf32>
    %805 = arith.select %803, %796, %804 : vector<8x256xi1>, vector<8x256xf32>
    %c48 = arith.constant 48 : index
    %c0_302 = arith.constant 0 : index
    %c0_303 = arith.constant 0 : index
    %806 = vector.load %arg4[%c48, %c0_302, %c0_303] : memref<49x8x1xf32, #tpu.memory_space<vmem>>, vector<1x8x1xf32>
    %807 = vector.shape_cast %806 : vector<1x8x1xf32> to vector<8x1xf32>
    %808 = vector.broadcast %807 : vector<8x1xf32> to vector<8x256xf32>
    %809 = arith.mulf %805, %808 : vector<8x256xf32>
    %810 = arith.addf %795, %809 : vector<8x256xf32>
    %c0_304 = arith.constant 0 : index
    %c0_305 = arith.constant 0 : index
    %811 = vector.load %arg5[%c0_304, %c0_305] : memref<8x1xf32, #tpu.memory_space<vmem>>, vector<8x1xf32>
    %812 = vector.broadcast %811 : vector<8x1xf32> to vector<8x256xf32>
    %813 = arith.addf %810, %812 : vector<8x256xf32>
    %cst_306 = arith.constant 5.000000e-01 : f32
    %814 = vector.broadcast %cst_306 : f32 to vector<8x256xf32>
    %815 = arith.mulf %814, %813 : vector<8x256xf32>
    %816 = math.tanh %815 : vector<8x256xf32>
    %cst_307 = arith.constant 1.000000e+00 : f32
    %817 = vector.broadcast %cst_307 : f32 to vector<8x256xf32>
    %818 = arith.addf %816, %817 : vector<8x256xf32>
    %cst_308 = arith.constant 5.000000e-01 : f32
    %819 = vector.broadcast %cst_308 : f32 to vector<8x256xf32>
    %820 = arith.mulf %819, %818 : vector<8x256xf32>
    %821 = arith.mulf %120, %820 : vector<8x256xf32>
    %c0_309 = arith.constant 0 : index
    %c0_310 = arith.constant 0 : index
    %c0_311 = arith.constant 0 : index
    %822 = vector.load %arg8[%c0_309, %c0_310, %c0_311] : memref<1x8x256xf32, #tpu.memory_space<vmem>>, vector<1x8x256xf32>
    %823 = vector.shape_cast %822 : vector<1x8x256xf32> to vector<8x256xf32>
    %824 = vector.shape_cast %821 : vector<8x256xf32> to vector<1x8x256xf32>
    tpu.vector_store %arg8[%c0_309, %c0_310, %c0_311], %824 {strides = array<i32>} : memref<1x8x256xf32, #tpu.memory_space<vmem>>, vector<1x8x256xf32>,
    return
  }
  func.func @transform_0(%arg0: i32) -> (i32, i32, i32) {
    %c0_i32 = arith.constant 0 : i32
    %c0_i32_0 = arith.constant 0 : i32
    %c0_i32_1 = arith.constant 0 : i32
    return %arg0, %c0_i32, %c0_i32_0 : i32, i32, i32
  }
  func.func @transform_1(%arg0: i32) -> (i32, i32, i32) {
    %c0_i32 = arith.constant 0 : i32
    %c0_i32_0 = arith.constant 0 : i32
    %c0_i32_1 = arith.constant 0 : i32
    %c0_i32_2 = arith.constant 0 : i32
    return %c0_i32, %c0_i32_0, %c0_i32_1 : i32, i32, i32
  }
  func.func @transform_2(%arg0: i32) -> (i32, i32) {
    %c0_i32 = arith.constant 0 : i32
    %c0_i32_0 = arith.constant 0 : i32
    %c0_i32_1 = arith.constant 0 : i32
    return %c0_i32, %c0_i32_0 : i32, i32
  }
  func.func @transform_3(%arg0: i32) -> (i32, i32, i32) {
    %c0_i32 = arith.constant 0 : i32
    %c0_i32_0 = arith.constant 0 : i32
    %c0_i32_1 = arith.constant 0 : i32
    %c0_i32_2 = arith.constant 0 : i32
    return %c0_i32, %c0_i32_0, %c0_i32_1 : i32, i32, i32
  }
  func.func @transform_4(%arg0: i32) -> (i32, i32) {
    %c0_i32 = arith.constant 0 : i32
    %c0_i32_0 = arith.constant 0 : i32
    %c0_i32_1 = arith.constant 0 : i32
    return %c0_i32, %c0_i32_0 : i32, i32
  }
  func.func @transform_5(%arg0: i32) -> (i32, i32) {
    %c0_i32 = arith.constant 0 : i32
    %c0_i32_0 = arith.constant 0 : i32
    %c0_i32_1 = arith.constant 0 : i32
    return %c0_i32, %c0_i32_0 : i32, i32
  }
  func.func @transform_6(%arg0: i32) -> (i32, i32) {
    %c0_i32 = arith.constant 0 : i32
    %c0_i32_0 = arith.constant 0 : i32
    %c0_i32_1 = arith.constant 0 : i32
    return %c0_i32, %c0_i32_0 : i32, i32
  }
  func.func @transform_7(%arg0: i32) -> (i32, i32, i32) {
    %c0_i32 = arith.constant 0 : i32
    %c0_i32_0 = arith.constant 0 : i32
    %c0_i32_1 = arith.constant 0 : i32
    return %arg0, %c0_i32, %c0_i32_0 : i32, i32, i32
  }
}

</mosaic_0001>

<llo_original>
// kernel: genblock_forward.1
$region0: #{genblock_forward.1}
  #allocation0 [shape = 'u32[]', space=smem, size = 0x4, offset = 0x4, fixed_abs, tag = 'smem constant byte address 0x4 - core index']
  #allocation1 [shape = 'u32[144,128]{1,0:T(1,128)}', space=vmem, size = 0x12000, scoped, tag = 'internal scratch']
  %s0 = inlined_call_operand.vmem [shape: f32[2,4,256], index: 0, kind: input, shape index: {}]
  %s1 = inlined_call_operand.vmem [shape: bf16[9,8,4], index: 1, kind: input, shape index: {}]
  %s2 = inlined_call_operand.vmem [shape: f32[8,1], index: 2, kind: input, shape index: {}]
  %s3 = inlined_call_operand.vmem [shape: f32[49,8,1], index: 3, kind: input, shape index: {}]
  %s4 = inlined_call_operand.vmem [shape: f32[8,1], index: 4, kind: input, shape index: {}]
  %s5 = inlined_call_operand.vmem [shape: s32[1,256], index: 5, kind: input, shape index: {}]
  %s6 = inlined_call_operand.vmem [shape: s32[1,256], index: 6, kind: input, shape index: {}]
  %s7 = inlined_call_operand.vmem [shape: f32[2,8,256], index: 7, kind: output, shape index: {}]
  %s8 = sld [smem:[#allocation0]]
  $region61: #{genblock_forward.1} parent=0
    _
  %s10 = ssub.s32 1, %s8
  %s11 = scalar_select 0, %s10, %s8
  loop: start=0, step=1, limit=4
  $region2: #{genblock_forward.1} parent=0 // loop_pre_header
    _
  $region3: #{genblock_forward.1} parent=0 // loop_header
    %s13 = sphi 0, %s17
    %p14 = scmp.ge.s32.totalorder %s13, 4
    %s23 = sphi 0, %s25
    %s26 = sphi 0, %s23
    %s27 = sphi 0, %s26
    %s43 = sphi 0, %s27
    %s47 = sphi 0, %s47
    %s49 = sphi 0, %s47
    %s50 = sphi 0, %s49
    %s64 = sphi 0, %s50
    %s68 = sphi 0, %s68
    %s70 = sphi 0, %s68
    %s71 = sphi 0, %s70
    %s85 = sphi 0, %s71
    %s89 = sphi 0, %s89
    %s91 = sphi 0, %s89
    %s92 = sphi 0, %s91
    %s106 = sphi 0, %s92
    %s110 = sphi 0, %s110
    %s112 = sphi 0, %s110
    %s113 = sphi 0, %s112
    %s127 = sphi 0, %s113
    %s131 = sphi 0, %s131
    %s133 = sphi 0, %s131
    %s134 = sphi 0, %s133
    %s148 = sphi 0, %s134
    %s152 = sphi 0, %s152
    %s154 = sphi 0, %s152
    %s155 = sphi 0, %s154
    %s169 = sphi 0, %s155
    %s175 = sphi 0, %s177
    %s178 = sphi 0, %s175
    %s179 = sphi 0, %s178
    %s195 = sphi 0, %s179
  $region4: #{genblock_forward.1} parent=0 // loop_header_branch
    %16 = sbr.rel (%p14) target = $region8
  $region5: #{genblock_forward.1} parent=0 // loop_body
    %s18 = ssub.s32 %s13, 1
    %s19 = ssub.s32 %s13, 2
    %s20 = sadd.s32 %s13, 1
    %s21 = ssub.s32 %s13, %s20
    %p22 = scmp.eq.s32.totalorder %s21, 0
    %s24 = sadd.s32 %s23, 1
    %s25 = scalar_select %p22, %s23, %s24
    %p28 = pneg %p22
    %p29 = scmp.eq.s32.totalorder %s13, 1
    %p30 = por %p28, %p29
    %p31 = scmp.ne.s32.totalorder %s23, %s26
    %p32 = scmp.eq.s32.totalorder %s13, 0
    %p33 = por %p31, %p32
    %p34 = scmp.ne.s32.totalorder %s23, %s26
    %p35 = scmp.eq.s32.totalorder %s18, 1
    %p36 = por %p34, %p35
    %p37 = scmp.ne.s32.totalorder %s26, %s27
    %p38 = scmp.eq.s32.totalorder %s18, 0
    %p39 = por %p37, %p38
    %p40 = scmp.ne.s32.totalorder %s26, %s27
    %p41 = scmp.eq.s32.totalorder %s19, 1
    %p42 = por %p40, %p41
    %p44 = scmp.ne.s32.totalorder %s27, %s43
    %p45 = scmp.eq.s32.totalorder %s19, 0
    %p46 = por %p44, %p45
    %s48 = sadd.s32 %s47, 1
    %p51 = scmp.eq.s32.totalorder %s13, 1
    %p52 = scmp.ne.s32.totalorder %s47, %s49
    %p53 = scmp.eq.s32.totalorder %s13, 0
    %p54 = por %p52, %p53
    %p55 = scmp.ne.s32.totalorder %s47, %s49
    %p56 = scmp.eq.s32.totalorder %s18, 1
    %p57 = por %p55, %p56
    %p58 = scmp.ne.s32.totalorder %s49, %s50
    %p59 = scmp.eq.s32.totalorder %s18, 0
    %p60 = por %p58, %p59
    %p61 = scmp.ne.s32.totalorder %s49, %s50
    %p62 = scmp.eq.s32.totalorder %s19, 1
    %p63 = por %p61, %p62
    %p65 = scmp.ne.s32.totalorder %s50, %s64
    %p66 = scmp.eq.s32.totalorder %s19, 0
    %p67 = por %p65, %p66
    %s69 = sadd.s32 %s68, 1
    %p72 = scmp.eq.s32.totalorder %s13, 1
    %p73 = scmp.ne.s32.totalorder %s68, %s70
    %p74 = scmp.eq.s32.totalorder %s13, 0
    %p75 = por %p73, %p74
    %p76 = scmp.ne.s32.totalorder %s68, %s70
    %p77 = scmp.eq.s32.totalorder %s18, 1
    %p78 = por %p76, %p77
    %p79 = scmp.ne.s32.totalorder %s70, %s71
    %p80 = scmp.eq.s32.totalorder %s18, 0
    %p81 = por %p79, %p80
    %p82 = scmp.ne.s32.totalorder %s70, %s71
    %p83 = scmp.eq.s32.totalorder %s19, 1
    %p84 = por %p82, %p83
    %p86 = scmp.ne.s32.totalorder %s71, %s85
    %p87 = scmp.eq.s32.totalorder %s19, 0
    %p88 = por %p86, %p87
    %s90 = sadd.s32 %s89, 1
    %p93 = scmp.eq.s32.totalorder %s13, 1
    %p94 = scmp.ne.s32.totalorder %s89, %s91
    %p95 = scmp.eq.s32.totalorder %s13, 0
    %p96 = por %p94, %p95
    %p97 = scmp.ne.s32.totalorder %s89, %s91
    %p98 = scmp.eq.s32.totalorder %s18, 1
    %p99 = por %p97, %p98
    %p100 = scmp.ne.s32.totalorder %s91, %s92
    %p101 = scmp.eq.s32.totalorder %s18, 0
    %p102 = por %p100, %p101
    %p103 = scmp.ne.s32.totalorder %s91, %s92
    %p104 = scmp.eq.s32.totalorder %s19, 1
    %p105 = por %p103, %p104
    %p107 = scmp.ne.s32.totalorder %s92, %s106
    %p108 = scmp.eq.s32.totalorder %s19, 0
    %p109 = por %p107, %p108
    %s111 = sadd.s32 %s110, 1
    %p114 = scmp.eq.s32.totalorder %s13, 1
    %p115 = scmp.ne.s32.totalorder %s110, %s112
    %p116 = scmp.eq.s32.totalorder %s13, 0
    %p117 = por %p115, %p116
    %p118 = scmp.ne.s32.totalorder %s110, %s112
    %p119 = scmp.eq.s32.totalorder %s18, 1
    %p120 = por %p118, %p119
    %p121 = scmp.ne.s32.totalorder %s112, %s113
    %p122 = scmp.eq.s32.totalorder %s18, 0
    %p123 = por %p121, %p122
    %p124 = scmp.ne.s32.totalorder %s112, %s113
    %p125 = scmp.eq.s32.totalorder %s19, 1
    %p126 = por %p124, %p125
    %p128 = scmp.ne.s32.totalorder %s113, %s127
    %p129 = scmp.eq.s32.totalorder %s19, 0
    %p130 = por %p128, %p129
    %s132 = sadd.s32 %s131, 1
    %p135 = scmp.eq.s32.totalorder %s13, 1
    %p136 = scmp.ne.s32.totalorder %s131, %s133
    %p137 = scmp.eq.s32.totalorder %s13, 0
    %p138 = por %p136, %p137
    %p139 = scmp.ne.s32.totalorder %s131, %s133
    %p140 = scmp.eq.s32.totalorder %s18, 1
    %p141 = por %p139, %p140
    %p142 = scmp.ne.s32.totalorder %s133, %s134
    %p143 = scmp.eq.s32.totalorder %s18, 0
    %p144 = por %p142, %p143
    %p145 = scmp.ne.s32.totalorder %s133, %s134
    %p146 = scmp.eq.s32.totalorder %s19, 1
    %p147 = por %p145, %p146
    %p149 = scmp.ne.s32.totalorder %s134, %s148
    %p150 = scmp.eq.s32.totalorder %s19, 0
    %p151 = por %p149, %p150
    %s153 = sadd.s32 %s152, 1
    %p156 = scmp.eq.s32.totalorder %s13, 1
    %p157 = scmp.ne.s32.totalorder %s152, %s154
    %p158 = scmp.eq.s32.totalorder %s13, 0
    %p159 = por %p157, %p158
    %p160 = scmp.ne.s32.totalorder %s152, %s154
    %p161 = scmp.eq.s32.totalorder %s18, 1
    %p162 = por %p160, %p161
    %p163 = scmp.ne.s32.totalorder %s154, %s155
    %p164 = scmp.eq.s32.totalorder %s18, 0
    %p165 = por %p163, %p164
    %p166 = scmp.ne.s32.totalorder %s154, %s155
    %p167 = scmp.eq.s32.totalorder %s19, 1
    %p168 = por %p166, %p167
    %p170 = scmp.ne.s32.totalorder %s155, %s169
    %p171 = scmp.eq.s32.totalorder %s19, 0
    %p172 = por %p170, %p171
    %s173 = ssub.s32 %s13, %s20
    %p174 = scmp.eq.s32.totalorder %s173, 0
    %s176 = sadd.s32 %s175, 1
    %s177 = scalar_select %p174, %s175, %s176
    %p180 = pneg %p174
    %p181 = scmp.eq.s32.totalorder %s13, 1
    %p182 = por %p180, %p181
    %p183 = scmp.ne.s32.totalorder %s175, %s178
    %p184 = scmp.eq.s32.totalorder %s13, 0
    %p185 = por %p183, %p184
    %p186 = scmp.ne.s32.totalorder %s175, %s178
    %p187 = scmp.eq.s32.totalorder %s18, 1
    %p188 = por %p186, %p187
    %p189 = scmp.ne.s32.totalorder %s178, %s179
    %p190 = scmp.eq.s32.totalorder %s18, 0
    %p191 = por %p189, %p190
    %p192 = scmp.ne.s32.totalorder %s178, %s179
    %p193 = scmp.eq.s32.totalorder %s19, 1
    %p194 = por %p192, %p193
    %p196 = scmp.ne.s32.totalorder %s179, %s195
    %p197 = scmp.eq.s32.totalorder %s19, 0
    %p198 = por %p196, %p197
    %p199 = scmp.le.s32.totalorder 1, %s13
    %p200 = scmp.lt.s32.totalorder %s13, 3
    %p201 = pnand %p199, %p200
    %p202 = pneg %p201
    // Predicated region
    $region9: #{genblock_forward.1} parent=5 // pred_check
      _
    $region10: #{genblock_forward.1} parent=5 // pred_check_branch
      %204 = sbr.rel (%p201) target = $region12
    $region11: #{genblock_forward.1} parent=5 // pred_region
      %s205 = ssub.s32 %s13, 1
      // Predicated region
      $region13: #{genblock_forward.1} parent=11 // pred_check
        %p206 = pneg %p60
      $region14: #{genblock_forward.1} parent=11 // pred_check_branch
        %208 = sbr.rel (%p206) target = $region16
      $region15: #{genblock_forward.1} parent=11 // pred_region
        _
      $region16: #{genblock_forward.1} parent=11 // pred_fallthru
        _
      // Predicated region
      $region17: #{genblock_forward.1} parent=11 // pred_check
        %p209 = pneg %p81
      $region18: #{genblock_forward.1} parent=11 // pred_check_branch
        %211 = sbr.rel (%p209) target = $region20
      $region19: #{genblock_forward.1} parent=11 // pred_region
        _
      $region20: #{genblock_forward.1} parent=11 // pred_fallthru
        _
      // Predicated region
      $region21: #{genblock_forward.1} parent=11 // pred_check
        %p212 = pneg %p102
      $region22: #{genblock_forward.1} parent=11 // pred_check_branch
        %214 = sbr.rel (%p212) target = $region24
      $region23: #{genblock_forward.1} parent=11 // pred_region
        _
      $region24: #{genblock_forward.1} parent=11 // pred_fallthru
        _
      // Predicated region
      $region25: #{genblock_forward.1} parent=11 // pred_check
        %p215 = pneg %p123
      $region26: #{genblock_forward.1} parent=11 // pred_check_branch
        %217 = sbr.rel (%p215) target = $region28
      $region27: #{genblock_forward.1} parent=11 // pred_region
        _
      $region28: #{genblock_forward.1} parent=11 // pred_fallthru
        _
      // Predicated region
      $region29: #{genblock_forward.1} parent=11 // pred_check
        %p218 = pneg %p144
      $region30: #{genblock_forward.1} parent=11 // pred_check_branch
        %220 = sbr.rel (%p218) target = $region32
      $region31: #{genblock_forward.1} parent=11 // pred_region
        _
      $region32: #{genblock_forward.1} parent=11 // pred_fallthru
        _
      // Predicated region
      $region33: #{genblock_forward.1} parent=11 // pred_check
        %p221 = pneg %p165
      $region34: #{genblock_forward.1} parent=11 // pred_check_branch
        %223 = sbr.rel (%p221) target = $region36
      $region35: #{genblock_forward.1} parent=11 // pred_region
        _
      $region36: #{genblock_forward.1} parent=11 // pred_fallthru
        _
    $region12: #{genblock_forward.1} parent=5 // pred_fallthru
      _
    %p224 = scmp.lt.s32.totalorder %s13, 2
    // Predicated region
    $region37: #{genblock_forward.1} parent=5 // pred_check
      %p225 = pneg %p224
    $region38: #{genblock_forward.1} parent=5 // pred_check_branch
      %227 = sbr.rel (%p225) target = $region40
    $region39: #{genblock_forward.1} parent=5 // pred_region
      // Predicated region
      $region41: #{genblock_forward.1} parent=39 // pred_check
        %p228 = pneg %p33
      $region42: #{genblock_forward.1} parent=39 // pred_check_branch
        %230 = sbr.rel (%p228) target = $region44
      $region43: #{genblock_forward.1} parent=39 // pred_region
        %p231 = scmp.lt.s32.totalorder %s13, 1
        %s232 = scalar_select %p231, %s13, 1
        %s233 = smul.addr %s232, 2
        %s234 = smul.addr %s233, 4
        %s235 = scalar_lea.vmem %s0, %s234
      $region44: #{genblock_forward.1} parent=39 // pred_fallthru
        _
    $region40: #{genblock_forward.1} parent=5 // pred_fallthru
      _
    %p236 = scmp.le.s32.totalorder 1, %s13
    %p237 = scmp.lt.s32.totalorder %s13, 3
    %p238 = pnand %p236, %p237
    %p239 = pneg %p238
    // Predicated region
    $region45: #{genblock_forward.1} parent=5 // pred_check
      _
    $region46: #{genblock_forward.1} parent=5 // pred_check_branch
      %241 = sbr.rel (%p238) target = $region48
    $region47: #{genblock_forward.1} parent=5 // pred_region
      %s242 = ssub.s32 %s13, 1
      %p243 = scmp.lt.s32.totalorder %s18, 1
      %s244 = scalar_select %p243, %s18, 1
      %s245 = smul.addr %s244, 2
      %s246 = smul.addr %s245, 4
      %s247 = scalar_lea.vmem %s0, %s246
      %p248 = pneg %p39
      %p249 = pneg %p36
      %p250 = pneg %p60
      %p251 = pneg %p57
      %p252 = pneg %p81
      %p253 = pneg %p78
      %p254 = pneg %p102
      %p255 = pneg %p99
      %p256 = pneg %p123
      %p257 = pneg %p120
      %p258 = pneg %p144
      %p259 = pneg %p141
      %p260 = pneg %p165
      %p261 = pneg %p162
      %p262 = pneg %p191
      %p263 = pneg %p188
      %p264 = scmp.lt.s32.totalorder %s18, 1
      %s265 = scalar_select %p264, %s18, 1
      %s266 = smul.addr %s265, 2
      %s267 = smul.addr %s266, 8
      %s268 = scalar_lea.vmem %s7, %s267
      %p269 = scmp.lt.s32.totalorder %s18, 1
      %s270 = scalar_select %p269, %s18, 1
      %s271 = smul.addr %s270, 2
      %s272 = smul.addr %s271, 4
      %s273 = scalar_lea.vmem %s0, %s272
      %p274 = scmp.lt.s32.totalorder %s18, 1
      %s275 = scalar_select %p274, %s18, 1
      %s276 = smul.addr %s275, 2
      %s277 = smul.addr %s276, 8
      %s278 = scalar_lea.vmem %s7, %s277
      %v280 = vld [vmem:[%s5] sm:$0x3]
      %v281 = vld [vmem:[%s6] sm:$0x3]
      %v282 = vld [vmem:[%s273] sm:$0xff]
      %v284 = vcombine.high %v282, %v282
      %286 = vrot.lane.b32.xlu0 %v282, 17
      %v287 = vpop.permute.xlu0 %286
      %288 = vrot.lane.b32.xlu0 %v284, 17
      %v289 = vpop.permute.xlu0 %288
      %v290 = vlaneseq
      %v291 = vand.u32 %v290, 127
      %vm292 = vcmp.lt.s32.totalorder %v291, 17
      %v293 = vsel %vm292, %v287, %v289
      %v294 = vsel %vm292, %v289, %v287
      %vm295 = vcmp.ge.s32.totalorder %v280, 1
      %vm296 = vcmp.ge.s32.totalorder %v281, 1
      %vm297 = vmand %vm295, %vm296
      %v298 = vsel %vm297, 1, 0
      %v299 = vlaneseq
      %v300 = vshrl.u32 %v299, 7
      %v301 = vsub.s32 0, %v300
      %v302 = vrot.slane %v298, %v301
      %v303 = vlaneseq
      %v304 = vshrl.u32 %v303, 7
      %v305 = vsub.s32 1, %v304
      %v306 = vrot.slane %v298, %v305
      %vm307 = vcmp.eq.s32.totalorder %v302, 1
      %vm308 = vcmp.eq.s32.totalorder %v306, 1
      %v309 = vsel %vm307, %v294, 0.0
      %v310 = vsel %vm308, %v293, 0.0
      %v311 = vld [vmem:[%s1] sm:$0xf]
      %v312 = vpack.c.bf16 %v309, %v309
      %v313 = vpack.c.bf16 %v310, %v310
      %314 = vrot.lane.b32.xlu0 %v282, 16
      %v315 = vpop.permute.xlu0 %314
      %316 = vrot.lane.b32.xlu0 %v284, 16
      %v317 = vpop.permute.xlu0 %316
      %vm318 = vcmp.lt.s32.totalorder %v291, 16
      %v319 = vsel %vm318, %v315, %v317
      %v320 = vsel %vm318, %v317, %v315
      %v321 = vsel %vm295, 1, 0
      %v322 = vlaneseq
      %v323 = vshrl.u32 %v322, 7
      %v324 = vsub.s32 0, %v323
      %v325 = vrot.slane %v321, %v324
      %v326 = vlaneseq
      %v327 = vshrl.u32 %v326, 7
      %v328 = vsub.s32 1, %v327
      %v329 = vrot.slane %v321, %v328
      %vm330 = vcmp.eq.s32.totalorder %v325, 1
      %vm331 = vcmp.eq.s32.totalorder %v329, 1
      %v332 = vsel %vm330, %v320, 0.0
      %v333 = vsel %vm331, %v319, 0.0
      %s334 = scalar_lea.vmem %s1, 4
      %v335 = vld [vmem:[%s334] sm:$0xf]
      %v336 = vpack.c.bf16 %v332, %v332
      %v337 = vpack.c.bf16 %v333, %v333
      %vm338 = vcmask 31744
      %v340 = vsel %vm338, %v335, 0
      %vm342 = vcmask 1041408
      %v344 = vsel %vm342, %v336, 0
      %v347 = vsel %vm342, %v337, 0
      %349 = vmatprep.subr.bf16.mxu0 %v347
      %350 = vmatpush1.bf16.msra.mxu0 %v344
      %351 = vmatprep.subr.bf16.mxu0 0
      %352 = vmatpush1.bf16.msra.mxu0 0
      %353 = vmatprep.subr.bf16.mxu0 0
      %354 = vmatpush1.bf16.msra.mxu0 0
      %355 = vmatprep.subr.bf16.mxu0 0
      %356 = vmatpush1.bf16.msra.mxu0 0
      %357 = vmatprep.subr.bf16.mxu0 0
      %358 = vmatpush1.bf16.msra.mxu0 0
      %359 = vmatprep.subr.bf16.mxu0 0
      %360 = vmatpush1.bf16.msra.mxu0 0
      %361 = vmatprep.subr.bf16.mxu0 0
      %362 = vmatpush1.bf16.msra.mxu0 0
      %363 = vmatprep.subr.bf16.mxu0 0
      %364 = vmatpush1.bf16.msra.mxu0 0
      %365 = vmatprep.subr.bf16.mxu0 0
      %366 = vmatpush1.bf16.msra.mxu0 0
      %367 = vmatprep.subr.bf16.mxu0 0
      %368 = vmatpush1.bf16.msra.mxu0 0
      %369 = vmatprep.subr.bf16.mxu0 0
      %370 = vmatpush1.bf16.msra.mxu0 0
      %371 = vmatprep.subr.bf16.mxu0 0
      %372 = vmatpush1.bf16.msra.mxu0 0
      %373 = vmatprep.subr.bf16.mxu0 0
      %374 = vmatpush1.bf16.msra.mxu0 0
      %375 = vmatprep.subr.bf16.mxu0 0
      %376 = vmatpush1.bf16.msra.mxu0 0
      %377 = vmatprep.subr.bf16.mxu0 0
      %378 = vmatpush1.bf16.msra.mxu0 0
      %379 = vmatprep.subr.bf16.mxu0 0
      %380 = vmatpush1.bf16.msra.mxu0 0
      %381 = vmatprep.mubr.bf16.mxu0 0
      %382 = vmatmul.mubr.bf16.gmra.mrb[0].mxu0 %v340
      %v383 = vpop.f32.mrb[0].mxu0
      %v384 = vadd.f32 0.0, %v383
      %v385 = vpop.f32.mrb[0].mxu0
      %v386 = vadd.f32 0.0, %v385
      %v387 = vpop.f32.mrb[0].mxu0
      %v388 = vpop.f32.mrb[0].mxu0
      %389 = vdwg.mxu0
      %v391 = vsel %vm338, %v311, 0
      %v394 = vsel %vm342, %v312, 0
      %v397 = vsel %vm342, %v313, 0
      %399 = vmatprep.subr.bf16.mxu0 %v397
      %400 = vmatpush1.bf16.msra.mxu0 %v394
      %401 = vmatprep.subr.bf16.mxu0 0
      %402 = vmatpush1.bf16.msra.mxu0 0
      %403 = vmatprep.subr.bf16.mxu0 0
      %404 = vmatpush1.bf16.msra.mxu0 0
      %405 = vmatprep.subr.bf16.mxu0 0
      %406 = vmatpush1.bf16.msra.mxu0 0
      %407 = vmatprep.subr.bf16.mxu0 0
      %408 = vmatpush1.bf16.msra.mxu0 0
      %409 = vmatprep.subr.bf16.mxu0 0
      %410 = vmatpush1.bf16.msra.mxu0 0
      %411 = vmatprep.subr.bf16.mxu0 0
      %412 = vmatpush1.bf16.msra.mxu0 0
      %413 = vmatprep.subr.bf16.mxu0 0
      %414 = vmatpush1.bf16.msra.mxu0 0
      %415 = vmatprep.subr.bf16.mxu0 0
      %416 = vmatpush1.bf16.msra.mxu0 0
      %417 = vmatprep.subr.bf16.mxu0 0
      %418 = vmatpush1.bf16.msra.mxu0 0
      %419 = vmatprep.subr.bf16.mxu0 0
      %420 = vmatpush1.bf16.msra.mxu0 0
      %421 = vmatprep.subr.bf16.mxu0 0
      %422 = vmatpush1.bf16.msra.mxu0 0
      %423 = vmatprep.subr.bf16.mxu0 0
      %424 = vmatpush1.bf16.msra.mxu0 0
      %425 = vmatprep.subr.bf16.mxu0 0
      %426 = vmatpush1.bf16.msra.mxu0 0
      %427 = vmatprep.subr.bf16.mxu0 0
      %428 = vmatpush1.bf16.msra.mxu0 0
      %429 = vmatprep.subr.bf16.mxu0 0
      %430 = vmatpush1.bf16.msra.mxu0 0
      %431 = vmatprep.mubr.bf16.mxu0 0
      %432 = vmatmul.mubr.bf16.gmra.mrb[0].mxu0 %v391
      %v433 = vpop.f32.mrb[0].mxu0
      %v434 = vadd.f32 %v384, %v433
      %v435 = vpop.f32.mrb[0].mxu0
      %v436 = vadd.f32 %v386, %v435
      %v437 = vpop.f32.mrb[0].mxu0
      %v438 = vpop.f32.mrb[0].mxu0
      %439 = vdwg.mxu0
      %440 = vrot.lane.b32.xlu0 %v282, 15
      %v441 = vpop.permute.xlu0 %440
      %442 = vrot.lane.b32.xlu0 %v284, 15
      %v443 = vpop.permute.xlu0 %442
      %vm444 = vcmp.lt.s32.totalorder %v291, 15
      %v445 = vsel %vm444, %v441, %v443
      %v446 = vsel %vm444, %v443, %v441
      %vm447 = vcmp.lt.s32.totalorder %v281, 15
      %vm448 = vmand %vm295, %vm447
      %v449 = vsel %vm448, 1, 0
      %v450 = vlaneseq
      %v451 = vshrl.u32 %v450, 7
      %v452 = vsub.s32 0, %v451
      %v453 = vrot.slane %v449, %v452
      %v454 = vlaneseq
      %v455 = vshrl.u32 %v454, 7
      %v456 = vsub.s32 1, %v455
      %v457 = vrot.slane %v449, %v456
      %vm458 = vcmp.eq.s32.totalorder %v453, 1
      %vm459 = vcmp.eq.s32.totalorder %v457, 1
      %v460 = vsel %vm458, %v446, 0.0
      %v461 = vsel %vm459, %v445, 0.0
      %s462 = scalar_lea.vmem %s1, 8
      %v463 = vld [vmem:[%s462] sm:$0xf]
      %v464 = vpack.c.bf16 %v460, %v460
      %v465 = vpack.c.bf16 %v461, %v461
      %v467 = vsel %vm338, %v463, 0
      %v470 = vsel %vm342, %v464, 0
      %v473 = vsel %vm342, %v465, 0
      %475 = vmatprep.subr.bf16.mxu0 %v473
      %476 = vmatpush1.bf16.msra.mxu0 %v470
      %477 = vmatprep.subr.bf16.mxu0 0
      %478 = vmatpush1.bf16.msra.mxu0 0
      %479 = vmatprep.subr.bf16.mxu0 0
      %480 = vmatpush1.bf16.msra.mxu0 0
      %481 = vmatprep.subr.bf16.mxu0 0
      %482 = vmatpush1.bf16.msra.mxu0 0
      %483 = vmatprep.subr.bf16.mxu0 0
      %484 = vmatpush1.bf16.msra.mxu0 0
      %485 = vmatprep.subr.bf16.mxu0 0
      %486 = vmatpush1.bf16.msra.mxu0 0
      %487 = vmatprep.subr.bf16.mxu0 0
      %488 = vmatpush1.bf16.msra.mxu0 0
      %489 = vmatprep.subr.bf16.mxu0 0
      %490 = vmatpush1.bf16.msra.mxu0 0
      %491 = vmatprep.subr.bf16.mxu0 0
      %492 = vmatpush1.bf16.msra.mxu0 0
      %493 = vmatprep.subr.bf16.mxu0 0
      %494 = vmatpush1.bf16.msra.mxu0 0
      %495 = vmatprep.subr.bf16.mxu0 0
      %496 = vmatpush1.bf16.msra.mxu0 0
      %497 = vmatprep.subr.bf16.mxu0 0
      %498 = vmatpush1.bf16.msra.mxu0 0
      %499 = vmatprep.subr.bf16.mxu0 0
      %500 = vmatpush1.bf16.msra.mxu0 0
      %501 = vmatprep.subr.bf16.mxu0 0
      %502 = vmatpush1.bf16.msra.mxu0 0
      %503 = vmatprep.subr.bf16.mxu0 0
      %504 = vmatpush1.bf16.msra.mxu0 0
      %505 = vmatprep.subr.bf16.mxu0 0
      %506 = vmatpush1.bf16.msra.mxu0 0
      %507 = vmatprep.mubr.bf16.mxu0 0
      %508 = vmatmul.mubr.bf16.gmra.mrb[0].mxu0 %v467
      %v509 = vpop.f32.mrb[0].mxu0
      %v510 = vadd.f32 0.0, %v509
      %v511 = vpop.f32.mrb[0].mxu0
      %v512 = vadd.f32 0.0, %v511
      %v513 = vpop.f32.mrb[0].mxu0
      %v514 = vpop.f32.mrb[0].mxu0
      %515 = vdwg.mxu0
      %v516 = vadd.f32 %v434, %v510
      %v517 = vadd.f32 %v436, %v512
      %518 = vrot.lane.b32.xlu0 %v282, 1
      %v519 = vpop.permute.xlu0 %518
      %520 = vrot.lane.b32.xlu0 %v284, 1
      %v521 = vpop.permute.xlu0 %520
      %vm522 = vcmp.lt.s32.totalorder %v291, 1
      %v523 = vsel %vm522, %v519, %v521
      %v524 = vsel %vm522, %v521, %v519
      %v525 = vsel %vm296, 1, 0
      %v526 = vlaneseq
      %v527 = vshrl.u32 %v526, 7
      %v528 = vsub.s32 0, %v527
      %v529 = vrot.slane %v525, %v528
      %v530 = vlaneseq
      %v531 = vshrl.u32 %v530, 7
      %v532 = vsub.s32 1, %v531
      %v533 = vrot.slane %v525, %v532
      %vm534 = vcmp.eq.s32.totalorder %v529, 1
      %vm535 = vcmp.eq.s32.totalorder %v533, 1
      %v536 = vsel %vm534, %v524, 0.0
      %v537 = vsel %vm535, %v523, 0.0
      %s538 = scalar_lea.vmem %s1, 12
      %v539 = vld [vmem:[%s538] sm:$0xf]
      %v540 = vpack.c.bf16 %v536, %v536
      %v541 = vpack.c.bf16 %v537, %v537
      %v543 = vsel %vm338, %v539, 0
      %v546 = vsel %vm342, %v540, 0
      %v549 = vsel %vm342, %v541, 0
      %551 = vmatprep.subr.bf16.mxu0 %v549
      %552 = vmatpush1.bf16.msra.mxu0 %v546
      %553 = vmatprep.subr.bf16.mxu0 0
      %554 = vmatpush1.bf16.msra.mxu0 0
      %555 = vmatprep.subr.bf16.mxu0 0
      %556 = vmatpush1.bf16.msra.mxu0 0
      %557 = vmatprep.subr.bf16.mxu0 0
      %558 = vmatpush1.bf16.msra.mxu0 0
      %559 = vmatprep.subr.bf16.mxu0 0
      %560 = vmatpush1.bf16.msra.mxu0 0
      %561 = vmatprep.subr.bf16.mxu0 0
      %562 = vmatpush1.bf16.msra.mxu0 0
      %563 = vmatprep.subr.bf16.mxu0 0
      %564 = vmatpush1.bf16.msra.mxu0 0
      %565 = vmatprep.subr.bf16.mxu0 0
      %566 = vmatpush1.bf16.msra.mxu0 0
      %567 = vmatprep.subr.bf16.mxu0 0
      %568 = vmatpush1.bf16.msra.mxu0 0
      %569 = vmatprep.subr.bf16.mxu0 0
      %570 = vmatpush1.bf16.msra.mxu0 0
      %571 = vmatprep.subr.bf16.mxu0 0
      %572 = vmatpush1.bf16.msra.mxu0 0
      %573 = vmatprep.subr.bf16.mxu0 0
      %574 = vmatpush1.bf16.msra.mxu0 0
      %575 = vmatprep.subr.bf16.mxu0 0
      %576 = vmatpush1.bf16.msra.mxu0 0
      %577 = vmatprep.subr.bf16.mxu0 0
      %578 = vmatpush1.bf16.msra.mxu0 0
      %579 = vmatprep.subr.bf16.mxu0 0
      %580 = vmatpush1.bf16.msra.mxu0 0
      %581 = vmatprep.subr.bf16.mxu0 0
      %582 = vmatpush1.bf16.msra.mxu0 0
      %583 = vmatprep.mubr.bf16.mxu0 0
      %584 = vmatmul.mubr.bf16.gmra.mrb[0].mxu0 %v543
      %v585 = vpop.f32.mrb[0].mxu0
      %v586 = vadd.f32 0.0, %v585
      %v587 = vpop.f32.mrb[0].mxu0
      %v588 = vadd.f32 0.0, %v587
      %v589 = vpop.f32.mrb[0].mxu0
      %v590 = vpop.f32.mrb[0].mxu0
      %591 = vdwg.mxu0
      %v592 = vadd.f32 %v516, %v586
      %v593 = vadd.f32 %v517, %v588
      %s594 = scalar_lea.vmem %s1, 16
      %v595 = vld [vmem:[%s594] sm:$0xf]
      %v596 = vpack.c.bf16 %v282, %v282
      %v597 = vpack.c.bf16 %v284, %v284
      %v599 = vsel %vm338, %v595, 0
      %v602 = vsel %vm342, %v596, 0
      %v605 = vsel %vm342, %v597, 0
      %607 = vmatprep.subr.bf16.mxu0 %v605
      %608 = vmatpush1.bf16.msra.mxu0 %v602
      %609 = vmatprep.subr.bf16.mxu0 0
      %610 = vmatpush1.bf16.msra.mxu0 0
      %611 = vmatprep.subr.bf16.mxu0 0
      %612 = vmatpush1.bf16.msra.mxu0 0
      %613 = vmatprep.subr.bf16.mxu0 0
      %614 = vmatpush1.bf16.msra.mxu0 0
      %615 = vmatprep.subr.bf16.mxu0 0
      %616 = vmatpush1.bf16.msra.mxu0 0
      %617 = vmatprep.subr.bf16.mxu0 0
      %618 = vmatpush1.bf16.msra.mxu0 0
      %619 = vmatprep.subr.bf16.mxu0 0
      %620 = vmatpush1.bf16.msra.mxu0 0
      %621 = vmatprep.subr.bf16.mxu0 0
      %622 = vmatpush1.bf16.msra.mxu0 0
      %623 = vmatprep.subr.bf16.mxu0 0
      %624 = vmatpush1.bf16.msra.mxu0 0
      %625 = vmatprep.subr.bf16.mxu0 0
      %626 = vmatpush1.bf16.msra.mxu0 0
      %627 = vmatprep.subr.bf16.mxu0 0
      %628 = vmatpush1.bf16.msra.mxu0 0
      %629 = vmatprep.subr.bf16.mxu0 0
      %630 = vmatpush1.bf16.msra.mxu0 0
      %631 = vmatprep.subr.bf16.mxu0 0
      %632 = vmatpush1.bf16.msra.mxu0 0
      %633 = vmatprep.subr.bf16.mxu0 0
      %634 = vmatpush1.bf16.msra.mxu0 0
      %635 = vmatprep.subr.bf16.mxu0 0
      %636 = vmatpush1.bf16.msra.mxu0 0
      %637 = vmatprep.subr.bf16.mxu0 0
      %638 = vmatpush1.bf16.msra.mxu0 0
      %639 = vmatprep.mubr.bf16.mxu0 0
      %640 = vmatmul.mubr.bf16.gmra.mrb[0].mxu0 %v599
      %v641 = vpop.f32.mrb[0].mxu0
      %v642 = vadd.f32 0.0, %v641
      %v643 = vpop.f32.mrb[0].mxu0
      %v644 = vadd.f32 0.0, %v643
      %v645 = vpop.f32.mrb[0].mxu0
      %v646 = vpop.f32.mrb[0].mxu0
      %647 = vdwg.mxu0
      %v648 = vadd.f32 %v592, %v642
      %v649 = vadd.f32 %v593, %v644
      %650 = vrot.lane.b32.xlu0 %v282, 127
      %v651 = vpop.permute.xlu0 %650
      %652 = vrot.lane.b32.xlu0 %v284, 127
      %v653 = vpop.permute.xlu0 %652
      %vm654 = vcmp.lt.s32.totalorder %v291, 127
      %v655 = vsel %vm654, %v651, %v653
      %v656 = vsel %vm654, %v653, %v651
      %v657 = vsel %vm447, 1, 0
      %v658 = vlaneseq
      %v659 = vshrl.u32 %v658, 7
      %v660 = vsub.s32 0, %v659
      %v661 = vrot.slane %v657, %v660
      %v662 = vlaneseq
      %v663 = vshrl.u32 %v662, 7
      %v664 = vsub.s32 1, %v663
      %v665 = vrot.slane %v657, %v664
      %vm666 = vcmp.eq.s32.totalorder %v661, 1
      %vm667 = vcmp.eq.s32.totalorder %v665, 1
      %v668 = vsel %vm666, %v655, 0.0
      %v669 = vsel %vm667, %v656, 0.0
      %s670 = scalar_lea.vmem %s1, 20
      %v671 = vld [vmem:[%s670] sm:$0xf]
      %v672 = vpack.c.bf16 %v668, %v668
      %v673 = vpack.c.bf16 %v669, %v669
      %v675 = vsel %vm338, %v671, 0
      %v678 = vsel %vm342, %v672, 0
      %v681 = vsel %vm342, %v673, 0
      %683 = vmatprep.subr.bf16.mxu0 %v681
      %684 = vmatpush1.bf16.msra.mxu0 %v678
      %685 = vmatprep.subr.bf16.mxu0 0
      %686 = vmatpush1.bf16.msra.mxu0 0
      %687 = vmatprep.subr.bf16.mxu0 0
      %688 = vmatpush1.bf16.msra.mxu0 0
      %689 = vmatprep.subr.bf16.mxu0 0
      %690 = vmatpush1.bf16.msra.mxu0 0
      %691 = vmatprep.subr.bf16.mxu0 0
      %692 = vmatpush1.bf16.msra.mxu0 0
      %693 = vmatprep.subr.bf16.mxu0 0
      %694 = vmatpush1.bf16.msra.mxu0 0
      %695 = vmatprep.subr.bf16.mxu0 0
      %696 = vmatpush1.bf16.msra.mxu0 0
      %697 = vmatprep.subr.bf16.mxu0 0
      %698 = vmatpush1.bf16.msra.mxu0 0
      %699 = vmatprep.subr.bf16.mxu0 0
      %700 = vmatpush1.bf16.msra.mxu0 0
      %701 = vmatprep.subr.bf16.mxu0 0
      %702 = vmatpush1.bf16.msra.mxu0 0
      %703 = vmatprep.subr.bf16.mxu0 0
      %704 = vmatpush1.bf16.msra.mxu0 0
      %705 = vmatprep.subr.bf16.mxu0 0
      %706 = vmatpush1.bf16.msra.mxu0 0
      %707 = vmatprep.subr.bf16.mxu0 0
      %708 = vmatpush1.bf16.msra.mxu0 0
      %709 = vmatprep.subr.bf16.mxu0 0
      %710 = vmatpush1.bf16.msra.mxu0 0
      %711 = vmatprep.subr.bf16.mxu0 0
      %712 = vmatpush1.bf16.msra.mxu0 0
      %713 = vmatprep.subr.bf16.mxu0 0
      %714 = vmatpush1.bf16.msra.mxu0 0
      %715 = vmatprep.mubr.bf16.mxu0 0
      %716 = vmatmul.mubr.bf16.gmra.mrb[0].mxu0 %v675
      %v717 = vpop.f32.mrb[0].mxu0
      %v718 = vadd.f32 0.0, %v717
      %v719 = vpop.f32.mrb[0].mxu0
      %v720 = vadd.f32 0.0, %v719
      %v721 = vpop.f32.mrb[0].mxu0
      %v722 = vpop.f32.mrb[0].mxu0
      %723 = vdwg.mxu0
      %v724 = vadd.f32 %v648, %v718
      %v725 = vadd.f32 %v649, %v720
      %726 = vrot.lane.b32.xlu0 %v282, 113
      %v727 = vpop.permute.xlu0 %726
      %728 = vrot.lane.b32.xlu0 %v284, 113
      %v729 = vpop.permute.xlu0 %728
      %vm730 = vcmp.lt.s32.totalorder %v291, 113
      %v731 = vsel %vm730, %v727, %v729
      %v732 = vsel %vm730, %v729, %v727
      %vm733 = vcmp.lt.s32.totalorder %v280, 15
      %vm734 = vmand %vm733, %vm296
      %v735 = vsel %vm734, 1, 0
      %v736 = vlaneseq
      %v737 = vshrl.u32 %v736, 7
      %v738 = vsub.s32 0, %v737
      %v739 = vrot.slane %v735, %v738
      %v740 = vlaneseq
      %v741 = vshrl.u32 %v740, 7
      %v742 = vsub.s32 1, %v741
      %v743 = vrot.slane %v735, %v742
      %vm744 = vcmp.eq.s32.totalorder %v739, 1
      %vm745 = vcmp.eq.s32.totalorder %v743, 1
      %v746 = vsel %vm744, %v731, 0.0
      %v747 = vsel %vm745, %v732, 0.0
      %s748 = scalar_lea.vmem %s1, 24
      %v749 = vld [vmem:[%s748] sm:$0xf]
      %v750 = vpack.c.bf16 %v746, %v746
      %v751 = vpack.c.bf16 %v747, %v747
      %v753 = vsel %vm338, %v749, 0
      %v756 = vsel %vm342, %v750, 0
      %v759 = vsel %vm342, %v751, 0
      %761 = vmatprep.subr.bf16.mxu0 %v759
      %762 = vmatpush1.bf16.msra.mxu0 %v756
      %763 = vmatprep.subr.bf16.mxu0 0
      %764 = vmatpush1.bf16.msra.mxu0 0
      %765 = vmatprep.subr.bf16.mxu0 0
      %766 = vmatpush1.bf16.msra.mxu0 0
      %767 = vmatprep.subr.bf16.mxu0 0
      %768 = vmatpush1.bf16.msra.mxu0 0
      %769 = vmatprep.subr.bf16.mxu0 0
      %770 = vmatpush1.bf16.msra.mxu0 0
      %771 = vmatprep.subr.bf16.mxu0 0
      %772 = vmatpush1.bf16.msra.mxu0 0
      %773 = vmatprep.subr.bf16.mxu0 0
      %774 = vmatpush1.bf16.msra.mxu0 0
      %775 = vmatprep.subr.bf16.mxu0 0
      %776 = vmatpush1.bf16.msra.mxu0 0
      %777 = vmatprep.subr.bf16.mxu0 0
      %778 = vmatpush1.bf16.msra.mxu0 0
      %779 = vmatprep.subr.bf16.mxu0 0
      %780 = vmatpush1.bf16.msra.mxu0 0
      %781 = vmatprep.subr.bf16.mxu0 0
      %782 = vmatpush1.bf16.msra.mxu0 0
      %783 = vmatprep.subr.bf16.mxu0 0
      %784 = vmatpush1.bf16.msra.mxu0 0
      %785 = vmatprep.subr.bf16.mxu0 0
      %786 = vmatpush1.bf16.msra.mxu0 0
      %787 = vmatprep.subr.bf16.mxu0 0
      %788 = vmatpush1.bf16.msra.mxu0 0
      %789 = vmatprep.subr.bf16.mxu0 0
      %790 = vmatpush1.bf16.msra.mxu0 0
      %791 = vmatprep.subr.bf16.mxu0 0
      %792 = vmatpush1.bf16.msra.mxu0 0
      %793 = vmatprep.mubr.bf16.mxu0 0
      %794 = vmatmul.mubr.bf16.gmra.mrb[0].mxu0 %v753
      %v795 = vpop.f32.mrb[0].mxu0
      %v796 = vadd.f32 0.0, %v795
      %v797 = vpop.f32.mrb[0].mxu0
      %v798 = vadd.f32 0.0, %v797
      %v799 = vpop.f32.mrb[0].mxu0
      %v800 = vpop.f32.mrb[0].mxu0
      %801 = vdwg.mxu0
      %v802 = vadd.f32 %v724, %v796
      %v803 = vadd.f32 %v725, %v798
      %804 = vrot.lane.b32.xlu0 %v282, 112
      %v805 = vpop.permute.xlu0 %804
      %806 = vrot.lane.b32.xlu0 %v284, 112
      %v807 = vpop.permute.xlu0 %806
      %vm808 = vcmp.lt.s32.totalorder %v291, 112
      %v809 = vsel %vm808, %v805, %v807
      %v810 = vsel %vm808, %v807, %v805
      %v811 = vsel %vm733, 1, 0
      %v812 = vlaneseq
      %v813 = vshrl.u32 %v812, 7
      %v814 = vsub.s32 0, %v813
      %v815 = vrot.slane %v811, %v814
      %v816 = vlaneseq
      %v817 = vshrl.u32 %v816, 7
      %v818 = vsub.s32 1, %v817
      %v819 = vrot.slane %v811, %v818
      %vm820 = vcmp.eq.s32.totalorder %v815, 1
      %vm821 = vcmp.eq.s32.totalorder %v819, 1
      %v822 = vsel %vm820, %v809, 0.0
      %v823 = vsel %vm821, %v810, 0.0
      %s824 = scalar_lea.vmem %s1, 28
      %v825 = vld [vmem:[%s824] sm:$0xf]
      %v826 = vpack.c.bf16 %v822, %v822
      %v827 = vpack.c.bf16 %v823, %v823
      %v829 = vsel %vm338, %v825, 0
      %v832 = vsel %vm342, %v826, 0
      %v835 = vsel %vm342, %v827, 0
      %837 = vmatprep.subr.bf16.mxu0 %v835
      %838 = vmatpush1.bf16.msra.mxu0 %v832
      %839 = vmatprep.subr.bf16.mxu0 0
      %840 = vmatpush1.bf16.msra.mxu0 0
      %841 = vmatprep.subr.bf16.mxu0 0
      %842 = vmatpush1.bf16.msra.mxu0 0
      %843 = vmatprep.subr.bf16.mxu0 0
      %844 = vmatpush1.bf16.msra.mxu0 0
      %845 = vmatprep.subr.bf16.mxu0 0
      %846 = vmatpush1.bf16.msra.mxu0 0
      %847 = vmatprep.subr.bf16.mxu0 0
      %848 = vmatpush1.bf16.msra.mxu0 0
      %849 = vmatprep.subr.bf16.mxu0 0
      %850 = vmatpush1.bf16.msra.mxu0 0
      %851 = vmatprep.subr.bf16.mxu0 0
      %852 = vmatpush1.bf16.msra.mxu0 0
      %853 = vmatprep.subr.bf16.mxu0 0
      %854 = vmatpush1.bf16.msra.mxu0 0
      %855 = vmatprep.subr.bf16.mxu0 0
      %856 = vmatpush1.bf16.msra.mxu0 0
      %857 = vmatprep.subr.bf16.mxu0 0
      %858 = vmatpush1.bf16.msra.mxu0 0
      %859 = vmatprep.subr.bf16.mxu0 0
      %860 = vmatpush1.bf16.msra.mxu0 0
      %861 = vmatprep.subr.bf16.mxu0 0
      %862 = vmatpush1.bf16.msra.mxu0 0
      %863 = vmatprep.subr.bf16.mxu0 0
      %864 = vmatpush1.bf16.msra.mxu0 0
      %865 = vmatprep.subr.bf16.mxu0 0
      %866 = vmatpush1.bf16.msra.mxu0 0
      %867 = vmatprep.subr.bf16.mxu0 0
      %868 = vmatpush1.bf16.msra.mxu0 0
      %869 = vmatprep.mubr.bf16.mxu0 0
      %870 = vmatmul.mubr.bf16.gmra.mrb[0].mxu0 %v829
      %v871 = vpop.f32.mrb[0].mxu0
      %v872 = vadd.f32 0.0, %v871
      %v873 = vpop.f32.mrb[0].mxu0
      %v874 = vadd.f32 0.0, %v873
      %v875 = vpop.f32.mrb[0].mxu0
      %v876 = vpop.f32.mrb[0].mxu0
      %877 = vdwg.mxu0
      %v878 = vadd.f32 %v802, %v872
      %v879 = vadd.f32 %v803, %v874
      %880 = vrot.lane.b32.xlu0 %v282, 111
      %v881 = vpop.permute.xlu0 %880
      %882 = vrot.lane.b32.xlu0 %v284, 111
      %v883 = vpop.permute.xlu0 %882
      %vm884 = vcmp.lt.s32.totalorder %v291, 111
      %v885 = vsel %vm884, %v881, %v883
      %v886 = vsel %vm884, %v883, %v881
      %vm887 = vmand %vm733, %vm447
      %v888 = vsel %vm887, 1, 0
      %v889 = vlaneseq
      %v890 = vshrl.u32 %v889, 7
      %v891 = vsub.s32 0, %v890
      %v892 = vrot.slane %v888, %v891
      %v893 = vlaneseq
      %v894 = vshrl.u32 %v893, 7
      %v895 = vsub.s32 1, %v894
      %v896 = vrot.slane %v888, %v895
      %vm897 = vcmp.eq.s32.totalorder %v892, 1
      %vm898 = vcmp.eq.s32.totalorder %v896, 1
      %v899 = vsel %vm897, %v885, 0.0
      %v900 = vsel %vm898, %v886, 0.0
      %s901 = scalar_lea.vmem %s1, 32
      %v902 = vld [vmem:[%s901] sm:$0xf]
      %v903 = vpack.c.bf16 %v899, %v899
      %v904 = vpack.c.bf16 %v900, %v900
      %v906 = vsel %vm338, %v902, 0
      %v909 = vsel %vm342, %v903, 0
      %v912 = vsel %vm342, %v904, 0
      %914 = vmatprep.subr.bf16.mxu0 %v912
      %915 = vmatpush1.bf16.msra.mxu0 %v909
      %916 = vmatprep.subr.bf16.mxu0 0
      %917 = vmatpush1.bf16.msra.mxu0 0
      %918 = vmatprep.subr.bf16.mxu0 0
      %919 = vmatpush1.bf16.msra.mxu0 0
      %920 = vmatprep.subr.bf16.mxu0 0
      %921 = vmatpush1.bf16.msra.mxu0 0
      %922 = vmatprep.subr.bf16.mxu0 0
      %923 = vmatpush1.bf16.msra.mxu0 0
      %924 = vmatprep.subr.bf16.mxu0 0
      %925 = vmatpush1.bf16.msra.mxu0 0
      %926 = vmatprep.subr.bf16.mxu0 0
      %927 = vmatpush1.bf16.msra.mxu0 0
      %928 = vmatprep.subr.bf16.mxu0 0
      %929 = vmatpush1.bf16.msra.mxu0 0
      %930 = vmatprep.subr.bf16.mxu0 0
      %931 = vmatpush1.bf16.msra.mxu0 0
      %932 = vmatprep.subr.bf16.mxu0 0
      %933 = vmatpush1.bf16.msra.mxu0 0
      %934 = vmatprep.subr.bf16.mxu0 0
      %935 = vmatpush1.bf16.msra.mxu0 0
      %936 = vmatprep.subr.bf16.mxu0 0
      %937 = vmatpush1.bf16.msra.mxu0 0
      %938 = vmatprep.subr.bf16.mxu0 0
      %939 = vmatpush1.bf16.msra.mxu0 0
      %940 = vmatprep.subr.bf16.mxu0 0
      %941 = vmatpush1.bf16.msra.mxu0 0
      %942 = vmatprep.subr.bf16.mxu0 0
      %943 = vmatpush1.bf16.msra.mxu0 0
      %944 = vmatprep.subr.bf16.mxu0 0
      %945 = vmatpush1.bf16.msra.mxu0 0
      %946 = vmatprep.mubr.bf16.mxu0 0
      %947 = vmatmul.mubr.bf16.gmra.mrb[0].mxu0 %v906
      %v948 = vpop.f32.mrb[0].mxu0
      %v949 = vadd.f32 0.0, %v948
      %v950 = vpop.f32.mrb[0].mxu0
      %v951 = vadd.f32 0.0, %v950
      %v952 = vpop.f32.mrb[0].mxu0
      %v953 = vpop.f32.mrb[0].mxu0
      %954 = vdwg.mxu0
      %v955 = vadd.f32 %v878, %v949
      %v956 = vadd.f32 %v879, %v951
      %v957 = vld [vmem:[%s2] sm:$0xff]
      %959 = vset.pattern.permute.xlu0 0
      %960 = vperm.xlu0 %959, %v957
      %v961 = vpop.permute.xlu0 %960
      %v963 = vadd.f32 %v955, %v961
      %v964 = vadd.f32 %v956, %v961
      %965 = vrot.lane.b32.xlu0 %v963, 51
      %v966 = vpop.permute.xlu0 %965
      %967 = vrot.lane.b32.xlu0 %v964, 51
      %v968 = vpop.permute.xlu0 %967
      %vm969 = vcmp.lt.s32.totalorder %v291, 51
      %v970 = vsel %vm969, %v966, %v968
      %v971 = vsel %vm969, %v968, %v966
      %vm972 = vcmp.ge.s32.totalorder %v280, 3
      %vm973 = vcmp.ge.s32.totalorder %v281, 3
      %vm974 = vmand %vm972, %vm973
      %v975 = vsel %vm974, 1, 0
      %v976 = vlaneseq
      %v977 = vshrl.u32 %v976, 7
      %v978 = vsub.s32 0, %v977
      %v979 = vrot.slane %v975, %v978
      %v980 = vlaneseq
      %v981 = vshrl.u32 %v980, 7
      %v982 = vsub.s32 1, %v981
      %v983 = vrot.slane %v975, %v982
      %vm984 = vcmp.eq.s32.totalorder %v979, 1
      %vm985 = vcmp.eq.s32.totalorder %v983, 1
      %v986 = vsel %vm984, %v971, 0.0
      %v987 = vsel %vm985, %v970, 0.0
      %v988 = vld [vmem:[%s3] sm:$0xff]
      %990 = vset.pattern.permute.xlu0 0
      %991 = vperm.xlu0 %990, %v988
      %v992 = vpop.permute.xlu0 %991
      %v994 = vmul.f32 %v986, %v992
      %v995 = vmul.f32 %v987, %v992
      %v996 = vadd.f32 %v994, 0.0
      %v997 = vadd.f32 %v995, 0.0
      %998 = vrot.lane.b32.xlu0 %v963, 50
      %v999 = vpop.permute.xlu0 %998
      %1000 = vrot.lane.b32.xlu0 %v964, 50
      %v1001 = vpop.permute.xlu0 %1000
      %vm1002 = vcmp.lt.s32.totalorder %v291, 50
      %v1003 = vsel %vm1002, %v999, %v1001
      %v1004 = vsel %vm1002, %v1001, %v999
      %vm1005 = vcmp.ge.s32.totalorder %v281, 2
      %vm1006 = vmand %vm972, %vm1005
      %v1007 = vsel %vm1006, 1, 0
      %v1008 = vlaneseq
      %v1009 = vshrl.u32 %v1008, 7
      %v1010 = vsub.s32 0, %v1009
      %v1011 = vrot.slane %v1007, %v1010
      %v1012 = vlaneseq
      %v1013 = vshrl.u32 %v1012, 7
      %v1014 = vsub.s32 1, %v1013
      %v1015 = vrot.slane %v1007, %v1014
      %vm1016 = vcmp.eq.s32.totalorder %v1011, 1
      %vm1017 = vcmp.eq.s32.totalorder %v1015, 1
      %v1018 = vsel %vm1016, %v1004, 0.0
      %v1019 = vsel %vm1017, %v1003, 0.0
      %s1020 = scalar_lea.vmem %s3, 8
      %v1021 = vld [vmem:[%s1020] sm:$0xff]
      %1023 = vset.pattern.permute.xlu0 0
      %1024 = vperm.xlu0 %1023, %v1021
      %v1025 = vpop.permute.xlu0 %1024
      %v1027 = vmul.f32 %v1018, %v1025
      %v1028 = vmul.f32 %v1019, %v1025
      %v1029 = vadd.f32 %v996, %v1027
      %v1030 = vadd.f32 %v997, %v1028
      %1031 = vrot.lane.b32.xlu0 %v963, 49
      %v1032 = vpop.permute.xlu0 %1031
      %1033 = vrot.lane.b32.xlu0 %v964, 49
      %v1034 = vpop.permute.xlu0 %1033
      %vm1035 = vcmp.lt.s32.totalorder %v291, 49
      %v1036 = vsel %vm1035, %v1032, %v1034
      %v1037 = vsel %vm1035, %v1034, %v1032
      %vm1038 = vmand %vm972, %vm296
      %v1039 = vsel %vm1038, 1, 0
      %v1040 = vlaneseq
      %v1041 = vshrl.u32 %v1040, 7
      %v1042 = vsub.s32 0, %v1041
      %v1043 = vrot.slane %v1039, %v1042
      %v1044 = vlaneseq
      %v1045 = vshrl.u32 %v1044, 7
      %v1046 = vsub.s32 1, %v1045
      %v1047 = vrot.slane %v1039, %v1046
      %vm1048 = vcmp.eq.s32.totalorder %v1043, 1
      %vm1049 = vcmp.eq.s32.totalorder %v1047, 1
      %v1050 = vsel %vm1048, %v1037, 0.0
      %v1051 = vsel %vm1049, %v1036, 0.0
      %s1052 = scalar_lea.vmem %s3, 16
      %v1053 = vld [vmem:[%s1052] sm:$0xff]
      %1055 = vset.pattern.permute.xlu0 0
      %1056 = vperm.xlu0 %1055, %v1053
      %v1057 = vpop.permute.xlu0 %1056
      %v1059 = vmul.f32 %v1050, %v1057
      %v1060 = vmul.f32 %v1051, %v1057
      %v1061 = vadd.f32 %v1029, %v1059
      %v1062 = vadd.f32 %v1030, %v1060
      %1063 = vrot.lane.b32.xlu0 %v963, 48
      %v1064 = vpop.permute.xlu0 %1063
      %1065 = vrot.lane.b32.xlu0 %v964, 48
      %v1066 = vpop.permute.xlu0 %1065
      %vm1067 = vcmp.lt.s32.totalorder %v291, 48
      %v1068 = vsel %vm1067, %v1064, %v1066
      %v1069 = vsel %vm1067, %v1066, %v1064
      %v1070 = vsel %vm972, 1, 0
      %v1071 = vlaneseq
      %v1072 = vshrl.u32 %v1071, 7
      %v1073 = vsub.s32 0, %v1072
      %v1074 = vrot.slane %v1070, %v1073
      %v1075 = vlaneseq
      %v1076 = vshrl.u32 %v1075, 7
      %v1077 = vsub.s32 1, %v1076
      %v1078 = vrot.slane %v1070, %v1077
      %vm1079 = vcmp.eq.s32.totalorder %v1074, 1
      %vm1080 = vcmp.eq.s32.totalorder %v1078, 1
      %v1081 = vsel %vm1079, %v1069, 0.0
      %v1082 = vsel %vm1080, %v1068, 0.0
      %s1083 = scalar_lea.vmem %s3, 24
      %v1084 = vld [vmem:[%s1083] sm:$0xff]
      %1086 = vset.pattern.permute.xlu0 0
      %1087 = vperm.xlu0 %1086, %v1084
      %v1088 = vpop.permute.xlu0 %1087
      %v1090 = vmul.f32 %v1081, %v1088
      %v1091 = vmul.f32 %v1082, %v1088
      %v1092 = vadd.f32 %v1061, %v1090
      %v1093 = vadd.f32 %v1062, %v1091
      %1094 = vrot.lane.b32.xlu0 %v963, 47
      %v1095 = vpop.permute.xlu0 %1094
      %1096 = vrot.lane.b32.xlu0 %v964, 47
      %v1097 = vpop.permute.xlu0 %1096
      %vm1098 = vcmp.lt.s32.totalorder %v291, 47
      %v1099 = vsel %vm1098, %v1095, %v1097
      %v1100 = vsel %vm1098, %v1097, %v1095
      %vm1101 = vmand %vm972, %vm447
      %v1102 = vsel %vm1101, 1, 0
      %v1103 = vlaneseq
      %v1104 = vshrl.u32 %v1103, 7
      %v1105 = vsub.s32 0, %v1104
      %v1106 = vrot.slane %v1102, %v1105
      %v1107 = vlaneseq
      %v1108 = vshrl.u32 %v1107, 7
      %v1109 = vsub.s32 1, %v1108
      %v1110 = vrot.slane %v1102, %v1109
      %vm1111 = vcmp.eq.s32.totalorder %v1106, 1
      %vm1112 = vcmp.eq.s32.totalorder %v1110, 1
      %v1113 = vsel %vm1111, %v1100, 0.0
      %v1114 = vsel %vm1112, %v1099, 0.0
      %s1115 = scalar_lea.vmem %s3, 32
      %v1116 = vld [vmem:[%s1115] sm:$0xff]
      %1118 = vset.pattern.permute.xlu0 0
      %1119 = vperm.xlu0 %1118, %v1116
      %v1120 = vpop.permute.xlu0 %1119
      %v1122 = vmul.f32 %v1113, %v1120
      %v1123 = vmul.f32 %v1114, %v1120
      %v1124 = vadd.f32 %v1092, %v1122
      %v1125 = vadd.f32 %v1093, %v1123
      %1126 = vrot.lane.b32.xlu0 %v963, 46
      %v1127 = vpop.permute.xlu0 %1126
      %1128 = vrot.lane.b32.xlu0 %v964, 46
      %v1129 = vpop.permute.xlu0 %1128
      %vm1130 = vcmp.lt.s32.totalorder %v291, 46
      %v1131 = vsel %vm1130, %v1127, %v1129
      %v1132 = vsel %vm1130, %v1129, %v1127
      %vm1133 = vcmp.lt.s32.totalorder %v281, 14
      %vm1134 = vmand %vm972, %vm1133
      %v1135 = vsel %vm1134, 1, 0
      %v1136 = vlaneseq
      %v1137 = vshrl.u32 %v1136, 7
      %v1138 = vsub.s32 0, %v1137
      %v1139 = vrot.slane %v1135, %v1138
      %v1140 = vlaneseq
      %v1141 = vshrl.u32 %v1140, 7
      %v1142 = vsub.s32 1, %v1141
      %v1143 = vrot.slane %v1135, %v1142
      %vm1144 = vcmp.eq.s32.totalorder %v1139, 1
      %vm1145 = vcmp.eq.s32.totalorder %v1143, 1
      %v1146 = vsel %vm1144, %v1132, 0.0
      %v1147 = vsel %vm1145, %v1131, 0.0
      %s1148 = scalar_lea.vmem %s3, 40
      %v1149 = vld [vmem:[%s1148] sm:$0xff]
      %1151 = vset.pattern.permute.xlu0 0
      %1152 = vperm.xlu0 %1151, %v1149
      %v1153 = vpop.permute.xlu0 %1152
      %v1155 = vmul.f32 %v1146, %v1153
      %v1156 = vmul.f32 %v1147, %v1153
      %v1157 = vadd.f32 %v1124, %v1155
      %v1158 = vadd.f32 %v1125, %v1156
      %1159 = vrot.lane.b32.xlu0 %v963, 45
      %v1160 = vpop.permute.xlu0 %1159
      %1161 = vrot.lane.b32.xlu0 %v964, 45
      %v1162 = vpop.permute.xlu0 %1161
      %vm1163 = vcmp.lt.s32.totalorder %v291, 45
      %v1164 = vsel %vm1163, %v1160, %v1162
      %v1165 = vsel %vm1163, %v1162, %v1160
      %vm1166 = vcmp.lt.s32.totalorder %v281, 13
      %vm1167 = vmand %vm972, %vm1166
      %v1168 = vsel %vm1167, 1, 0
      %v1169 = vlaneseq
      %v1170 = vshrl.u32 %v1169, 7
      %v1171 = vsub.s32 0, %v1170
      %v1172 = vrot.slane %v1168, %v1171
      %v1173 = vlaneseq
      %v1174 = vshrl.u32 %v1173, 7
      %v1175 = vsub.s32 1, %v1174
      %v1176 = vrot.slane %v1168, %v1175
      %vm1177 = vcmp.eq.s32.totalorder %v1172, 1
      %vm1178 = vcmp.eq.s32.totalorder %v1176, 1
      %v1179 = vsel %vm1177, %v1165, 0.0
      %v1180 = vsel %vm1178, %v1164, 0.0
      %s1181 = scalar_lea.vmem %s3, 48
      %v1182 = vld [vmem:[%s1181] sm:$0xff]
      %1184 = vset.pattern.permute.xlu0 0
      %1185 = vperm.xlu0 %1184, %v1182
      %v1186 = vpop.permute.xlu0 %1185
      %v1188 = vmul.f32 %v1179, %v1186
      %v1189 = vmul.f32 %v1180, %v1186
      %v1190 = vadd.f32 %v1157, %v1188
      %v1191 = vadd.f32 %v1158, %v1189
      %1192 = vrot.lane.b32.xlu0 %v963, 35
      %v1193 = vpop.permute.xlu0 %1192
      %1194 = vrot.lane.b32.xlu0 %v964, 35
      %v1195 = vpop.permute.xlu0 %1194
      %vm1196 = vcmp.lt.s32.totalorder %v291, 35
      %v1197 = vsel %vm1196, %v1193, %v1195
      %v1198 = vsel %vm1196, %v1195, %v1193
      %vm1199 = vcmp.ge.s32.totalorder %v280, 2
      %vm1200 = vmand %vm1199, %vm973
      %v1201 = vsel %vm1200, 1, 0
      %v1202 = vlaneseq
      %v1203 = vshrl.u32 %v1202, 7
      %v1204 = vsub.s32 0, %v1203
      %v1205 = vrot.slane %v1201, %v1204
      %v1206 = vlaneseq
      %v1207 = vshrl.u32 %v1206, 7
      %v1208 = vsub.s32 1, %v1207
      %v1209 = vrot.slane %v1201, %v1208
      %vm1210 = vcmp.eq.s32.totalorder %v1205, 1
      %vm1211 = vcmp.eq.s32.totalorder %v1209, 1
      %v1212 = vsel %vm1210, %v1198, 0.0
      %v1213 = vsel %vm1211, %v1197, 0.0
      %s1214 = scalar_lea.vmem %s3, 56
      %v1215 = vld [vmem:[%s1214] sm:$0xff]
      %1217 = vset.pattern.permute.xlu0 0
      %1218 = vperm.xlu0 %1217, %v1215
      %v1219 = vpop.permute.xlu0 %1218
      %v1221 = vmul.f32 %v1212, %v1219
      %v1222 = vmul.f32 %v1213, %v1219
      %v1223 = vadd.f32 %v1190, %v1221
      %v1224 = vadd.f32 %v1191, %v1222
      %1225 = vrot.lane.b32.xlu0 %v963, 34
      %v1226 = vpop.permute.xlu0 %1225
      %1227 = vrot.lane.b32.xlu0 %v964, 34
      %v1228 = vpop.permute.xlu0 %1227
      %vm1229 = vcmp.lt.s32.totalorder %v291, 34
      %v1230 = vsel %vm1229, %v1226, %v1228
      %v1231 = vsel %vm1229, %v1228, %v1226
      %vm1232 = vmand %vm1199, %vm1005
      %v1233 = vsel %vm1232, 1, 0
      %v1234 = vlaneseq
      %v1235 = vshrl.u32 %v1234, 7
      %v1236 = vsub.s32 0, %v1235
      %v1237 = vrot.slane %v1233, %v1236
      %v1238 = vlaneseq
      %v1239 = vshrl.u32 %v1238, 7
      %v1240 = vsub.s32 1, %v1239
      %v1241 = vrot.slane %v1233, %v1240
      %vm1242 = vcmp.eq.s32.totalorder %v1237, 1
      %vm1243 = vcmp.eq.s32.totalorder %v1241, 1
      %v1244 = vsel %vm1242, %v1231, 0.0
      %v1245 = vsel %vm1243, %v1230, 0.0
      %s1246 = scalar_lea.vmem %s3, 64
      %v1247 = vld [vmem:[%s1246] sm:$0xff]
      %1249 = vset.pattern.permute.xlu0 0
      %1250 = vperm.xlu0 %1249, %v1247
      %v1251 = vpop.permute.xlu0 %1250
      %v1253 = vmul.f32 %v1244, %v1251
      %v1254 = vmul.f32 %v1245, %v1251
      %v1255 = vadd.f32 %v1223, %v1253
      %v1256 = vadd.f32 %v1224, %v1254
      %1257 = vrot.lane.b32.xlu0 %v963, 33
      %v1258 = vpop.permute.xlu0 %1257
      %1259 = vrot.lane.b32.xlu0 %v964, 33
      %v1260 = vpop.permute.xlu0 %1259
      %vm1261 = vcmp.lt.s32.totalorder %v291, 33
      %v1262 = vsel %vm1261, %v1258, %v1260
      %v1263 = vsel %vm1261, %v1260, %v1258
      %vm1264 = vmand %vm1199, %vm296
      %v1265 = vsel %vm1264, 1, 0
      %v1266 = vlaneseq
      %v1267 = vshrl.u32 %v1266, 7
      %v1268 = vsub.s32 0, %v1267
      %v1269 = vrot.slane %v1265, %v1268
      %v1270 = vlaneseq
      %v1271 = vshrl.u32 %v1270, 7
      %v1272 = vsub.s32 1, %v1271
      %v1273 = vrot.slane %v1265, %v1272
      %vm1274 = vcmp.eq.s32.totalorder %v1269, 1
      %vm1275 = vcmp.eq.s32.totalorder %v1273, 1
      %v1276 = vsel %vm1274, %v1263, 0.0
      %v1277 = vsel %vm1275, %v1262, 0.0
      %s1278 = scalar_lea.vmem %s3, 72
      %v1279 = vld [vmem:[%s1278] sm:$0xff]
      %1281 = vset.pattern.permute.xlu0 0
      %1282 = vperm.xlu0 %1281, %v1279
      %v1283 = vpop.permute.xlu0 %1282
      %v1285 = vmul.f32 %v1276, %v1283
      %v1286 = vmul.f32 %v1277, %v1283
      %v1287 = vadd.f32 %v1255, %v1285
      %v1288 = vadd.f32 %v1256, %v1286
      %1289 = vrot.lane.b32.xlu0 %v963, 32
      %v1290 = vpop.permute.xlu0 %1289
      %1291 = vrot.lane.b32.xlu0 %v964, 32
      %v1292 = vpop.permute.xlu0 %1291
      %vm1293 = vcmp.lt.s32.totalorder %v291, 32
      %v1294 = vsel %vm1293, %v1290, %v1292
      %v1295 = vsel %vm1293, %v1292, %v1290
      %v1296 = vsel %vm1199, 1, 0
      %v1297 = vlaneseq
      %v1298 = vshrl.u32 %v1297, 7
      %v1299 = vsub.s32 0, %v1298
      %v1300 = vrot.slane %v1296, %v1299
      %v1301 = vlaneseq
      %v1302 = vshrl.u32 %v1301, 7
      %v1303 = vsub.s32 1, %v1302
      %v1304 = vrot.slane %v1296, %v1303
      %vm1305 = vcmp.eq.s32.totalorder %v1300, 1
      %vm1306 = vcmp.eq.s32.totalorder %v1304, 1
      %v1307 = vsel %vm1305, %v1295, 0.0
      %v1308 = vsel %vm1306, %v1294, 0.0
      %s1309 = scalar_lea.vmem %s3, 80
      %v1310 = vld [vmem:[%s1309] sm:$0xff]
      %1312 = vset.pattern.permute.xlu0 0
      %1313 = vperm.xlu0 %1312, %v1310
      %v1314 = vpop.permute.xlu0 %1313
      %v1316 = vmul.f32 %v1307, %v1314
      %v1317 = vmul.f32 %v1308, %v1314
      %v1318 = vadd.f32 %v1287, %v1316
      %v1319 = vadd.f32 %v1288, %v1317
      %1320 = vrot.lane.b32.xlu0 %v963, 31
      %v1321 = vpop.permute.xlu0 %1320
      %1322 = vrot.lane.b32.xlu0 %v964, 31
      %v1323 = vpop.permute.xlu0 %1322
      %vm1324 = vcmp.lt.s32.totalorder %v291, 31
      %v1325 = vsel %vm1324, %v1321, %v1323
      %v1326 = vsel %vm1324, %v1323, %v1321
      %vm1327 = vmand %vm1199, %vm447
      %v1328 = vsel %vm1327, 1, 0
      %v1329 = vlaneseq
      %v1330 = vshrl.u32 %v1329, 7
      %v1331 = vsub.s32 0, %v1330
      %v1332 = vrot.slane %v1328, %v1331
      %v1333 = vlaneseq
      %v1334 = vshrl.u32 %v1333, 7
      %v1335 = vsub.s32 1, %v1334
      %v1336 = vrot.slane %v1328, %v1335
      %vm1337 = vcmp.eq.s32.totalorder %v1332, 1
      %vm1338 = vcmp.eq.s32.totalorder %v1336, 1
      %v1339 = vsel %vm1337, %v1326, 0.0
      %v1340 = vsel %vm1338, %v1325, 0.0
      %s1341 = scalar_lea.vmem %s3, 88
      %v1342 = vld [vmem:[%s1341] sm:$0xff]
      %1344 = vset.pattern.permute.xlu0 0
      %1345 = vperm.xlu0 %1344, %v1342
      %v1346 = vpop.permute.xlu0 %1345
      %v1348 = vmul.f32 %v1339, %v1346
      %v1349 = vmul.f32 %v1340, %v1346
      %v1350 = vadd.f32 %v1318, %v1348
      %v1351 = vadd.f32 %v1319, %v1349
      %1352 = vrot.lane.b32.xlu0 %v963, 30
      %v1353 = vpop.permute.xlu0 %1352
      %1354 = vrot.lane.b32.xlu0 %v964, 30
      %v1355 = vpop.permute.xlu0 %1354
      %vm1356 = vcmp.lt.s32.totalorder %v291, 30
      %v1357 = vsel %vm1356, %v1353, %v1355
      %v1358 = vsel %vm1356, %v1355, %v1353
      %vm1359 = vmand %vm1199, %vm1133
      %v1360 = vsel %vm1359, 1, 0
      %v1361 = vlaneseq
      %v1362 = vshrl.u32 %v1361, 7
      %v1363 = vsub.s32 0, %v1362
      %v1364 = vrot.slane %v1360, %v1363
      %v1365 = vlaneseq
      %v1366 = vshrl.u32 %v1365, 7
      %v1367 = vsub.s32 1, %v1366
      %v1368 = vrot.slane %v1360, %v1367
      %vm1369 = vcmp.eq.s32.totalorder %v1364, 1
      %vm1370 = vcmp.eq.s32.totalorder %v1368, 1
      %v1371 = vsel %vm1369, %v1358, 0.0
      %v1372 = vsel %vm1370, %v1357, 0.0
      %s1373 = scalar_lea.vmem %s3, 96
      %v1374 = vld [vmem:[%s1373] sm:$0xff]
      %1376 = vset.pattern.permute.xlu0 0
      %1377 = vperm.xlu0 %1376, %v1374
      %v1378 = vpop.permute.xlu0 %1377
      %v1380 = vmul.f32 %v1371, %v1378
      %v1381 = vmul.f32 %v1372, %v1378
      %v1382 = vadd.f32 %v1350, %v1380
      %v1383 = vadd.f32 %v1351, %v1381
      %1384 = vrot.lane.b32.xlu0 %v963, 29
      %v1385 = vpop.permute.xlu0 %1384
      %1386 = vrot.lane.b32.xlu0 %v964, 29
      %v1387 = vpop.permute.xlu0 %1386
      %vm1388 = vcmp.lt.s32.totalorder %v291, 29
      %v1389 = vsel %vm1388, %v1385, %v1387
      %v1390 = vsel %vm1388, %v1387, %v1385
      %vm1391 = vmand %vm1199, %vm1166
      %v1392 = vsel %vm1391, 1, 0
      %v1393 = vlaneseq
      %v1394 = vshrl.u32 %v1393, 7
      %v1395 = vsub.s32 0, %v1394
      %v1396 = vrot.slane %v1392, %v1395
      %v1397 = vlaneseq
      %v1398 = vshrl.u32 %v1397, 7
      %v1399 = vsub.s32 1, %v1398
      %v1400 = vrot.slane %v1392, %v1399
      %vm1401 = vcmp.eq.s32.totalorder %v1396, 1
      %vm1402 = vcmp.eq.s32.totalorder %v1400, 1
      %v1403 = vsel %vm1401, %v1390, 0.0
      %v1404 = vsel %vm1402, %v1389, 0.0
      %s1405 = scalar_lea.vmem %s3, 104
      %v1406 = vld [vmem:[%s1405] sm:$0xff]
      %1408 = vset.pattern.permute.xlu0 0
      %1409 = vperm.xlu0 %1408, %v1406
      %v1410 = vpop.permute.xlu0 %1409
      %v1412 = vmul.f32 %v1403, %v1410
      %v1413 = vmul.f32 %v1404, %v1410
      %v1414 = vadd.f32 %v1382, %v1412
      %v1415 = vadd.f32 %v1383, %v1413
      %1416 = vrot.lane.b32.xlu0 %v963, 19
      %v1417 = vpop.permute.xlu0 %1416
      %1418 = vrot.lane.b32.xlu0 %v964, 19
      %v1419 = vpop.permute.xlu0 %1418
      %vm1420 = vcmp.lt.s32.totalorder %v291, 19
      %v1421 = vsel %vm1420, %v1417, %v1419
      %v1422 = vsel %vm1420, %v1419, %v1417
      %vm1423 = vmand %vm295, %vm973
      %v1424 = vsel %vm1423, 1, 0
      %v1425 = vlaneseq
      %v1426 = vshrl.u32 %v1425, 7
      %v1427 = vsub.s32 0, %v1426
      %v1428 = vrot.slane %v1424, %v1427
      %v1429 = vlaneseq
      %v1430 = vshrl.u32 %v1429, 7
      %v1431 = vsub.s32 1, %v1430
      %v1432 = vrot.slane %v1424, %v1431
      %vm1433 = vcmp.eq.s32.totalorder %v1428, 1
      %vm1434 = vcmp.eq.s32.totalorder %v1432, 1
      %v1435 = vsel %vm1433, %v1422, 0.0
      %v1436 = vsel %vm1434, %v1421, 0.0
      %s1437 = scalar_lea.vmem %s3, 112
      %v1438 = vld [vmem:[%s1437] sm:$0xff]
      %1440 = vset.pattern.permute.xlu0 0
      %1441 = vperm.xlu0 %1440, %v1438
      %v1442 = vpop.permute.xlu0 %1441
      %v1444 = vmul.f32 %v1435, %v1442
      %v1445 = vmul.f32 %v1436, %v1442
      %v1446 = vadd.f32 %v1414, %v1444
      %v1447 = vadd.f32 %v1415, %v1445
      %1448 = vrot.lane.b32.xlu0 %v963, 18
      %v1449 = vpop.permute.xlu0 %1448
      %1450 = vrot.lane.b32.xlu0 %v964, 18
      %v1451 = vpop.permute.xlu0 %1450
      %vm1452 = vcmp.lt.s32.totalorder %v291, 18
      %v1453 = vsel %vm1452, %v1449, %v1451
      %v1454 = vsel %vm1452, %v1451, %v1449
      %vm1455 = vmand %vm295, %vm1005
      %v1456 = vsel %vm1455, 1, 0
      %v1457 = vlaneseq
      %v1458 = vshrl.u32 %v1457, 7
      %v1459 = vsub.s32 0, %v1458
      %v1460 = vrot.slane %v1456, %v1459
      %v1461 = vlaneseq
      %v1462 = vshrl.u32 %v1461, 7
      %v1463 = vsub.s32 1, %v1462
      %v1464 = vrot.slane %v1456, %v1463
      %vm1465 = vcmp.eq.s32.totalorder %v1460, 1
      %vm1466 = vcmp.eq.s32.totalorder %v1464, 1
      %v1467 = vsel %vm1465, %v1454, 0.0
      %v1468 = vsel %vm1466, %v1453, 0.0
      %s1469 = scalar_lea.vmem %s3, 120
      %v1470 = vld [vmem:[%s1469] sm:$0xff]
      %1472 = vset.pattern.permute.xlu0 0
      %1473 = vperm.xlu0 %1472, %v1470
      %v1474 = vpop.permute.xlu0 %1473
      %v1476 = vmul.f32 %v1467, %v1474
      %v1477 = vmul.f32 %v1468, %v1474
      %v1478 = vadd.f32 %v1446, %v1476
      %v1479 = vadd.f32 %v1447, %v1477
      %1480 = vrot.lane.b32.xlu0 %v963, 17
      %v1481 = vpop.permute.xlu0 %1480
      %1482 = vrot.lane.b32.xlu0 %v964, 17
      %v1483 = vpop.permute.xlu0 %1482
      %v1484 = vsel %vm292, %v1481, %v1483
      %v1485 = vsel %vm292, %v1483, %v1481
      %v1486 = vsel %vm307, %v1485, 0.0
      %v1487 = vsel %vm308, %v1484, 0.0
      %s1488 = scalar_lea.vmem %s3, 128
      %v1489 = vld [vmem:[%s1488] sm:$0xff]
      %1491 = vset.pattern.permute.xlu0 0
      %1492 = vperm.xlu0 %1491, %v1489
      %v1493 = vpop.permute.xlu0 %1492
      %v1495 = vmul.f32 %v1486, %v1493
      %v1496 = vmul.f32 %v1487, %v1493
      %v1497 = vadd.f32 %v1478, %v1495
      %v1498 = vadd.f32 %v1479, %v1496
      %1499 = vrot.lane.b32.xlu0 %v963, 16
      %v1500 = vpop.permute.xlu0 %1499
      %1501 = vrot.lane.b32.xlu0 %v964, 16
      %v1502 = vpop.permute.xlu0 %1501
      %v1503 = vsel %vm318, %v1500, %v1502
      %v1504 = vsel %vm318, %v1502, %v1500
      %v1505 = vsel %vm330, %v1504, 0.0
      %v1506 = vsel %vm331, %v1503, 0.0
      %s1507 = scalar_lea.vmem %s3, 136
      %v1508 = vld [vmem:[%s1507] sm:$0xff]
      %1510 = vset.pattern.permute.xlu0 0
      %1511 = vperm.xlu0 %1510, %v1508
      %v1512 = vpop.permute.xlu0 %1511
      %v1514 = vmul.f32 %v1505, %v1512
      %v1515 = vmul.f32 %v1506, %v1512
      %v1516 = vadd.f32 %v1497, %v1514
      %v1517 = vadd.f32 %v1498, %v1515
      %1518 = vrot.lane.b32.xlu0 %v963, 15
      %v1519 = vpop.permute.xlu0 %1518
      %1520 = vrot.lane.b32.xlu0 %v964, 15
      %v1521 = vpop.permute.xlu0 %1520
      %v1522 = vsel %vm444, %v1519, %v1521
      %v1523 = vsel %vm444, %v1521, %v1519
      %v1524 = vsel %vm458, %v1523, 0.0
      %v1525 = vsel %vm459, %v1522, 0.0
      %s1526 = scalar_lea.vmem %s3, 144
      %v1527 = vld [vmem:[%s1526] sm:$0xff]
      %1529 = vset.pattern.permute.xlu0 0
      %1530 = vperm.xlu0 %1529, %v1527
      %v1531 = vpop.permute.xlu0 %1530
      %v1533 = vmul.f32 %v1524, %v1531
      %v1534 = vmul.f32 %v1525, %v1531
      %v1535 = vadd.f32 %v1516, %v1533
      %v1536 = vadd.f32 %v1517, %v1534
      %1537 = vrot.lane.b32.xlu0 %v963, 14
      %v1538 = vpop.permute.xlu0 %1537
      %1539 = vrot.lane.b32.xlu0 %v964, 14
      %v1540 = vpop.permute.xlu0 %1539
      %vm1541 = vcmp.lt.s32.totalorder %v291, 14
      %v1542 = vsel %vm1541, %v1538, %v1540
      %v1543 = vsel %vm1541, %v1540, %v1538
      %vm1544 = vmand %vm295, %vm1133
      %v1545 = vsel %vm1544, 1, 0
      %v1546 = vlaneseq
      %v1547 = vshrl.u32 %v1546, 7
      %v1548 = vsub.s32 0, %v1547
      %v1549 = vrot.slane %v1545, %v1548
      %v1550 = vlaneseq
      %v1551 = vshrl.u32 %v1550, 7
      %v1552 = vsub.s32 1, %v1551
      %v1553 = vrot.slane %v1545, %v1552
      %vm1554 = vcmp.eq.s32.totalorder %v1549, 1
      %vm1555 = vcmp.eq.s32.totalorder %v1553, 1
      %v1556 = vsel %vm1554, %v1543, 0.0
      %v1557 = vsel %vm1555, %v1542, 0.0
      %s1558 = scalar_lea.vmem %s3, 152
      %v1559 = vld [vmem:[%s1558] sm:$0xff]
      %1561 = vset.pattern.permute.xlu0 0
      %1562 = vperm.xlu0 %1561, %v1559
      %v1563 = vpop.permute.xlu0 %1562
      %v1565 = vmul.f32 %v1556, %v1563
      %v1566 = vmul.f32 %v1557, %v1563
      %v1567 = vadd.f32 %v1535, %v1565
      %v1568 = vadd.f32 %v1536, %v1566
      %1569 = vrot.lane.b32.xlu0 %v963, 13
      %v1570 = vpop.permute.xlu0 %1569
      %1571 = vrot.lane.b32.xlu0 %v964, 13
      %v1572 = vpop.permute.xlu0 %1571
      %vm1573 = vcmp.lt.s32.totalorder %v291, 13
      %v1574 = vsel %vm1573, %v1570, %v1572
      %v1575 = vsel %vm1573, %v1572, %v1570
      %vm1576 = vmand %vm295, %vm1166
      %v1577 = vsel %vm1576, 1, 0
      %v1578 = vlaneseq
      %v1579 = vshrl.u32 %v1578, 7
      %v1580 = vsub.s32 0, %v1579
      %v1581 = vrot.slane %v1577, %v1580
      %v1582 = vlaneseq
      %v1583 = vshrl.u32 %v1582, 7
      %v1584 = vsub.s32 1, %v1583
      %v1585 = vrot.slane %v1577, %v1584
      %vm1586 = vcmp.eq.s32.totalorder %v1581, 1
      %vm1587 = vcmp.eq.s32.totalorder %v1585, 1
      %v1588 = vsel %vm1586, %v1575, 0.0
      %v1589 = vsel %vm1587, %v1574, 0.0
      %s1590 = scalar_lea.vmem %s3, 160
      %v1591 = vld [vmem:[%s1590] sm:$0xff]
      %1593 = vset.pattern.permute.xlu0 0
      %1594 = vperm.xlu0 %1593, %v1591
      %v1595 = vpop.permute.xlu0 %1594
      %v1597 = vmul.f32 %v1588, %v1595
      %v1598 = vmul.f32 %v1589, %v1595
      %v1599 = vadd.f32 %v1567, %v1597
      %v1600 = vadd.f32 %v1568, %v1598
      %1601 = vrot.lane.b32.xlu0 %v963, 3
      %v1602 = vpop.permute.xlu0 %1601
      %1603 = vrot.lane.b32.xlu0 %v964, 3
      %v1604 = vpop.permute.xlu0 %1603
      %vm1605 = vcmp.lt.s32.totalorder %v291, 3
      %v1606 = vsel %vm1605, %v1602, %v1604
      %v1607 = vsel %vm1605, %v1604, %v1602
      %v1608 = vsel %vm973, 1, 0
      %v1609 = vlaneseq
      %v1610 = vshrl.u32 %v1609, 7
      %v1611 = vsub.s32 0, %v1610
      %v1612 = vrot.slane %v1608, %v1611
      %v1613 = vlaneseq
      %v1614 = vshrl.u32 %v1613, 7
      %v1615 = vsub.s32 1, %v1614
      %v1616 = vrot.slane %v1608, %v1615
      %vm1617 = vcmp.eq.s32.totalorder %v1612, 1
      %vm1618 = vcmp.eq.s32.totalorder %v1616, 1
      %v1619 = vsel %vm1617, %v1607, 0.0
      %v1620 = vsel %vm1618, %v1606, 0.0
      %s1621 = scalar_lea.vmem %s3, 168
      %v1622 = vld [vmem:[%s1621] sm:$0xff]
      %1624 = vset.pattern.permute.xlu0 0
      %1625 = vperm.xlu0 %1624, %v1622
      %v1626 = vpop.permute.xlu0 %1625
      %v1628 = vmul.f32 %v1619, %v1626
      %v1629 = vmul.f32 %v1620, %v1626
      %v1630 = vadd.f32 %v1599, %v1628
      %v1631 = vadd.f32 %v1600, %v1629
      %1632 = vrot.lane.b32.xlu0 %v963, 2
      %v1633 = vpop.permute.xlu0 %1632
      %1634 = vrot.lane.b32.xlu0 %v964, 2
      %v1635 = vpop.permute.xlu0 %1634
      %vm1636 = vcmp.lt.s32.totalorder %v291, 2
      %v1637 = vsel %vm1636, %v1633, %v1635
      %v1638 = vsel %vm1636, %v1635, %v1633
      %v1639 = vsel %vm1005, 1, 0
      %v1640 = vlaneseq
      %v1641 = vshrl.u32 %v1640, 7
      %v1642 = vsub.s32 0, %v1641
      %v1643 = vrot.slane %v1639, %v1642
      %v1644 = vlaneseq
      %v1645 = vshrl.u32 %v1644, 7
      %v1646 = vsub.s32 1, %v1645
      %v1647 = vrot.slane %v1639, %v1646
      %vm1648 = vcmp.eq.s32.totalorder %v1643, 1
      %vm1649 = vcmp.eq.s32.totalorder %v1647, 1
      %v1650 = vsel %vm1648, %v1638, 0.0
      %v1651 = vsel %vm1649, %v1637, 0.0
      %s1652 = scalar_lea.vmem %s3, 176
      %v1653 = vld [vmem:[%s1652] sm:$0xff]
      %1655 = vset.pattern.permute.xlu0 0
      %1656 = vperm.xlu0 %1655, %v1653
      %v1657 = vpop.permute.xlu0 %1656
      %v1659 = vmul.f32 %v1650, %v1657
      %v1660 = vmul.f32 %v1651, %v1657
      %v1661 = vadd.f32 %v1630, %v1659
      %v1662 = vadd.f32 %v1631, %v1660
      %1663 = vrot.lane.b32.xlu0 %v963, 1
      %v1664 = vpop.permute.xlu0 %1663
      %1665 = vrot.lane.b32.xlu0 %v964, 1
      %v1666 = vpop.permute.xlu0 %1665
      %v1667 = vsel %vm522, %v1664, %v1666
      %v1668 = vsel %vm522, %v1666, %v1664
      %v1669 = vsel %vm534, %v1668, 0.0
      %v1670 = vsel %vm535, %v1667, 0.0
      %s1671 = scalar_lea.vmem %s3, 184
      %v1672 = vld [vmem:[%s1671] sm:$0xff]
      %1674 = vset.pattern.permute.xlu0 0
      %1675 = vperm.xlu0 %1674, %v1672
      %v1676 = vpop.permute.xlu0 %1675
      %v1678 = vmul.f32 %v1669, %v1676
      %v1679 = vmul.f32 %v1670, %v1676
      %v1680 = vadd.f32 %v1661, %v1678
      %v1681 = vadd.f32 %v1662, %v1679
      %s1682 = scalar_lea.vmem %s3, 192
      %v1683 = vld [vmem:[%s1682] sm:$0xff]
      %1685 = vset.pattern.permute.xlu0 0
      %1686 = vperm.xlu0 %1685, %v1683
      %v1687 = vpop.permute.xlu0 %1686
      %v1689 = vmul.f32 %v963, %v1687
      %v1690 = vmul.f32 %v964, %v1687
      %v1691 = vadd.f32 %v1680, %v1689
      %v1692 = vadd.f32 %v1681, %v1690
      %1693 = vrot.lane.b32.xlu0 %v963, 127
      %v1694 = vpop.permute.xlu0 %1693
      %1695 = vrot.lane.b32.xlu0 %v964, 127
      %v1696 = vpop.permute.xlu0 %1695
      %v1697 = vsel %vm654, %v1694, %v1696
      %v1698 = vsel %vm654, %v1696, %v1694
      %v1699 = vsel %vm666, %v1697, 0.0
      %v1700 = vsel %vm667, %v1698, 0.0
      %s1701 = scalar_lea.vmem %s3, 200
      %v1702 = vld [vmem:[%s1701] sm:$0xff]
      %1704 = vset.pattern.permute.xlu0 0
      %1705 = vperm.xlu0 %1704, %v1702
      %v1706 = vpop.permute.xlu0 %1705
      %v1708 = vmul.f32 %v1699, %v1706
      %v1709 = vmul.f32 %v1700, %v1706
      %v1710 = vadd.f32 %v1691, %v1708
      %v1711 = vadd.f32 %v1692, %v1709
      %1712 = vrot.lane.b32.xlu0 %v963, 126
      %v1713 = vpop.permute.xlu0 %1712
      %1714 = vrot.lane.b32.xlu0 %v964, 126
      %v1715 = vpop.permute.xlu0 %1714
      %vm1716 = vcmp.lt.s32.totalorder %v291, 126
      %v1717 = vsel %vm1716, %v1713, %v1715
      %v1718 = vsel %vm1716, %v1715, %v1713
      %v1719 = vsel %vm1133, 1, 0
      %v1720 = vlaneseq
      %v1721 = vshrl.u32 %v1720, 7
      %v1722 = vsub.s32 0, %v1721
      %v1723 = vrot.slane %v1719, %v1722
      %v1724 = vlaneseq
      %v1725 = vshrl.u32 %v1724, 7
      %v1726 = vsub.s32 1, %v1725
      %v1727 = vrot.slane %v1719, %v1726
      %vm1728 = vcmp.eq.s32.totalorder %v1723, 1
      %vm1729 = vcmp.eq.s32.totalorder %v1727, 1
      %v1730 = vsel %vm1728, %v1717, 0.0
      %v1731 = vsel %vm1729, %v1718, 0.0
      %s1732 = scalar_lea.vmem %s3, 208
      %v1733 = vld [vmem:[%s1732] sm:$0xff]
      %1735 = vset.pattern.permute.xlu0 0
      %1736 = vperm.xlu0 %1735, %v1733
      %v1737 = vpop.permute.xlu0 %1736
      %v1739 = vmul.f32 %v1730, %v1737
      %v1740 = vmul.f32 %v1731, %v1737
      %v1741 = vadd.f32 %v1710, %v1739
      %v1742 = vadd.f32 %v1711, %v1740
      %1743 = vrot.lane.b32.xlu0 %v963, 125
      %v1744 = vpop.permute.xlu0 %1743
      %1745 = vrot.lane.b32.xlu0 %v964, 125
      %v1746 = vpop.permute.xlu0 %1745
      %vm1747 = vcmp.lt.s32.totalorder %v291, 125
      %v1748 = vsel %vm1747, %v1744, %v1746
      %v1749 = vsel %vm1747, %v1746, %v1744
      %v1750 = vsel %vm1166, 1, 0
      %v1751 = vlaneseq
      %v1752 = vshrl.u32 %v1751, 7
      %v1753 = vsub.s32 0, %v1752
      %v1754 = vrot.slane %v1750, %v1753
      %v1755 = vlaneseq
      %v1756 = vshrl.u32 %v1755, 7
      %v1757 = vsub.s32 1, %v1756
      %v1758 = vrot.slane %v1750, %v1757
      %vm1759 = vcmp.eq.s32.totalorder %v1754, 1
      %vm1760 = vcmp.eq.s32.totalorder %v1758, 1
      %v1761 = vsel %vm1759, %v1748, 0.0
      %v1762 = vsel %vm1760, %v1749, 0.0
      %s1763 = scalar_lea.vmem %s3, 216
      %v1764 = vld [vmem:[%s1763] sm:$0xff]
      %1766 = vset.pattern.permute.xlu0 0
      %1767 = vperm.xlu0 %1766, %v1764
      %v1768 = vpop.permute.xlu0 %1767
      %v1770 = vmul.f32 %v1761, %v1768
      %v1771 = vmul.f32 %v1762, %v1768
      %v1772 = vadd.f32 %v1741, %v1770
      %v1773 = vadd.f32 %v1742, %v1771
      %1774 = vrot.lane.b32.xlu0 %v963, 115
      %v1775 = vpop.permute.xlu0 %1774
      %1776 = vrot.lane.b32.xlu0 %v964, 115
      %v1777 = vpop.permute.xlu0 %1776
      %vm1778 = vcmp.lt.s32.totalorder %v291, 115
      %v1779 = vsel %vm1778, %v1775, %v1777
      %v1780 = vsel %vm1778, %v1777, %v1775
      %vm1781 = vmand %vm733, %vm973
      %v1782 = vsel %vm1781, 1, 0
      %v1783 = vlaneseq
      %v1784 = vshrl.u32 %v1783, 7
      %v1785 = vsub.s32 0, %v1784
      %v1786 = vrot.slane %v1782, %v1785
      %v1787 = vlaneseq
      %v1788 = vshrl.u32 %v1787, 7
      %v1789 = vsub.s32 1, %v1788
      %v1790 = vrot.slane %v1782, %v1789
      %vm1791 = vcmp.eq.s32.totalorder %v1786, 1
      %vm1792 = vcmp.eq.s32.totalorder %v1790, 1
      %v1793 = vsel %vm1791, %v1779, 0.0
      %v1794 = vsel %vm1792, %v1780, 0.0
      %s1795 = scalar_lea.vmem %s3, 224
      %v1796 = vld [vmem:[%s1795] sm:$0xff]
      %1798 = vset.pattern.permute.xlu0 0
      %1799 = vperm.xlu0 %1798, %v1796
      %v1800 = vpop.permute.xlu0 %1799
      %v1802 = vmul.f32 %v1793, %v1800
      %v1803 = vmul.f32 %v1794, %v1800
      %v1804 = vadd.f32 %v1772, %v1802
      %v1805 = vadd.f32 %v1773, %v1803
      %1806 = vrot.lane.b32.xlu0 %v963, 114
      %v1807 = vpop.permute.xlu0 %1806
      %1808 = vrot.lane.b32.xlu0 %v964, 114
      %v1809 = vpop.permute.xlu0 %1808
      %vm1810 = vcmp.lt.s32.totalorder %v291, 114
      %v1811 = vsel %vm1810, %v1807, %v1809
      %v1812 = vsel %vm1810, %v1809, %v1807
      %vm1813 = vmand %vm733, %vm1005
      %v1814 = vsel %vm1813, 1, 0
      %v1815 = vlaneseq
      %v1816 = vshrl.u32 %v1815, 7
      %v1817 = vsub.s32 0, %v1816
      %v1818 = vrot.slane %v1814, %v1817
      %v1819 = vlaneseq
      %v1820 = vshrl.u32 %v1819, 7
      %v1821 = vsub.s32 1, %v1820
      %v1822 = vrot.slane %v1814, %v1821
      %vm1823 = vcmp.eq.s32.totalorder %v1818, 1
      %vm1824 = vcmp.eq.s32.totalorder %v1822, 1
      %v1825 = vsel %vm1823, %v1811, 0.0
      %v1826 = vsel %vm1824, %v1812, 0.0
      %s1827 = scalar_lea.vmem %s3, 232
      %v1828 = vld [vmem:[%s1827] sm:$0xff]
      %1830 = vset.pattern.permute.xlu0 0
      %1831 = vperm.xlu0 %1830, %v1828
      %v1832 = vpop.permute.xlu0 %1831
      %v1834 = vmul.f32 %v1825, %v1832
      %v1835 = vmul.f32 %v1826, %v1832
      %v1836 = vadd.f32 %v1804, %v1834
      %v1837 = vadd.f32 %v1805, %v1835
      %1838 = vrot.lane.b32.xlu0 %v963, 113
      %v1839 = vpop.permute.xlu0 %1838
      %1840 = vrot.lane.b32.xlu0 %v964, 113
      %v1841 = vpop.permute.xlu0 %1840
      %v1842 = vsel %vm730, %v1839, %v1841
      %v1843 = vsel %vm730, %v1841, %v1839
      %v1844 = vsel %vm744, %v1842, 0.0
      %v1845 = vsel %vm745, %v1843, 0.0
      %s1846 = scalar_lea.vmem %s3, 240
      %v1847 = vld [vmem:[%s1846] sm:$0xff]
      %1849 = vset.pattern.permute.xlu0 0
      %1850 = vperm.xlu0 %1849, %v1847
      %v1851 = vpop.permute.xlu0 %1850
      %v1853 = vmul.f32 %v1844, %v1851
      %v1854 = vmul.f32 %v1845, %v1851
      %v1855 = vadd.f32 %v1836, %v1853
      %v1856 = vadd.f32 %v1837, %v1854
      %1857 = vrot.lane.b32.xlu0 %v963, 112
      %v1858 = vpop.permute.xlu0 %1857
      %1859 = vrot.lane.b32.xlu0 %v964, 112
      %v1860 = vpop.permute.xlu0 %1859
      %v1861 = vsel %vm808, %v1858, %v1860
      %v1862 = vsel %vm808, %v1860, %v1858
      %v1863 = vsel %vm820, %v1861, 0.0
      %v1864 = vsel %vm821, %v1862, 0.0
      %s1865 = scalar_lea.vmem %s3, 248
      %v1866 = vld [vmem:[%s1865] sm:$0xff]
      %1868 = vset.pattern.permute.xlu0 0
      %1869 = vperm.xlu0 %1868, %v1866
      %v1870 = vpop.permute.xlu0 %1869
      %v1872 = vmul.f32 %v1863, %v1870
      %v1873 = vmul.f32 %v1864, %v1870
      %v1874 = vadd.f32 %v1855, %v1872
      %v1875 = vadd.f32 %v1856, %v1873
      %1876 = vrot.lane.b32.xlu0 %v963, 111
      %v1877 = vpop.permute.xlu0 %1876
      %1878 = vrot.lane.b32.xlu0 %v964, 111
      %v1879 = vpop.permute.xlu0 %1878
      %v1880 = vsel %vm884, %v1877, %v1879
      %v1881 = vsel %vm884, %v1879, %v1877
      %v1882 = vsel %vm897, %v1880, 0.0
      %v1883 = vsel %vm898, %v1881, 0.0
      %s1884 = scalar_lea.vmem %s3, 256
      %v1885 = vld [vmem:[%s1884] sm:$0xff]
      %1887 = vset.pattern.permute.xlu0 0
      %1888 = vperm.xlu0 %1887, %v1885
      %v1889 = vpop.permute.xlu0 %1888
      %v1891 = vmul.f32 %v1882, %v1889
      %v1892 = vmul.f32 %v1883, %v1889
      %v1893 = vadd.f32 %v1874, %v1891
      %v1894 = vadd.f32 %v1875, %v1892
      %1895 = vrot.lane.b32.xlu0 %v963, 110
      %v1896 = vpop.permute.xlu0 %1895
      %1897 = vrot.lane.b32.xlu0 %v964, 110
      %v1898 = vpop.permute.xlu0 %1897
      %vm1899 = vcmp.lt.s32.totalorder %v291, 110
      %v1900 = vsel %vm1899, %v1896, %v1898
      %v1901 = vsel %vm1899, %v1898, %v1896
      %vm1902 = vmand %vm733, %vm1133
      %v1903 = vsel %vm1902, 1, 0
      %v1904 = vlaneseq
      %v1905 = vshrl.u32 %v1904, 7
      %v1906 = vsub.s32 0, %v1905
      %v1907 = vrot.slane %v1903, %v1906
      %v1908 = vlaneseq
      %v1909 = vshrl.u32 %v1908, 7
      %v1910 = vsub.s32 1, %v1909
      %v1911 = vrot.slane %v1903, %v1910
      %vm1912 = vcmp.eq.s32.totalorder %v1907, 1
      %vm1913 = vcmp.eq.s32.totalorder %v1911, 1
      %v1914 = vsel %vm1912, %v1900, 0.0
      %v1915 = vsel %vm1913, %v1901, 0.0
      %s1916 = scalar_lea.vmem %s3, 264
      %v1917 = vld [vmem:[%s1916] sm:$0xff]
      %1919 = vset.pattern.permute.xlu0 0
      %1920 = vperm.xlu0 %1919, %v1917
      %v1921 = vpop.permute.xlu0 %1920
      %v1923 = vmul.f32 %v1914, %v1921
      %v1924 = vmul.f32 %v1915, %v1921
      %v1925 = vadd.f32 %v1893, %v1923
      %v1926 = vadd.f32 %v1894, %v1924
      %1927 = vrot.lane.b32.xlu0 %v963, 109
      %v1928 = vpop.permute.xlu0 %1927
      %1929 = vrot.lane.b32.xlu0 %v964, 109
      %v1930 = vpop.permute.xlu0 %1929
      %vm1931 = vcmp.lt.s32.totalorder %v291, 109
      %v1932 = vsel %vm1931, %v1928, %v1930
      %v1933 = vsel %vm1931, %v1930, %v1928
      %vm1934 = vmand %vm733, %vm1166
      %v1935 = vsel %vm1934, 1, 0
      %v1936 = vlaneseq
      %v1937 = vshrl.u32 %v1936, 7
      %v1938 = vsub.s32 0, %v1937
      %v1939 = vrot.slane %v1935, %v1938
      %v1940 = vlaneseq
      %v1941 = vshrl.u32 %v1940, 7
      %v1942 = vsub.s32 1, %v1941
      %v1943 = vrot.slane %v1935, %v1942
      %vm1944 = vcmp.eq.s32.totalorder %v1939, 1
      %vm1945 = vcmp.eq.s32.totalorder %v1943, 1
      %v1946 = vsel %vm1944, %v1932, 0.0
      %v1947 = vsel %vm1945, %v1933, 0.0
      %s1948 = scalar_lea.vmem %s3, 272
      %v1949 = vld [vmem:[%s1948] sm:$0xff]
      %1951 = vset.pattern.permute.xlu0 0
      %1952 = vperm.xlu0 %1951, %v1949
      %v1953 = vpop.permute.xlu0 %1952
      %v1955 = vmul.f32 %v1946, %v1953
      %v1956 = vmul.f32 %v1947, %v1953
      %v1957 = vadd.f32 %v1925, %v1955
      %v1958 = vadd.f32 %v1926, %v1956
      %1959 = vrot.lane.b32.xlu0 %v963, 99
      %v1960 = vpop.permute.xlu0 %1959
      %1961 = vrot.lane.b32.xlu0 %v964, 99
      %v1962 = vpop.permute.xlu0 %1961
      %vm1963 = vcmp.lt.s32.totalorder %v291, 99
      %v1964 = vsel %vm1963, %v1960, %v1962
      %v1965 = vsel %vm1963, %v1962, %v1960
      %vm1966 = vcmp.lt.s32.totalorder %v280, 14
      %vm1967 = vmand %vm1966, %vm973
      %v1968 = vsel %vm1967, 1, 0
      %v1969 = vlaneseq
      %v1970 = vshrl.u32 %v1969, 7
      %v1971 = vsub.s32 0, %v1970
      %v1972 = vrot.slane %v1968, %v1971
      %v1973 = vlaneseq
      %v1974 = vshrl.u32 %v1973, 7
      %v1975 = vsub.s32 1, %v1974
      %v1976 = vrot.slane %v1968, %v1975
      %vm1977 = vcmp.eq.s32.totalorder %v1972, 1
      %vm1978 = vcmp.eq.s32.totalorder %v1976, 1
      %v1979 = vsel %vm1977, %v1964, 0.0
      %v1980 = vsel %vm1978, %v1965, 0.0
      %s1981 = scalar_lea.vmem %s3, 280
      %v1982 = vld [vmem:[%s1981] sm:$0xff]
      %1984 = vset.pattern.permute.xlu0 0
      %1985 = vperm.xlu0 %1984, %v1982
      %v1986 = vpop.permute.xlu0 %1985
      %v1988 = vmul.f32 %v1979, %v1986
      %v1989 = vmul.f32 %v1980, %v1986
      %v1990 = vadd.f32 %v1957, %v1988
      %v1991 = vadd.f32 %v1958, %v1989
      %1992 = vrot.lane.b32.xlu0 %v963, 98
      %v1993 = vpop.permute.xlu0 %1992
      %1994 = vrot.lane.b32.xlu0 %v964, 98
      %v1995 = vpop.permute.xlu0 %1994
      %vm1996 = vcmp.lt.s32.totalorder %v291, 98
      %v1997 = vsel %vm1996, %v1993, %v1995
      %v1998 = vsel %vm1996, %v1995, %v1993
      %vm1999 = vmand %vm1966, %vm1005
      %v2000 = vsel %vm1999, 1, 0
      %v2001 = vlaneseq
      %v2002 = vshrl.u32 %v2001, 7
      %v2003 = vsub.s32 0, %v2002
      %v2004 = vrot.slane %v2000, %v2003
      %v2005 = vlaneseq
      %v2006 = vshrl.u32 %v2005, 7
      %v2007 = vsub.s32 1, %v2006
      %v2008 = vrot.slane %v2000, %v2007
      %vm2009 = vcmp.eq.s32.totalorder %v2004, 1
      %vm2010 = vcmp.eq.s32.totalorder %v2008, 1
      %v2011 = vsel %vm2009, %v1997, 0.0
      %v2012 = vsel %vm2010, %v1998, 0.0
      %s2013 = scalar_lea.vmem %s3, 288
      %v2014 = vld [vmem:[%s2013] sm:$0xff]
      %2016 = vset.pattern.permute.xlu0 0
      %2017 = vperm.xlu0 %2016, %v2014
      %v2018 = vpop.permute.xlu0 %2017
      %v2020 = vmul.f32 %v2011, %v2018
      %v2021 = vmul.f32 %v2012, %v2018
      %v2022 = vadd.f32 %v1990, %v2020
      %v2023 = vadd.f32 %v1991, %v2021
      %2024 = vrot.lane.b32.xlu0 %v963, 97
      %v2025 = vpop.permute.xlu0 %2024
      %2026 = vrot.lane.b32.xlu0 %v964, 97
      %v2027 = vpop.permute.xlu0 %2026
      %vm2028 = vcmp.lt.s32.totalorder %v291, 97
      %v2029 = vsel %vm2028, %v2025, %v2027
      %v2030 = vsel %vm2028, %v2027, %v2025
      %vm2031 = vmand %vm1966, %vm296
      %v2032 = vsel %vm2031, 1, 0
      %v2033 = vlaneseq
      %v2034 = vshrl.u32 %v2033, 7
      %v2035 = vsub.s32 0, %v2034
      %v2036 = vrot.slane %v2032, %v2035
      %v2037 = vlaneseq
      %v2038 = vshrl.u32 %v2037, 7
      %v2039 = vsub.s32 1, %v2038
      %v2040 = vrot.slane %v2032, %v2039
      %vm2041 = vcmp.eq.s32.totalorder %v2036, 1
      %vm2042 = vcmp.eq.s32.totalorder %v2040, 1
      %v2043 = vsel %vm2041, %v2029, 0.0
      %v2044 = vsel %vm2042, %v2030, 0.0
      %s2045 = scalar_lea.vmem %s3, 296
      %v2046 = vld [vmem:[%s2045] sm:$0xff]
      %2048 = vset.pattern.permute.xlu0 0
      %2049 = vperm.xlu0 %2048, %v2046
      %v2050 = vpop.permute.xlu0 %2049
      %v2052 = vmul.f32 %v2043, %v2050
      %v2053 = vmul.f32 %v2044, %v2050
      %v2054 = vadd.f32 %v2022, %v2052
      %v2055 = vadd.f32 %v2023, %v2053
      %2056 = vrot.lane.b32.xlu0 %v963, 96
      %v2057 = vpop.permute.xlu0 %2056
      %2058 = vrot.lane.b32.xlu0 %v964, 96
      %v2059 = vpop.permute.xlu0 %2058
      %vm2060 = vcmp.lt.s32.totalorder %v291, 96
      %v2061 = vsel %vm2060, %v2057, %v2059
      %v2062 = vsel %vm2060, %v2059, %v2057
      %v2063 = vsel %vm1966, 1, 0
      %v2064 = vlaneseq
      %v2065 = vshrl.u32 %v2064, 7
      %v2066 = vsub.s32 0, %v2065
      %v2067 = vrot.slane %v2063, %v2066
      %v2068 = vlaneseq
      %v2069 = vshrl.u32 %v2068, 7
      %v2070 = vsub.s32 1, %v2069
      %v2071 = vrot.slane %v2063, %v2070
      %vm2072 = vcmp.eq.s32.totalorder %v2067, 1
      %vm2073 = vcmp.eq.s32.totalorder %v2071, 1
      %v2074 = vsel %vm2072, %v2061, 0.0
      %v2075 = vsel %vm2073, %v2062, 0.0
      %s2076 = scalar_lea.vmem %s3, 304
      %v2077 = vld [vmem:[%s2076] sm:$0xff]
      %2079 = vset.pattern.permute.xlu0 0
      %2080 = vperm.xlu0 %2079, %v2077
      %v2081 = vpop.permute.xlu0 %2080
      %v2083 = vmul.f32 %v2074, %v2081
      %v2084 = vmul.f32 %v2075, %v2081
      %v2085 = vadd.f32 %v2054, %v2083
      %v2086 = vadd.f32 %v2055, %v2084
      %2087 = vrot.lane.b32.xlu0 %v963, 95
      %v2088 = vpop.permute.xlu0 %2087
      %2089 = vrot.lane.b32.xlu0 %v964, 95
      %v2090 = vpop.permute.xlu0 %2089
      %vm2091 = vcmp.lt.s32.totalorder %v291, 95
      %v2092 = vsel %vm2091, %v2088, %v2090
      %v2093 = vsel %vm2091, %v2090, %v2088
      %vm2094 = vmand %vm1966, %vm447
      %v2095 = vsel %vm2094, 1, 0
      %v2096 = vlaneseq
      %v2097 = vshrl.u32 %v2096, 7
      %v2098 = vsub.s32 0, %v2097
      %v2099 = vrot.slane %v2095, %v2098
      %v2100 = vlaneseq
      %v2101 = vshrl.u32 %v2100, 7
      %v2102 = vsub.s32 1, %v2101
      %v2103 = vrot.slane %v2095, %v2102
      %vm2104 = vcmp.eq.s32.totalorder %v2099, 1
      %vm2105 = vcmp.eq.s32.totalorder %v2103, 1
      %v2106 = vsel %vm2104, %v2092, 0.0
      %v2107 = vsel %vm2105, %v2093, 0.0
      %s2108 = scalar_lea.vmem %s3, 312
      %v2109 = vld [vmem:[%s2108] sm:$0xff]
      %2111 = vset.pattern.permute.xlu0 0
      %2112 = vperm.xlu0 %2111, %v2109
      %v2113 = vpop.permute.xlu0 %2112
      %v2115 = vmul.f32 %v2106, %v2113
      %v2116 = vmul.f32 %v2107, %v2113
      %v2117 = vadd.f32 %v2085, %v2115
      %v2118 = vadd.f32 %v2086, %v2116
      %2119 = vrot.lane.b32.xlu0 %v963, 94
      %v2120 = vpop.permute.xlu0 %2119
      %2121 = vrot.lane.b32.xlu0 %v964, 94
      %v2122 = vpop.permute.xlu0 %2121
      %vm2123 = vcmp.lt.s32.totalorder %v291, 94
      %v2124 = vsel %vm2123, %v2120, %v2122
      %v2125 = vsel %vm2123, %v2122, %v2120
      %vm2126 = vmand %vm1966, %vm1133
      %v2127 = vsel %vm2126, 1, 0
      %v2128 = vlaneseq
      %v2129 = vshrl.u32 %v2128, 7
      %v2130 = vsub.s32 0, %v2129
      %v2131 = vrot.slane %v2127, %v2130
      %v2132 = vlaneseq
      %v2133 = vshrl.u32 %v2132, 7
      %v2134 = vsub.s32 1, %v2133
      %v2135 = vrot.slane %v2127, %v2134
      %vm2136 = vcmp.eq.s32.totalorder %v2131, 1
      %vm2137 = vcmp.eq.s32.totalorder %v2135, 1
      %v2138 = vsel %vm2136, %v2124, 0.0
      %v2139 = vsel %vm2137, %v2125, 0.0
      %s2140 = scalar_lea.vmem %s3, 320
      %v2141 = vld [vmem:[%s2140] sm:$0xff]
      %2143 = vset.pattern.permute.xlu0 0
      %2144 = vperm.xlu0 %2143, %v2141
      %v2145 = vpop.permute.xlu0 %2144
      %v2147 = vmul.f32 %v2138, %v2145
      %v2148 = vmul.f32 %v2139, %v2145
      %v2149 = vadd.f32 %v2117, %v2147
      %v2150 = vadd.f32 %v2118, %v2148
      %2151 = vrot.lane.b32.xlu0 %v963, 93
      %v2152 = vpop.permute.xlu0 %2151
      %2153 = vrot.lane.b32.xlu0 %v964, 93
      %v2154 = vpop.permute.xlu0 %2153
      %vm2155 = vcmp.lt.s32.totalorder %v291, 93
      %v2156 = vsel %vm2155, %v2152, %v2154
      %v2157 = vsel %vm2155, %v2154, %v2152
      %vm2158 = vmand %vm1966, %vm1166
      %v2159 = vsel %vm2158, 1, 0
      %v2160 = vlaneseq
      %v2161 = vshrl.u32 %v2160, 7
      %v2162 = vsub.s32 0, %v2161
      %v2163 = vrot.slane %v2159, %v2162
      %v2164 = vlaneseq
      %v2165 = vshrl.u32 %v2164, 7
      %v2166 = vsub.s32 1, %v2165
      %v2167 = vrot.slane %v2159, %v2166
      %vm2168 = vcmp.eq.s32.totalorder %v2163, 1
      %vm2169 = vcmp.eq.s32.totalorder %v2167, 1
      %v2170 = vsel %vm2168, %v2156, 0.0
      %v2171 = vsel %vm2169, %v2157, 0.0
      %s2172 = scalar_lea.vmem %s3, 328
      %v2173 = vld [vmem:[%s2172] sm:$0xff]
      %2175 = vset.pattern.permute.xlu0 0
      %2176 = vperm.xlu0 %2175, %v2173
      %v2177 = vpop.permute.xlu0 %2176
      %v2179 = vmul.f32 %v2170, %v2177
      %v2180 = vmul.f32 %v2171, %v2177
      %v2181 = vadd.f32 %v2149, %v2179
      %v2182 = vadd.f32 %v2150, %v2180
      %2183 = vrot.lane.b32.xlu0 %v963, 83
      %v2184 = vpop.permute.xlu0 %2183
      %2185 = vrot.lane.b32.xlu0 %v964, 83
      %v2186 = vpop.permute.xlu0 %2185
      %vm2187 = vcmp.lt.s32.totalorder %v291, 83
      %v2188 = vsel %vm2187, %v2184, %v2186
      %v2189 = vsel %vm2187, %v2186, %v2184
      %vm2190 = vcmp.lt.s32.totalorder %v280, 13
      %vm2191 = vmand %vm2190, %vm973
      %v2192 = vsel %vm2191, 1, 0
      %v2193 = vlaneseq
      %v2194 = vshrl.u32 %v2193, 7
      %v2195 = vsub.s32 0, %v2194
      %v2196 = vrot.slane %v2192, %v2195
      %v2197 = vlaneseq
      %v2198 = vshrl.u32 %v2197, 7
      %v2199 = vsub.s32 1, %v2198
      %v2200 = vrot.slane %v2192, %v2199
      %vm2201 = vcmp.eq.s32.totalorder %v2196, 1
      %vm2202 = vcmp.eq.s32.totalorder %v2200, 1
      %v2203 = vsel %vm2201, %v2188, 0.0
      %v2204 = vsel %vm2202, %v2189, 0.0
      %s2205 = scalar_lea.vmem %s3, 336
      %v2206 = vld [vmem:[%s2205] sm:$0xff]
      %2208 = vset.pattern.permute.xlu0 0
      %2209 = vperm.xlu0 %2208, %v2206
      %v2210 = vpop.permute.xlu0 %2209
      %v2212 = vmul.f32 %v2203, %v2210
      %v2213 = vmul.f32 %v2204, %v2210
      %v2214 = vadd.f32 %v2181, %v2212
      %v2215 = vadd.f32 %v2182, %v2213
      %2216 = vrot.lane.b32.xlu0 %v963, 82
      %v2217 = vpop.permute.xlu0 %2216
      %2218 = vrot.lane.b32.xlu0 %v964, 82
      %v2219 = vpop.permute.xlu0 %2218
      %vm2220 = vcmp.lt.s32.totalorder %v291, 82
      %v2221 = vsel %vm2220, %v2217, %v2219
      %v2222 = vsel %vm2220, %v2219, %v2217
      %vm2223 = vmand %vm2190, %vm1005
      %v2224 = vsel %vm2223, 1, 0
      %v2225 = vlaneseq
      %v2226 = vshrl.u32 %v2225, 7
      %v2227 = vsub.s32 0, %v2226
      %v2228 = vrot.slane %v2224, %v2227
      %v2229 = vlaneseq
      %v2230 = vshrl.u32 %v2229, 7
      %v2231 = vsub.s32 1, %v2230
      %v2232 = vrot.slane %v2224, %v2231
      %vm2233 = vcmp.eq.s32.totalorder %v2228, 1
      %vm2234 = vcmp.eq.s32.totalorder %v2232, 1
      %v2235 = vsel %vm2233, %v2221, 0.0
      %v2236 = vsel %vm2234, %v2222, 0.0
      %s2237 = scalar_lea.vmem %s3, 344
      %v2238 = vld [vmem:[%s2237] sm:$0xff]
      %2240 = vset.pattern.permute.xlu0 0
      %2241 = vperm.xlu0 %2240, %v2238
      %v2242 = vpop.permute.xlu0 %2241
      %v2244 = vmul.f32 %v2235, %v2242
      %v2245 = vmul.f32 %v2236, %v2242
      %v2246 = vadd.f32 %v2214, %v2244
      %v2247 = vadd.f32 %v2215, %v2245
      %2248 = vrot.lane.b32.xlu0 %v963, 81
      %v2249 = vpop.permute.xlu0 %2248
      %2250 = vrot.lane.b32.xlu0 %v964, 81
      %v2251 = vpop.permute.xlu0 %2250
      %vm2252 = vcmp.lt.s32.totalorder %v291, 81
      %v2253 = vsel %vm2252, %v2249, %v2251
      %v2254 = vsel %vm2252, %v2251, %v2249
      %vm2255 = vmand %vm2190, %vm296
      %v2256 = vsel %vm2255, 1, 0
      %v2257 = vlaneseq
      %v2258 = vshrl.u32 %v2257, 7
      %v2259 = vsub.s32 0, %v2258
      %v2260 = vrot.slane %v2256, %v2259
      %v2261 = vlaneseq
      %v2262 = vshrl.u32 %v2261, 7
      %v2263 = vsub.s32 1, %v2262
      %v2264 = vrot.slane %v2256, %v2263
      %vm2265 = vcmp.eq.s32.totalorder %v2260, 1
      %vm2266 = vcmp.eq.s32.totalorder %v2264, 1
      %v2267 = vsel %vm2265, %v2253, 0.0
      %v2268 = vsel %vm2266, %v2254, 0.0
      %s2269 = scalar_lea.vmem %s3, 352
      %v2270 = vld [vmem:[%s2269] sm:$0xff]
      %2272 = vset.pattern.permute.xlu0 0
      %2273 = vperm.xlu0 %2272, %v2270
      %v2274 = vpop.permute.xlu0 %2273
      %v2276 = vmul.f32 %v2267, %v2274
      %v2277 = vmul.f32 %v2268, %v2274
      %v2278 = vadd.f32 %v2246, %v2276
      %v2279 = vadd.f32 %v2247, %v2277
      %2280 = vrot.lane.b32.xlu0 %v963, 80
      %v2281 = vpop.permute.xlu0 %2280
      %2282 = vrot.lane.b32.xlu0 %v964, 80
      %v2283 = vpop.permute.xlu0 %2282
      %vm2284 = vcmp.lt.s32.totalorder %v291, 80
      %v2285 = vsel %vm2284, %v2281, %v2283
      %v2286 = vsel %vm2284, %v2283, %v2281
      %v2287 = vsel %vm2190, 1, 0
      %v2288 = vlaneseq
      %v2289 = vshrl.u32 %v2288, 7
      %v2290 = vsub.s32 0, %v2289
      %v2291 = vrot.slane %v2287, %v2290
      %v2292 = vlaneseq
      %v2293 = vshrl.u32 %v2292, 7
      %v2294 = vsub.s32 1, %v2293
      %v2295 = vrot.slane %v2287, %v2294
      %vm2296 = vcmp.eq.s32.totalorder %v2291, 1
      %vm2297 = vcmp.eq.s32.totalorder %v2295, 1
      %v2298 = vsel %vm2296, %v2285, 0.0
      %v2299 = vsel %vm2297, %v2286, 0.0
      %s2300 = scalar_lea.vmem %s3, 360
      %v2301 = vld [vmem:[%s2300] sm:$0xff]
      %2303 = vset.pattern.permute.xlu0 0
      %2304 = vperm.xlu0 %2303, %v2301
      %v2305 = vpop.permute.xlu0 %2304
      %v2307 = vmul.f32 %v2298, %v2305
      %v2308 = vmul.f32 %v2299, %v2305
      %v2309 = vadd.f32 %v2278, %v2307
      %v2310 = vadd.f32 %v2279, %v2308
      %2311 = vrot.lane.b32.xlu0 %v963, 79
      %v2312 = vpop.permute.xlu0 %2311
      %2313 = vrot.lane.b32.xlu0 %v964, 79
      %v2314 = vpop.permute.xlu0 %2313
      %vm2315 = vcmp.lt.s32.totalorder %v291, 79
      %v2316 = vsel %vm2315, %v2312, %v2314
      %v2317 = vsel %vm2315, %v2314, %v2312
      %vm2318 = vmand %vm2190, %vm447
      %v2319 = vsel %vm2318, 1, 0
      %v2320 = vlaneseq
      %v2321 = vshrl.u32 %v2320, 7
      %v2322 = vsub.s32 0, %v2321
      %v2323 = vrot.slane %v2319, %v2322
      %v2324 = vlaneseq
      %v2325 = vshrl.u32 %v2324, 7
      %v2326 = vsub.s32 1, %v2325
      %v2327 = vrot.slane %v2319, %v2326
      %vm2328 = vcmp.eq.s32.totalorder %v2323, 1
      %vm2329 = vcmp.eq.s32.totalorder %v2327, 1
      %v2330 = vsel %vm2328, %v2316, 0.0
      %v2331 = vsel %vm2329, %v2317, 0.0
      %s2332 = scalar_lea.vmem %s3, 368
      %v2333 = vld [vmem:[%s2332] sm:$0xff]
      %2335 = vset.pattern.permute.xlu0 0
      %2336 = vperm.xlu0 %2335, %v2333
      %v2337 = vpop.permute.xlu0 %2336
      %v2339 = vmul.f32 %v2330, %v2337
      %v2340 = vmul.f32 %v2331, %v2337
      %v2341 = vadd.f32 %v2309, %v2339
      %v2342 = vadd.f32 %v2310, %v2340
      %2343 = vrot.lane.b32.xlu0 %v963, 78
      %v2344 = vpop.permute.xlu0 %2343
      %2345 = vrot.lane.b32.xlu0 %v964, 78
      %v2346 = vpop.permute.xlu0 %2345
      %vm2347 = vcmp.lt.s32.totalorder %v291, 78
      %v2348 = vsel %vm2347, %v2344, %v2346
      %v2349 = vsel %vm2347, %v2346, %v2344
      %vm2350 = vmand %vm2190, %vm1133
      %v2351 = vsel %vm2350, 1, 0
      %v2352 = vlaneseq
      %v2353 = vshrl.u32 %v2352, 7
      %v2354 = vsub.s32 0, %v2353
      %v2355 = vrot.slane %v2351, %v2354
      %v2356 = vlaneseq
      %v2357 = vshrl.u32 %v2356, 7
      %v2358 = vsub.s32 1, %v2357
      %v2359 = vrot.slane %v2351, %v2358
      %vm2360 = vcmp.eq.s32.totalorder %v2355, 1
      %vm2361 = vcmp.eq.s32.totalorder %v2359, 1
      %v2362 = vsel %vm2360, %v2348, 0.0
      %v2363 = vsel %vm2361, %v2349, 0.0
      %s2364 = scalar_lea.vmem %s3, 376
      %v2365 = vld [vmem:[%s2364] sm:$0xff]
      %2367 = vset.pattern.permute.xlu0 0
      %2368 = vperm.xlu0 %2367, %v2365
      %v2369 = vpop.permute.xlu0 %2368
      %v2371 = vmul.f32 %v2362, %v2369
      %v2372 = vmul.f32 %v2363, %v2369
      %v2373 = vadd.f32 %v2341, %v2371
      %v2374 = vadd.f32 %v2342, %v2372
      %2375 = vrot.lane.b32.xlu0 %v963, 77
      %v2376 = vpop.permute.xlu0 %2375
      %2377 = vrot.lane.b32.xlu0 %v964, 77
      %v2378 = vpop.permute.xlu0 %2377
      %vm2379 = vcmp.lt.s32.totalorder %v291, 77
      %v2380 = vsel %vm2379, %v2376, %v2378
      %v2381 = vsel %vm2379, %v2378, %v2376
      %vm2382 = vmand %vm2190, %vm1166
      %v2383 = vsel %vm2382, 1, 0
      %v2384 = vlaneseq
      %v2385 = vshrl.u32 %v2384, 7
      %v2386 = vsub.s32 0, %v2385
      %v2387 = vrot.slane %v2383, %v2386
      %v2388 = vlaneseq
      %v2389 = vshrl.u32 %v2388, 7
      %v2390 = vsub.s32 1, %v2389
      %v2391 = vrot.slane %v2383, %v2390
      %vm2392 = vcmp.eq.s32.totalorder %v2387, 1
      %vm2393 = vcmp.eq.s32.totalorder %v2391, 1
      %v2394 = vsel %vm2392, %v2380, 0.0
      %v2395 = vsel %vm2393, %v2381, 0.0
      %s2396 = scalar_lea.vmem %s3, 384
      %v2397 = vld [vmem:[%s2396] sm:$0xff]
      %2399 = vset.pattern.permute.xlu0 0
      %2400 = vperm.xlu0 %2399, %v2397
      %v2401 = vpop.permute.xlu0 %2400
      %v2403 = vmul.f32 %v2394, %v2401
      %v2404 = vmul.f32 %v2395, %v2401
      %v2405 = vadd.f32 %v2373, %v2403
      %v2406 = vadd.f32 %v2374, %v2404
      %v2407 = vld [vmem:[%s4] sm:$0xff]
      %2409 = vset.pattern.permute.xlu0 0
      %2410 = vperm.xlu0 %2409, %v2407
      %v2411 = vpop.permute.xlu0 %2410
      %v2413 = vadd.f32 %v2405, %v2411
      %v2414 = vadd.f32 %v2406, %v2411
      %v2415 = vmul.f32 %v2413, 0.5
      %v2416 = vmul.f32 %v2414, 0.5
      %v2417 = vtanh.pop %v2415
      %v2418 = vtanh.pop %v2416
      %v2419 = vadd.f32 %v2417, 1.0
      %v2420 = vadd.f32 %v2418, 1.0
      %v2421 = vmul.f32 %v2419, 0.5
      %v2422 = vmul.f32 %v2420, 0.5
      %v2423 = vmul.f32 %v963, %v2421
      %v2424 = vmul.f32 %v964, %v2422
      %2425 = vst [vmem:[%s278] sm:$0xff] %v2423
      %2426 = vst [vmem:[%s278 + $0x8] sm:$0xff] %v2424
      %p2427 = scmp.lt.s32.totalorder %s18, 1
      %s2428 = scalar_select %p2427, %s18, 1
      %s2429 = smul.addr %s2428, 2
      %s2430 = smul.addr %s2429, 8
      %s2431 = scalar_lea.vmem %s7, %s2430
      // Predicated region
      $region49: #{genblock_forward.1} parent=47 // pred_check
        %p2432 = pneg %p188
      $region50: #{genblock_forward.1} parent=47 // pred_check_branch
        %2434 = sbr.rel (%p2432) target = $region52
      $region51: #{genblock_forward.1} parent=47 // pred_region
        _
      $region52: #{genblock_forward.1} parent=47 // pred_fallthru
        _
    $region48: #{genblock_forward.1} parent=5 // pred_fallthru
      _
    %p2435 = scmp.le.s32.totalorder 2, %s13
    // Predicated region
    $region53: #{genblock_forward.1} parent=5 // pred_check
      %p2436 = pneg %p2435
    $region54: #{genblock_forward.1} parent=5 // pred_check_branch
      %2438 = sbr.rel (%p2436) target = $region56
    $region55: #{genblock_forward.1} parent=5 // pred_region
      %s2439 = ssub.s32 %s13, 2
      // Predicated region
      $region57: #{genblock_forward.1} parent=55 // pred_check
        %p2440 = pneg %p194
      $region58: #{genblock_forward.1} parent=55 // pred_check_branch
        %2442 = sbr.rel (%p2440) target = $region60
      $region59: #{genblock_forward.1} parent=55 // pred_region
        %p2443 = scmp.lt.s32.totalorder %s19, 1
        %s2444 = scalar_select %p2443, %s19, 1
        %s2445 = smul.addr %s2444, 2
        %s2446 = smul.addr %s2445, 8
        %s2447 = scalar_lea.vmem %s7, %s2446
      $region60: #{genblock_forward.1} parent=55 // pred_fallthru
        _
    $region56: #{genblock_forward.1} parent=5 // pred_fallthru
      _
  $region6: #{genblock_forward.1} parent=0 // loop_footer
    %s17 = sadd.s32 1, %s13
  $region7: #{genblock_forward.1} parent=0 // loop_footer_branch
    %12 = sbr.rel target = $region3
  $region8: #{genblock_forward.1} parent=0 // loop_exit
    _

</llo_original>
